<compile_context>
chip_gen: v7x
topology: tpu7x:2x2x1
jax: 0.10.0
libtpu: 0.0.40
codegen_flags: <defaults>
</compile_context>

<pallas_src>
import functools

import jax
import jax.numpy as jnp
from jax.experimental import pallas as pl
from jax.experimental.pallas import tpu as pltpu

# ----- small synthetic shapes consistent with the module's forward -----
BATCH = 2
SEQ = 8
LATENT_DIM = 32            # module default 1024
HIDDEN_DIMS = (64, 64, 64) # module default (512, 512, 512); [2] unused
N_GENES = 256              # len(self.genes)
GENE_EMB_DIM = 32
BD_HIDDEN = 64             # synthetic binary_decoder hidden width
PROJ_HIDDEN = 128          # gene_decoder_proj bottleneck (as in the module)
READ_DEPTH = 1200.0
LN_EPS = 1e-5

# Tiling.  GENE_TILE = 128 keeps the gene axis one vreg wide on lanes and gives
# two gene tiles at the toy G, exercising the fused wp1 accumulator.
# TODO(synk): at production gene counts raise GENE_TILE per generation VMEM
# budget (512-1024 on v5e/v6e, 256-512 on v7x) and size CELL_GROUP so that the
# per-group wp1 tile refetch (GENE_TILE*PROJ_HIDDEN*2 bytes) stays small vs the
# CELL_GROUP*GENE_TILE*4 bytes of logits it replaces.
GENE_TILE = 128
CELL_GROUP = 8                    # rows per group: one full f32 vreg of sublanes
VMEM_LIMIT = 32 * 1024 * 1024     # explicit scoped-VMEM limit (fits all chips)


# ---------------------------------------------------------------------------
# Shared numerics (used inside kernels and by the pure-JAX reference)
# ---------------------------------------------------------------------------
def _layernorm(h, gamma, beta):
    mu = jnp.mean(h, axis=-1, keepdims=True)
    var = jnp.mean((h - mu) ** 2, axis=-1, keepdims=True)
    return (h - mu) * jax.lax.rsqrt(var + LN_EPS) * gamma + beta


def _gelu(h):
    # TODO(synk): PyTorch nn.GELU() default is the exact erf GELU; the tanh
    # approximation is used here for robust Mosaic lowering (~1e-3 abs dev).
    c = 0.7978845608028654  # sqrt(2/pi)
    return 0.5 * h * (1.0 + jnp.tanh(c * (h + 0.044715 * h * h * h)))


# ---------------------------------------------------------------------------
# Kernel 1 (prelude, single invocation): gene-independent matmuls, hoisted.
#   aT = W1_cell^T @ x^T            (H, N)   -- per-cell half of binary_decoder
#   z2 = LN/GELU trunk of latent_decoder     (N, H1)
# TODO(synk): at production N grid this over rows ("parallel") so v7x's second
# TensorCore has work.
# ---------------------------------------------------------------------------
def prelude_kernel(xT_ref, x_ref, w1xT_ref,
                   wl1_ref, bl1_ref, g1_ref, be1_ref,
                   wl2_ref, bl2_ref, g2_ref, be2_ref,
                   aT_ref, z2_ref):
    aT_ref[...] = jnp.dot(w1xT_ref[...], xT_ref[...],
                          preferred_element_type=jnp.float32)
    h = jnp.dot(x_ref[...], wl1_ref[...],
                preferred_element_type=jnp.float32) + bl1_ref[...]
    h = _gelu(_layernorm(h, g1_ref[...], be1_ref[...]))     # Dropout: identity
    h = jnp.dot(h.astype(jnp.bfloat16), wl2_ref[...],
                preferred_element_type=jnp.float32) + bl2_ref[...]
    z2_ref[...] = _gelu(_layernorm(h, g2_ref[...], be2_ref[...]))


def prelude(x_bf, xT_bf, p):
    n = x_bf.shape[0]
    return pl.pallas_call(
        prelude_kernel,
        out_shape=(jax.ShapeDtypeStruct((BD_HIDDEN, n), jnp.float32),
                   jax.ShapeDtypeStruct((n, HIDDEN_DIMS[1]), jnp.float32)),
        compiler_params=pltpu.CompilerParams(vmem_limit_bytes=VMEM_LIMIT),
    )(xT_bf, x_bf, p["bd_w1xT"], p["wl1"], p["bl1"], p["g1"], p["be1"],
      p["wl2"], p["bl2"], p["g2"], p["be2"])


# ---------------------------------------------------------------------------
# Kernel 2 (hot path, grid = (cell groups, gene tiles)): frozen binary_decoder
# over all (cell, gene) pairs, with the gene_decoder_proj first layer fused in
# as a per-cell-group f32 accumulator over the gene (reduction) axis.
#
#   logits[n, g] = w2 . relu(aT[:, n] + W1_gene^T @ ge^T[:, g] + b1) + b2
#   t[n, :]      = logits[n, :] @ Wp1 + bp1          (accumulated over gene tiles)
#
# Per grid step: one (H,E)@(E,TG) MXU matmul for the gene-side term, CELL_GROUP
# lane-broadcast+add+relu slabs staged into a bf16 VMEM scratch, then a single
# block-diagonal-w2 MXU matmul producing the whole (CELL_GROUP, TG) logits slab
# (no per-cell sublane reduce, no concat), and one (CG,TG)@(TG,PH) MXU matmul
# for the fused wp1 partial sum.
# ---------------------------------------------------------------------------
def binary_decoder_kernel(aTg_ref, geT_ref, w1gT_ref, b1_ref, w2bd_ref,
                          wp1_ref, bp1_ref, b2_ref,
                          logits_ref, t_ref, h_scratch):
    j = pl.program_id(1)

    # gene-side matmul: (H, E) @ (E, TG) -> (H, TG).  Cheap; recomputed per
    # cell group (the gene axis is inner so it cannot stay resident).
    c_mat = jnp.dot(w1gT_ref[...], geT_ref[...],
                    preferred_element_type=jnp.float32) + b1_ref[...]

    aT_blk = aTg_ref[0]                       # (H, CELL_GROUP) f32, this group
    # Stage the per-cell relu slabs into VMEM scratch (bf16, sublane-aligned).
    # The only VPU work left per cell is the broadcast-add + relu + cast.
    for n in range(CELL_GROUP):               # fixed small unroll; stores bound live ranges
        slab = jnp.maximum(aT_blk[:, n:n + 1] + c_mat, 0.0)           # (H, TG)
        h_scratch[n * BD_HIDDEN:(n + 1) * BD_HIDDEN, :] = slab.astype(jnp.bfloat16)

    # MXU reduce over H for all CELL_GROUP cells at once via block-diagonal w2:
    # (CG, CG*H) @ (CG*H, TG) -> (CG, TG) f32.
    logits_blk = jnp.dot(w2bd_ref[...], h_scratch[...],
                         preferred_element_type=jnp.float32) + b2_ref[0, 0]
    logits_ref[...] = logits_blk

    # Fused gene_decoder_proj first layer: accumulate over gene tiles into the
    # resident (CG, PROJ_HIDDEN) output block (gene axis is "arbitrary").
    t_part = jnp.dot(logits_blk.astype(jnp.bfloat16), wp1_ref[...],
                     preferred_element_type=jnp.float32)

    @pl.when(j == 0)
    def _():
        t_ref[...] = t_part + bp1_ref[...]

    @pl.when(j != 0)
    def _():
        t_ref[...] += t_part


def binary_decoder_and_proj(aT_g, p):
    ng, h_bd, cg = aT_g.shape
    n_pad = ng * cg
    e, g = p["gene_embeds_T"].shape
    assert g % GENE_TILE == 0
    n_gt = g // GENE_TILE

    flops = int(ng * n_gt * (2 * h_bd * e * GENE_TILE
                             + 2 * cg * (cg * h_bd) * GENE_TILE
                             + 2 * cg * GENE_TILE * PROJ_HIDDEN))
    bytes_accessed = int(
        aT_g.size * 4
        + p["gene_embeds_T"].size * 2 * ng           # gene tiles re-read per group
        + p["bd_w1gT"].size * 2 + h_bd * 4
        + p["bd_w2_bd"].size * 2
        + p["wp1"].size * 2 * ng + PROJ_HIDDEN * 4
        + 4
        + n_pad * g * 4                              # logits written once
        + n_pad * PROJ_HIDDEN * 4)                   # t written once

    return pl.pallas_call(
        binary_decoder_kernel,
        out_shape=(jax.ShapeDtypeStruct((n_pad, g), jnp.float32),
                   jax.ShapeDtypeStruct((n_pad, PROJ_HIDDEN), jnp.float32)),
        grid=(ng, n_gt),
        in_specs=[
            pl.BlockSpec((1, h_bd, cg), lambda c, j: (c, 0, 0)),     # aT group
            pl.BlockSpec((e, GENE_TILE), lambda c, j: (0, j)),       # gene emb^T
            pl.BlockSpec((h_bd, e), lambda c, j: (0, 0)),            # W1_gene^T
            pl.BlockSpec((h_bd, 1), lambda c, j: (0, 0)),            # effective b1
            pl.BlockSpec((cg, cg * h_bd), lambda c, j: (0, 0)),      # block-diag w2
            pl.BlockSpec((GENE_TILE, PROJ_HIDDEN), lambda c, j: (j, 0)),  # wp1 tile
            pl.BlockSpec((1, PROJ_HIDDEN), lambda c, j: (0, 0)),     # bp1
            pl.BlockSpec(memory_space=pltpu.MemorySpace.SMEM),       # b2 scalar
        ],
        out_specs=(
            pl.BlockSpec((cg, GENE_TILE), lambda c, j: (c, j)),      # logits tile
            pl.BlockSpec((cg, PROJ_HIDDEN), lambda c, j: (c, 0)),    # t accumulator
        ),
        scratch_shapes=[pltpu.VMEM((cg * h_bd, GENE_TILE), jnp.bfloat16)],
        compiler_params=pltpu.CompilerParams(
            dimension_semantics=("parallel", "arbitrary"),
            vmem_limit_bytes=VMEM_LIMIT),
        cost_estimate=pl.CostEstimate(flops=flops, transcendentals=0,
                                      bytes_accessed=bytes_accessed),
    )(aT_g, p["gene_embeds_T"], p["bd_w1gT"], p["bd_b1_col"], p["bd_w2_bd"],
      p["wp1"], p["bp1"], p["bd_b2"])


# ---------------------------------------------------------------------------
# Kernel 3 (gene-tiled, parallel): fused tail.
#   out_tile = logits_tile + (t @ wp2_tile + bp2_tile)            (proj residual)
#            + relu(z2 @ wl3_tile + bl3_tile)                     (latent decoder)
# Tiling over output genes double-buffers the big (., G) weight slabs and lets
# v7x shard the grid across both TensorCores.
# TODO(synk): at production N also tile over rows so the f32 logits/out blocks
# stay within the per-generation VMEM budget.
# ---------------------------------------------------------------------------
def tail_kernel(logits_ref, t_ref, z2_ref, wp2_ref, bp2_ref, wl3_ref, bl3_ref,
                out_ref):
    proj = jnp.dot(t_ref[...].astype(jnp.bfloat16), wp2_ref[...],
                   preferred_element_type=jnp.float32) + bp2_ref[...]
    dx = jnp.dot(z2_ref[...].astype(jnp.bfloat16), wl3_ref[...],
                 preferred_element_type=jnp.float32) + bl3_ref[...]
    out_ref[...] = logits_ref[...] + proj + jnp.maximum(dx, 0.0)


def fused_tail(logits, t, z2, p):
    n, g = logits.shape
    h1 = z2.shape[1]
    assert g % GENE_TILE == 0
    n_gt = g // GENE_TILE
    flops = int(2 * n * (PROJ_HIDDEN + h1) * g)
    bytes_accessed = int(n * g * 4 + n * PROJ_HIDDEN * 4 + n * h1 * 4
                         + PROJ_HIDDEN * g * 2 + g * 4
                         + h1 * g * 2 + g * 4
                         + n * g * 4)
    return pl.pallas_call(
        tail_kernel,
        out_shape=jax.ShapeDtypeStruct((n, g), jnp.float32),
        grid=(n_gt,),
        in_specs=[
            pl.BlockSpec((n, GENE_TILE), lambda j: (0, j)),          # logits tile
            pl.BlockSpec((n, PROJ_HIDDEN), lambda j: (0, 0)),        # proj hidden
            pl.BlockSpec((n, h1), lambda j: (0, 0)),                 # latent hidden
            pl.BlockSpec((PROJ_HIDDEN, GENE_TILE), lambda j: (0, j)),
            pl.BlockSpec((1, GENE_TILE), lambda j: (0, j)),
            pl.BlockSpec((h1, GENE_TILE), lambda j: (0, j)),
            pl.BlockSpec((1, GENE_TILE), lambda j: (0, j)),
        ],
        out_specs=pl.BlockSpec((n, GENE_TILE), lambda j: (0, j)),
        compiler_params=pltpu.CompilerParams(
            dimension_semantics=("parallel",),
            vmem_limit_bytes=VMEM_LIMIT),
        cost_estimate=pl.CostEstimate(flops=flops, transcendentals=0,
                                      bytes_accessed=bytes_accessed),
    )(logits, t, z2, p["wp2"], p["bp2"], p["wl3"], p["bl3"])


# ---------------------------------------------------------------------------
# Forward wrapper (mirrors FinetuneVCICountsDecoder.forward)
# ---------------------------------------------------------------------------
def finetune_vci_counts_decoder_forward(x, params):
    if x.ndim != 3:
        x = x[None]
    b, s, d = x.shape
    # PyTorch sub_batch_size=16 loop is pure chunking -> fuse all rows.
    n = b * s
    xf = x.reshape(n, d)
    pad = (-n) % CELL_GROUP
    if pad:
        xf = jnp.pad(xf, ((0, pad), (0, 0)))        # padded rows sliced off below
    n_pad = n + pad
    n_groups = n_pad // CELL_GROUP

    x_bf = xf.astype(jnp.bfloat16)                  # bf16 MXU operands, f32 accumulate
    xT_bf = jnp.swapaxes(x_bf, 0, 1)
    aT, z2 = prelude(x_bf, xT_bf, params)           # (H, N_pad), (N_pad, H1)

    # Regroup aT into (n_groups, H, CELL_GROUP) so kernel 2 can tile the cell
    # axis with legal block shapes and static in-kernel lane slices.
    aT_g = aT.reshape(BD_HIDDEN, n_groups, CELL_GROUP).swapaxes(0, 1)

    logits, t = binary_decoder_and_proj(aT_g, params)
    out = fused_tail(logits, t, z2, params)
    return out[:n].reshape(b, s, N_GENES)


# ---------------------------------------------------------------------------
# Deterministic synthetic parameters (checkpoint pieces synthesized)
# ---------------------------------------------------------------------------
def init_params(key):
    ks = iter(jax.random.split(key, 32))

    def dense(fan_in, fan_out):
        w = jax.random.normal(next(ks), (fan_in, fan_out), jnp.float32) / jnp.sqrt(float(fan_in))
        b = 0.01 * jax.random.normal(next(ks), (fan_out,), jnp.float32)
        return w, b

    p = {}
    # synthetic gene embedding table (finetune.get_gene_embedding), transposed
    ge = jax.random.normal(next(ks), (N_GENES, GENE_EMB_DIM), jnp.float32)
    p["gene_embeds_T"] = ge.T.astype(jnp.bfloat16)                 # (E, G)

    # synthetic frozen binary_decoder (concat-Linear decomposed)
    w1x, b1 = dense(LATENT_DIM, BD_HIDDEN)
    w1g, _ = dense(GENE_EMB_DIM, BD_HIDDEN)
    w1r = 0.1 * jax.random.normal(next(ks), (BD_HIDDEN,), jnp.float32)
    w2, b2 = dense(BD_HIDDEN, 1)
    rda_feat = jnp.log1p(jnp.float32(READ_DEPTH))    # task_counts = read_depth (rda)
    p["bd_w1xT"] = w1x.T.astype(jnp.bfloat16)                      # (H, D)
    p["bd_w1gT"] = w1g.T.astype(jnp.bfloat16)                      # (H, E)
    p["bd_b1_col"] = (b1 + rda_feat * w1r).reshape(BD_HIDDEN, 1)   # f32
    p["bd_w2_col"] = w2.reshape(BD_HIDDEN, 1)                      # f32 (reference)
    # block-diagonal w2 for the MXU per-group H-reduction: (CG, CG*H)
    p["bd_w2_bd"] = jnp.kron(jnp.eye(CELL_GROUP, dtype=jnp.float32),
                             w2.reshape(1, BD_HIDDEN)).astype(jnp.bfloat16)
    p["bd_b2"] = b2.reshape(1, 1)                                  # f32, SMEM

    # gene_decoder_proj: Linear(G, 128) -> Linear(128, G)
    wp1, bp1 = dense(N_GENES, PROJ_HIDDEN)
    wp2, bp2 = dense(PROJ_HIDDEN, N_GENES)
    p["wp1"], p["bp1"] = wp1.astype(jnp.bfloat16), bp1.reshape(1, -1)
    p["wp2"], p["bp2"] = wp2.astype(jnp.bfloat16), bp2.reshape(1, -1)

    # latent_decoder: Linear-LN-GELU-Drop, Linear-LN-GELU-Drop, Linear, ReLU
    wl1, bl1 = dense(LATENT_DIM, HIDDEN_DIMS[0])
    wl2, bl2 = dense(HIDDEN_DIMS[0], HIDDEN_DIMS[1])
    wl3, bl3 = dense(HIDDEN_DIMS[1], N_GENES)
    p["wl1"], p["bl1"] = wl1.astype(jnp.bfloat16), bl1.reshape(1, -1)
    p["wl2"], p["bl2"] = wl2.astype(jnp.bfloat16), bl2.reshape(1, -1)
    p["wl3"], p["bl3"] = wl3.astype(jnp.bfloat16), bl3.reshape(1, -1)
    p["g1"] = (1.0 + 0.1 * jax.random.normal(next(ks), (HIDDEN_DIMS[0],), jnp.float32)).reshape(1, -1)
    p["be1"] = (0.1 * jax.random.normal(next(ks), (HIDDEN_DIMS[0],), jnp.float32)).reshape(1, -1)
    p["g2"] = (1.0 + 0.1 * jax.random.normal(next(ks), (HIDDEN_DIMS[1],), jnp.float32)).reshape(1, -1)
    p["be2"] = (0.1 * jax.random.normal(next(ks), (HIDDEN_DIMS[1],), jnp.float32)).reshape(1, -1)
    return p


# ---------------------------------------------------------------------------
# Pure-JAX reference (same math and same bf16-operand / f32-accumulate precision
# policy, no Pallas) for a numerical sanity check
# ---------------------------------------------------------------------------
def reference_forward(x, p):
    if x.ndim != 3:
        x = x[None]
    b, s, d = x.shape
    xf = x.reshape(b * s, d)
    xbf = xf.astype(jnp.bfloat16)
    dot = functools.partial(jnp.dot, preferred_element_type=jnp.float32)

    aT = dot(p["bd_w1xT"], xbf.T)                                        # (H, N)
    c_full = dot(p["bd_w1gT"], p["gene_embeds_T"]) + p["bd_b1_col"]      # (H, G)
    h = jnp.maximum(aT[:, :, None] + c_full[:, None, :], 0.0)            # (H, N, G)
    w2_bf = p["bd_w2_col"].astype(jnp.bfloat16)[:, 0]                    # (H,)
    logits = jnp.einsum("hng,h->ng", h.astype(jnp.bfloat16), w2_bf,
                        preferred_element_type=jnp.float32) + p["bd_b2"][0, 0]

    t = dot(logits.astype(jnp.bfloat16), p["wp1"]) + p["bp1"]
    proj = dot(t.astype(jnp.bfloat16), p["wp2"]) + p["bp2"]
    decoded_gene = logits + proj

    z = _gelu(_layernorm(dot(xbf, p["wl1"]) + p["bl1"], p["g1"], p["be1"]))
    z = _gelu(_layernorm(dot(z.astype(jnp.bfloat16), p["wl2"]) + p["bl2"],
                         p["g2"], p["be2"]))
    decoded_x = jnp.maximum(dot(z.astype(jnp.bfloat16), p["wl3"]) + p["bl3"], 0.0)

    return (decoded_gene + decoded_x).reshape(b, s, N_GENES)


if __name__ == "__main__":
    key = jax.random.PRNGKey(0)
    pkey, xkey = jax.random.split(key)
    params = init_params(pkey)
    x = jax.random.normal(xkey, (BATCH, SEQ, LATENT_DIM), jnp.float32)

    fwd = jax.jit(finetune_vci_counts_decoder_forward)
    out = jax.block_until_ready(fwd(x, params))

    ref = reference_forward(x, params)
    assert out.shape == (BATCH, SEQ, N_GENES), out.shape
    max_err = float(jnp.max(jnp.abs(out - ref)))
    assert jnp.allclose(out, ref, rtol=2e-2, atol=2e-2), f"max abs err {max_err}"
    print("KERNEL_OK")
</pallas_src>

<mosaic_0001>
module attributes {stable_mosaic.version = 11 : i64} {
  func.func @prelude_kernel(%arg0: memref<32x16xbf16, #tpu.memory_space<vmem>>, %arg1: memref<16x32xbf16, #tpu.memory_space<vmem>>, %arg2: memref<64x32xbf16, #tpu.memory_space<vmem>>, %arg3: memref<32x64xbf16, #tpu.memory_space<vmem>>, %arg4: memref<1x64xf32, #tpu.memory_space<vmem>>, %arg5: memref<1x64xf32, #tpu.memory_space<vmem>>, %arg6: memref<1x64xf32, #tpu.memory_space<vmem>>, %arg7: memref<64x64xbf16, #tpu.memory_space<vmem>>, %arg8: memref<1x64xf32, #tpu.memory_space<vmem>>, %arg9: memref<1x64xf32, #tpu.memory_space<vmem>>, %arg10: memref<1x64xf32, #tpu.memory_space<vmem>>, %arg11: memref<64x16xf32, #tpu.memory_space<vmem>>, %arg12: memref<16x64xf32, #tpu.memory_space<vmem>>) attributes {dimension_semantics = [], scalar_prefetch = 0 : i64, scratch_operands = 0 : i64, tpu.core_type = #tpu.core_type<tc>} {
    %c0 = arith.constant 0 : index
    %c0_0 = arith.constant 0 : index
    %0 = vector.load %arg2[%c0, %c0_0] : memref<64x32xbf16, #tpu.memory_space<vmem>>, vector<64x32xbf16>
    %c0_1 = arith.constant 0 : index
    %c0_2 = arith.constant 0 : index
    %1 = vector.load %arg0[%c0_1, %c0_2] : memref<32x16xbf16, #tpu.memory_space<vmem>>, vector<32x16xbf16>
    %cst = arith.constant dense<0.000000e+00> : vector<64x16xf32>
    %2 = tpu.matmul %0, %1, %cst {dimension_numbers = #tpu.dot_dimension_numbers<[1], [0], [0], [1], [0, 0, 1, 1], [], []>} : vector<64x32xbf16>, vector<32x16xbf16>, vector<64x16xf32> -> vector<64x16xf32>
    %c0_3 = arith.constant 0 : index
    %c0_4 = arith.constant 0 : index
    %3 = vector.load %arg11[%c0_3, %c0_4] : memref<64x16xf32, #tpu.memory_space<vmem>>, vector<64x16xf32>
    tpu.vector_store %arg11[%c0_3, %c0_4], %2 {strides = array<i32>} : memref<64x16xf32, #tpu.memory_space<vmem>>, vector<64x16xf32>,
    %c0_5 = arith.constant 0 : index
    %c0_6 = arith.constant 0 : index
    %4 = vector.load %arg1[%c0_5, %c0_6] : memref<16x32xbf16, #tpu.memory_space<vmem>>, vector<16x32xbf16>
    %c0_7 = arith.constant 0 : index
    %c0_8 = arith.constant 0 : index
    %5 = vector.load %arg3[%c0_7, %c0_8] : memref<32x64xbf16, #tpu.memory_space<vmem>>, vector<32x64xbf16>
    %cst_9 = arith.constant dense<0.000000e+00> : vector<16x64xf32>
    %6 = tpu.matmul %4, %5, %cst_9 {dimension_numbers = #tpu.dot_dimension_numbers<[1], [0], [0], [1], [0, 0, 1, 1], [], []>} : vector<16x32xbf16>, vector<32x64xbf16>, vector<16x64xf32> -> vector<16x64xf32>
    %c0_10 = arith.constant 0 : index
    %c0_11 = arith.constant 0 : index
    %7 = vector.load %arg4[%c0_10, %c0_11] : memref<1x64xf32, #tpu.memory_space<vmem>>, vector<1x64xf32>
    %8 = vector.broadcast %7 : vector<1x64xf32> to vector<16x64xf32>
    %9 = arith.addf %6, %8 : vector<16x64xf32>
    %c0_12 = arith.constant 0 : index
    %c0_13 = arith.constant 0 : index
    %10 = vector.load %arg5[%c0_12, %c0_13] : memref<1x64xf32, #tpu.memory_space<vmem>>, vector<1x64xf32>
    %c0_14 = arith.constant 0 : index
    %c0_15 = arith.constant 0 : index
    %11 = vector.load %arg6[%c0_14, %c0_15] : memref<1x64xf32, #tpu.memory_space<vmem>>, vector<1x64xf32>
    %cst_16 = arith.constant dense<0.000000e+00> : vector<16xf32>
    %12 = vector.multi_reduction <add>, %9, %cst_16 [1] : vector<16x64xf32> to vector<16xf32>
    %13 = vector.shape_cast %12 : vector<16xf32> to vector<16x1xf32>
    %cst_17 = arith.constant 6.400000e+01 : f32
    %14 = vector.broadcast %cst_17 : f32 to vector<16x1xf32>
    %15 = arith.divf %13, %14 : vector<16x1xf32>
    %16 = vector.broadcast %15 : vector<16x1xf32> to vector<16x64xf32>
    %17 = arith.subf %9, %16 : vector<16x64xf32>
    %18 = arith.mulf %17, %17 : vector<16x64xf32>
    %cst_18 = arith.constant dense<0.000000e+00> : vector<16xf32>
    %19 = vector.multi_reduction <add>, %18, %cst_18 [1] : vector<16x64xf32> to vector<16xf32>
    %20 = vector.shape_cast %19 : vector<16xf32> to vector<16x1xf32>
    %cst_19 = arith.constant 6.400000e+01 : f32
    %21 = vector.broadcast %cst_19 : f32 to vector<16x1xf32>
    %22 = arith.divf %20, %21 : vector<16x1xf32>
    %23 = vector.broadcast %15 : vector<16x1xf32> to vector<16x64xf32>
    %24 = arith.subf %9, %23 : vector<16x64xf32>
    %cst_20 = arith.constant 9.99999974E-6 : f32
    %25 = vector.broadcast %cst_20 : f32 to vector<16x1xf32>
    %26 = arith.addf %22, %25 : vector<16x1xf32>
    %27 = math.rsqrt %26 : vector<16x1xf32>
    %28 = vector.broadcast %27 : vector<16x1xf32> to vector<16x64xf32>
    %29 = arith.mulf %24, %28 : vector<16x64xf32>
    %30 = vector.broadcast %10 : vector<1x64xf32> to vector<16x64xf32>
    %31 = arith.mulf %29, %30 : vector<16x64xf32>
    %32 = vector.broadcast %11 : vector<1x64xf32> to vector<16x64xf32>
    %33 = arith.addf %31, %32 : vector<16x64xf32>
    %cst_21 = arith.constant 5.000000e-01 : f32
    %34 = vector.broadcast %cst_21 : f32 to vector<16x64xf32>
    %35 = arith.mulf %34, %33 : vector<16x64xf32>
    %cst_22 = arith.constant 4.471500e-02 : f32
    %36 = vector.broadcast %cst_22 : f32 to vector<16x64xf32>
    %37 = arith.mulf %36, %33 : vector<16x64xf32>
    %38 = arith.mulf %37, %33 : vector<16x64xf32>
    %39 = arith.mulf %38, %33 : vector<16x64xf32>
    %40 = arith.addf %33, %39 : vector<16x64xf32>
    %cst_23 = arith.constant 0.797884583 : f32
    %41 = vector.broadcast %cst_23 : f32 to vector<16x64xf32>
    %42 = arith.mulf %41, %40 : vector<16x64xf32>
    %43 = math.tanh %42 : vector<16x64xf32>
    %cst_24 = arith.constant 1.000000e+00 : f32
    %44 = vector.broadcast %cst_24 : f32 to vector<16x64xf32>
    %45 = arith.addf %44, %43 : vector<16x64xf32>
    %46 = arith.mulf %35, %45 : vector<16x64xf32>
    %47 = arith.truncf %46 : vector<16x64xf32> to vector<16x64xbf16>
    %c0_25 = arith.constant 0 : index
    %c0_26 = arith.constant 0 : index
    %48 = vector.load %arg7[%c0_25, %c0_26] : memref<64x64xbf16, #tpu.memory_space<vmem>>, vector<64x64xbf16>
    %cst_27 = arith.constant dense<0.000000e+00> : vector<16x64xf32>
    %49 = tpu.matmul %47, %48, %cst_27 {dimension_numbers = #tpu.dot_dimension_numbers<[1], [0], [0], [1], [0, 0, 1, 1], [], []>} : vector<16x64xbf16>, vector<64x64xbf16>, vector<16x64xf32> -> vector<16x64xf32>
    %c0_28 = arith.constant 0 : index
    %c0_29 = arith.constant 0 : index
    %50 = vector.load %arg8[%c0_28, %c0_29] : memref<1x64xf32, #tpu.memory_space<vmem>>, vector<1x64xf32>
    %51 = vector.broadcast %50 : vector<1x64xf32> to vector<16x64xf32>
    %52 = arith.addf %49, %51 : vector<16x64xf32>
    %c0_30 = arith.constant 0 : index
    %c0_31 = arith.constant 0 : index
    %53 = vector.load %arg9[%c0_30, %c0_31] : memref<1x64xf32, #tpu.memory_space<vmem>>, vector<1x64xf32>
    %c0_32 = arith.constant 0 : index
    %c0_33 = arith.constant 0 : index
    %54 = vector.load %arg10[%c0_32, %c0_33] : memref<1x64xf32, #tpu.memory_space<vmem>>, vector<1x64xf32>
    %cst_34 = arith.constant dense<0.000000e+00> : vector<16xf32>
    %55 = vector.multi_reduction <add>, %52, %cst_34 [1] : vector<16x64xf32> to vector<16xf32>
    %56 = vector.shape_cast %55 : vector<16xf32> to vector<16x1xf32>
    %cst_35 = arith.constant 6.400000e+01 : f32
    %57 = vector.broadcast %cst_35 : f32 to vector<16x1xf32>
    %58 = arith.divf %56, %57 : vector<16x1xf32>
    %59 = vector.broadcast %58 : vector<16x1xf32> to vector<16x64xf32>
    %60 = arith.subf %52, %59 : vector<16x64xf32>
    %61 = arith.mulf %60, %60 : vector<16x64xf32>
    %cst_36 = arith.constant dense<0.000000e+00> : vector<16xf32>
    %62 = vector.multi_reduction <add>, %61, %cst_36 [1] : vector<16x64xf32> to vector<16xf32>
    %63 = vector.shape_cast %62 : vector<16xf32> to vector<16x1xf32>
    %cst_37 = arith.constant 6.400000e+01 : f32
    %64 = vector.broadcast %cst_37 : f32 to vector<16x1xf32>
    %65 = arith.divf %63, %64 : vector<16x1xf32>
    %66 = vector.broadcast %58 : vector<16x1xf32> to vector<16x64xf32>
    %67 = arith.subf %52, %66 : vector<16x64xf32>
    %cst_38 = arith.constant 9.99999974E-6 : f32
    %68 = vector.broadcast %cst_38 : f32 to vector<16x1xf32>
    %69 = arith.addf %65, %68 : vector<16x1xf32>
    %70 = math.rsqrt %69 : vector<16x1xf32>
    %71 = vector.broadcast %70 : vector<16x1xf32> to vector<16x64xf32>
    %72 = arith.mulf %67, %71 : vector<16x64xf32>
    %73 = vector.broadcast %53 : vector<1x64xf32> to vector<16x64xf32>
    %74 = arith.mulf %72, %73 : vector<16x64xf32>
    %75 = vector.broadcast %54 : vector<1x64xf32> to vector<16x64xf32>
    %76 = arith.addf %74, %75 : vector<16x64xf32>
    %cst_39 = arith.constant 5.000000e-01 : f32
    %77 = vector.broadcast %cst_39 : f32 to vector<16x64xf32>
    %78 = arith.mulf %77, %76 : vector<16x64xf32>
    %cst_40 = arith.constant 4.471500e-02 : f32
    %79 = vector.broadcast %cst_40 : f32 to vector<16x64xf32>
    %80 = arith.mulf %79, %76 : vector<16x64xf32>
    %81 = arith.mulf %80, %76 : vector<16x64xf32>
    %82 = arith.mulf %81, %76 : vector<16x64xf32>
    %83 = arith.addf %76, %82 : vector<16x64xf32>
    %cst_41 = arith.constant 0.797884583 : f32
    %84 = vector.broadcast %cst_41 : f32 to vector<16x64xf32>
    %85 = arith.mulf %84, %83 : vector<16x64xf32>
    %86 = math.tanh %85 : vector<16x64xf32>
    %cst_42 = arith.constant 1.000000e+00 : f32
    %87 = vector.broadcast %cst_42 : f32 to vector<16x64xf32>
    %88 = arith.addf %87, %86 : vector<16x64xf32>
    %89 = arith.mulf %78, %88 : vector<16x64xf32>
    %c0_43 = arith.constant 0 : index
    %c0_44 = arith.constant 0 : index
    %90 = vector.load %arg12[%c0_43, %c0_44] : memref<16x64xf32, #tpu.memory_space<vmem>>, vector<16x64xf32>
    tpu.vector_store %arg12[%c0_43, %c0_44], %89 {strides = array<i32>} : memref<16x64xf32, #tpu.memory_space<vmem>>, vector<16x64xf32>,
    return
  }
}

module attributes {stable_mosaic.version = 11 : i64} {
  func.func @binary_decoder_kernel(%arg0: i32, %arg1: i32, %arg2: memref<1x64x8xf32, #tpu.memory_space<vmem>>, %arg3: memref<32x128xbf16, #tpu.memory_space<vmem>>, %arg4: memref<64x32xbf16, #tpu.memory_space<vmem>>, %arg5: memref<64x1xf32, #tpu.memory_space<vmem>>, %arg6: memref<8x512xbf16, #tpu.memory_space<vmem>>, %arg7: memref<128x128xbf16, #tpu.memory_space<vmem>>, %arg8: memref<1x128xf32, #tpu.memory_space<vmem>>, %arg9: memref<1x1xf32, #tpu.memory_space<smem>>, %arg10: memref<8x128xf32, #tpu.memory_space<vmem>>, %arg11: memref<8x128xf32, #tpu.memory_space<vmem>>, %arg12: memref<512x128xbf16, #tpu.memory_space<vmem>>) attributes {dimension_semantics = [#tpu.dimension_semantics<parallel>, #tpu.dimension_semantics<arbitrary>], iteration_bounds = array<i64: 2, 2>, scalar_prefetch = 0 : i64, scratch_operands = 1 : i64, tpu.core_type = #tpu.core_type<tc>, window_params = [{transform_indices = @transform_0, window_bounds = array<i64: 1, 64, 8>}, {transform_indices = @transform_1, window_bounds = array<i64: 32, 128>}, {pipeline_mode = #tpu.pipeline_mode<synchronous>, transform_indices = @transform_2, window_bounds = array<i64: 64, 32>}, {pipeline_mode = #tpu.pipeline_mode<synchronous>, transform_indices = @transform_3, window_bounds = array<i64: 64, 1>}, {pipeline_mode = #tpu.pipeline_mode<synchronous>, transform_indices = @transform_4, window_bounds = array<i64: 8, 512>}, {transform_indices = @transform_5, window_bounds = array<i64: 128, 128>}, {pipeline_mode = #tpu.pipeline_mode<synchronous>, transform_indices = @transform_6, window_bounds = array<i64: 1, 128>}, {transform_indices = @transform_7, window_bounds = array<i64: 1, 1>}, {transform_indices = @transform_8, window_bounds = array<i64: 8, 128>}, {transform_indices = @transform_9, window_bounds = array<i64: 8, 128>}]} {
    %c0 = arith.constant 0 : index
    %c0_0 = arith.constant 0 : index
    %0 = vector.load %arg4[%c0, %c0_0] : memref<64x32xbf16, #tpu.memory_space<vmem>>, vector<64x32xbf16>
    %c0_1 = arith.constant 0 : index
    %c0_2 = arith.constant 0 : index
    %1 = vector.load %arg3[%c0_1, %c0_2] : memref<32x128xbf16, #tpu.memory_space<vmem>>, vector<32x128xbf16>
    %cst = arith.constant dense<0.000000e+00> : vector<64x128xf32>
    %2 = tpu.matmul %0, %1, %cst {dimension_numbers = #tpu.dot_dimension_numbers<[1], [0], [0], [1], [0, 0, 1, 1], [], []>} : vector<64x32xbf16>, vector<32x128xbf16>, vector<64x128xf32> -> vector<64x128xf32>
    %c0_3 = arith.constant 0 : index
    %c0_4 = arith.constant 0 : index
    %3 = vector.load %arg5[%c0_3, %c0_4] : memref<64x1xf32, #tpu.memory_space<vmem>>, vector<64x1xf32>
    %4 = vector.broadcast %3 : vector<64x1xf32> to vector<64x128xf32>
    %5 = arith.addf %2, %4 : vector<64x128xf32>
    %c0_5 = arith.constant 0 : index
    %c0_6 = arith.constant 0 : index
    %c0_7 = arith.constant 0 : index
    %6 = vector.load %arg2[%c0_5, %c0_6, %c0_7] : memref<1x64x8xf32, #tpu.memory_space<vmem>>, vector<1x64x8xf32>
    %7 = vector.shape_cast %6 : vector<1x64x8xf32> to vector<64x8xf32>
    %8 = vector.extract_strided_slice %7 {offsets = [0, 0], sizes = [64, 1], strides = [1, 1]} : vector<64x8xf32> to vector<64x1xf32>
    %9 = vector.broadcast %8 : vector<64x1xf32> to vector<64x128xf32>
    %10 = arith.addf %9, %5 : vector<64x128xf32>
    %cst_8 = arith.constant 0.000000e+00 : f32
    %11 = vector.broadcast %cst_8 : f32 to vector<64x128xf32>
    %12 = arith.maximumf %10, %11 : vector<64x128xf32>
    %13 = arith.truncf %12 : vector<64x128xf32> to vector<64x128xbf16>
    %c0_9 = arith.constant 0 : index
    %c0_10 = arith.constant 0 : index
    %14 = vector.load %arg12[%c0_9, %c0_10] : memref<512x128xbf16, #tpu.memory_space<vmem>>, vector<64x128xbf16>
    tpu.vector_store %arg12[%c0_9, %c0_10], %13 {strides = array<i32>} : memref<512x128xbf16, #tpu.memory_space<vmem>>, vector<64x128xbf16>,
    %15 = vector.extract_strided_slice %7 {offsets = [0, 1], sizes = [64, 1], strides = [1, 1]} : vector<64x8xf32> to vector<64x1xf32>
    %16 = vector.broadcast %15 : vector<64x1xf32> to vector<64x128xf32>
    %17 = arith.addf %16, %5 : vector<64x128xf32>
    %cst_11 = arith.constant 0.000000e+00 : f32
    %18 = vector.broadcast %cst_11 : f32 to vector<64x128xf32>
    %19 = arith.maximumf %17, %18 : vector<64x128xf32>
    %20 = arith.truncf %19 : vector<64x128xf32> to vector<64x128xbf16>
    %c64 = arith.constant 64 : index
    %c0_12 = arith.constant 0 : index
    %21 = vector.load %arg12[%c64, %c0_12] : memref<512x128xbf16, #tpu.memory_space<vmem>>, vector<64x128xbf16>
    tpu.vector_store %arg12[%c64, %c0_12], %20 {strides = array<i32>} : memref<512x128xbf16, #tpu.memory_space<vmem>>, vector<64x128xbf16>,
    %22 = vector.extract_strided_slice %7 {offsets = [0, 2], sizes = [64, 1], strides = [1, 1]} : vector<64x8xf32> to vector<64x1xf32>
    %23 = vector.broadcast %22 : vector<64x1xf32> to vector<64x128xf32>
    %24 = arith.addf %23, %5 : vector<64x128xf32>
    %cst_13 = arith.constant 0.000000e+00 : f32
    %25 = vector.broadcast %cst_13 : f32 to vector<64x128xf32>
    %26 = arith.maximumf %24, %25 : vector<64x128xf32>
    %27 = arith.truncf %26 : vector<64x128xf32> to vector<64x128xbf16>
    %c128 = arith.constant 128 : index
    %c0_14 = arith.constant 0 : index
    %28 = vector.load %arg12[%c128, %c0_14] : memref<512x128xbf16, #tpu.memory_space<vmem>>, vector<64x128xbf16>
    tpu.vector_store %arg12[%c128, %c0_14], %27 {strides = array<i32>} : memref<512x128xbf16, #tpu.memory_space<vmem>>, vector<64x128xbf16>,
    %29 = vector.extract_strided_slice %7 {offsets = [0, 3], sizes = [64, 1], strides = [1, 1]} : vector<64x8xf32> to vector<64x1xf32>
    %30 = vector.broadcast %29 : vector<64x1xf32> to vector<64x128xf32>
    %31 = arith.addf %30, %5 : vector<64x128xf32>
    %cst_15 = arith.constant 0.000000e+00 : f32
    %32 = vector.broadcast %cst_15 : f32 to vector<64x128xf32>
    %33 = arith.maximumf %31, %32 : vector<64x128xf32>
    %34 = arith.truncf %33 : vector<64x128xf32> to vector<64x128xbf16>
    %c192 = arith.constant 192 : index
    %c0_16 = arith.constant 0 : index
    %35 = vector.load %arg12[%c192, %c0_16] : memref<512x128xbf16, #tpu.memory_space<vmem>>, vector<64x128xbf16>
    tpu.vector_store %arg12[%c192, %c0_16], %34 {strides = array<i32>} : memref<512x128xbf16, #tpu.memory_space<vmem>>, vector<64x128xbf16>,
    %36 = vector.extract_strided_slice %7 {offsets = [0, 4], sizes = [64, 1], strides = [1, 1]} : vector<64x8xf32> to vector<64x1xf32>
    %37 = vector.broadcast %36 : vector<64x1xf32> to vector<64x128xf32>
    %38 = arith.addf %37, %5 : vector<64x128xf32>
    %cst_17 = arith.constant 0.000000e+00 : f32
    %39 = vector.broadcast %cst_17 : f32 to vector<64x128xf32>
    %40 = arith.maximumf %38, %39 : vector<64x128xf32>
    %41 = arith.truncf %40 : vector<64x128xf32> to vector<64x128xbf16>
    %c256 = arith.constant 256 : index
    %c0_18 = arith.constant 0 : index
    %42 = vector.load %arg12[%c256, %c0_18] : memref<512x128xbf16, #tpu.memory_space<vmem>>, vector<64x128xbf16>
    tpu.vector_store %arg12[%c256, %c0_18], %41 {strides = array<i32>} : memref<512x128xbf16, #tpu.memory_space<vmem>>, vector<64x128xbf16>,
    %43 = vector.extract_strided_slice %7 {offsets = [0, 5], sizes = [64, 1], strides = [1, 1]} : vector<64x8xf32> to vector<64x1xf32>
    %44 = vector.broadcast %43 : vector<64x1xf32> to vector<64x128xf32>
    %45 = arith.addf %44, %5 : vector<64x128xf32>
    %cst_19 = arith.constant 0.000000e+00 : f32
    %46 = vector.broadcast %cst_19 : f32 to vector<64x128xf32>
    %47 = arith.maximumf %45, %46 : vector<64x128xf32>
    %48 = arith.truncf %47 : vector<64x128xf32> to vector<64x128xbf16>
    %c320 = arith.constant 320 : index
    %c0_20 = arith.constant 0 : index
    %49 = vector.load %arg12[%c320, %c0_20] : memref<512x128xbf16, #tpu.memory_space<vmem>>, vector<64x128xbf16>
    tpu.vector_store %arg12[%c320, %c0_20], %48 {strides = array<i32>} : memref<512x128xbf16, #tpu.memory_space<vmem>>, vector<64x128xbf16>,
    %50 = vector.extract_strided_slice %7 {offsets = [0, 6], sizes = [64, 1], strides = [1, 1]} : vector<64x8xf32> to vector<64x1xf32>
    %51 = vector.broadcast %50 : vector<64x1xf32> to vector<64x128xf32>
    %52 = arith.addf %51, %5 : vector<64x128xf32>
    %cst_21 = arith.constant 0.000000e+00 : f32
    %53 = vector.broadcast %cst_21 : f32 to vector<64x128xf32>
    %54 = arith.maximumf %52, %53 : vector<64x128xf32>
    %55 = arith.truncf %54 : vector<64x128xf32> to vector<64x128xbf16>
    %c384 = arith.constant 384 : index
    %c0_22 = arith.constant 0 : index
    %56 = vector.load %arg12[%c384, %c0_22] : memref<512x128xbf16, #tpu.memory_space<vmem>>, vector<64x128xbf16>
    tpu.vector_store %arg12[%c384, %c0_22], %55 {strides = array<i32>} : memref<512x128xbf16, #tpu.memory_space<vmem>>, vector<64x128xbf16>,
    %57 = vector.extract_strided_slice %7 {offsets = [0, 7], sizes = [64, 1], strides = [1, 1]} : vector<64x8xf32> to vector<64x1xf32>
    %58 = vector.broadcast %57 : vector<64x1xf32> to vector<64x128xf32>
    %59 = arith.addf %58, %5 : vector<64x128xf32>
    %cst_23 = arith.constant 0.000000e+00 : f32
    %60 = vector.broadcast %cst_23 : f32 to vector<64x128xf32>
    %61 = arith.maximumf %59, %60 : vector<64x128xf32>
    %62 = arith.truncf %61 : vector<64x128xf32> to vector<64x128xbf16>
    %c448 = arith.constant 448 : index
    %c0_24 = arith.constant 0 : index
    %63 = vector.load %arg12[%c448, %c0_24] : memref<512x128xbf16, #tpu.memory_space<vmem>>, vector<64x128xbf16>
    tpu.vector_store %arg12[%c448, %c0_24], %62 {strides = array<i32>} : memref<512x128xbf16, #tpu.memory_space<vmem>>, vector<64x128xbf16>,
    %c0_25 = arith.constant 0 : index
    %c0_26 = arith.constant 0 : index
    %64 = vector.load %arg6[%c0_25, %c0_26] : memref<8x512xbf16, #tpu.memory_space<vmem>>, vector<8x512xbf16>
    %c0_27 = arith.constant 0 : index
    %c0_28 = arith.constant 0 : index
    %65 = vector.load %arg12[%c0_27, %c0_28] : memref<512x128xbf16, #tpu.memory_space<vmem>>, vector<512x128xbf16>
    %cst_29 = arith.constant dense<0.000000e+00> : vector<8x128xf32>
    %66 = tpu.matmul %64, %65, %cst_29 {dimension_numbers = #tpu.dot_dimension_numbers<[1], [0], [0], [1], [0, 0, 1, 1], [], []>} : vector<8x512xbf16>, vector<512x128xbf16>, vector<8x128xf32> -> vector<8x128xf32>
    %c0_30 = arith.constant 0 : index
    %c0_31 = arith.constant 0 : index
    %67 = memref.load %arg9[%c0_30, %c0_31] : memref<1x1xf32, #tpu.memory_space<smem>>
    %68 = vector.broadcast %67 : f32 to vector<8x128xf32>
    %69 = arith.addf %66, %68 : vector<8x128xf32>
    %c0_32 = arith.constant 0 : index
    %c0_33 = arith.constant 0 : index
    %70 = vector.load %arg10[%c0_32, %c0_33] : memref<8x128xf32, #tpu.memory_space<vmem>>, vector<8x128xf32>
    tpu.vector_store %arg10[%c0_32, %c0_33], %69 {strides = array<i32>} : memref<8x128xf32, #tpu.memory_space<vmem>>, vector<8x128xf32>,
    %71 = arith.truncf %69 : vector<8x128xf32> to vector<8x128xbf16>
    %c0_34 = arith.constant 0 : index
    %c0_35 = arith.constant 0 : index
    %72 = vector.load %arg7[%c0_34, %c0_35] : memref<128x128xbf16, #tpu.memory_space<vmem>>, vector<128x128xbf16>
    %cst_36 = arith.constant dense<0.000000e+00> : vector<8x128xf32>
    %73 = tpu.matmul %71, %72, %cst_36 {dimension_numbers = #tpu.dot_dimension_numbers<[1], [0], [0], [1], [0, 0, 1, 1], [], []>} : vector<8x128xbf16>, vector<128x128xbf16>, vector<8x128xf32> -> vector<8x128xf32>
    %c0_i32 = arith.constant 0 : i32
    %74 = arith.cmpi eq, %arg1, %c0_i32 : i32
    %75 = arith.extui %74 : i1 to i32
    %c0_i32_37 = arith.constant 0 : i32
    %76 = arith.cmpi ne, %75, %c0_i32_37 : i32
    scf.if %76 {
      %c0_40 = arith.constant 0 : index
      %c0_41 = arith.constant 0 : index
      %80 = vector.load %arg8[%c0_40, %c0_41] : memref<1x128xf32, #tpu.memory_space<vmem>>, vector<1x128xf32>
      %81 = vector.broadcast %80 : vector<1x128xf32> to vector<8x128xf32>
      %82 = arith.addf %73, %81 : vector<8x128xf32>
      %c0_42 = arith.constant 0 : index
      %c0_43 = arith.constant 0 : index
      %83 = vector.load %arg11[%c0_42, %c0_43] : memref<8x128xf32, #tpu.memory_space<vmem>>, vector<8x128xf32>
      tpu.vector_store %arg11[%c0_42, %c0_43], %82 {strides = array<i32>} : memref<8x128xf32, #tpu.memory_space<vmem>>, vector<8x128xf32>,
    } else {
    }
    %c0_i32_38 = arith.constant 0 : i32
    %77 = arith.cmpi ne, %arg1, %c0_i32_38 : i32
    %78 = arith.extui %77 : i1 to i32
    %c0_i32_39 = arith.constant 0 : i32
    %79 = arith.cmpi ne, %78, %c0_i32_39 : i32
    scf.if %79 {
      %c0_40 = arith.constant 0 : index
      %c0_41 = arith.constant 0 : index
      %80 = vector.load %arg11[%c0_40, %c0_41] : memref<8x128xf32, #tpu.memory_space<vmem>>, vector<8x128xf32>
      %81 = arith.addf %80, %73 : vector<8x128xf32>
      %c0_42 = arith.constant 0 : index
      %c0_43 = arith.constant 0 : index
      %82 = vector.load %arg11[%c0_42, %c0_43] : memref<8x128xf32, #tpu.memory_space<vmem>>, vector<8x128xf32>
      tpu.vector_store %arg11[%c0_42, %c0_43], %81 {strides = array<i32>} : memref<8x128xf32, #tpu.memory_space<vmem>>, vector<8x128xf32>,
    } else {
    }
    return
  }
  func.func @transform_0(%arg0: i32, %arg1: i32) -> (i32, i32, i32) {
    %c0_i32 = arith.constant 0 : i32
    %c0_i32_0 = arith.constant 0 : i32
    %c0_i32_1 = arith.constant 0 : i32
    return %arg0, %c0_i32, %c0_i32_0 : i32, i32, i32
  }
  func.func @transform_1(%arg0: i32, %arg1: i32) -> (i32, i32) {
    %c0_i32 = arith.constant 0 : i32
    %c0_i32_0 = arith.constant 0 : i32
    return %c0_i32, %arg1 : i32, i32
  }
  func.func @transform_2(%arg0: i32, %arg1: i32) -> (i32, i32) {
    %c0_i32 = arith.constant 0 : i32
    %c0_i32_0 = arith.constant 0 : i32
    %c0_i32_1 = arith.constant 0 : i32
    return %c0_i32, %c0_i32_0 : i32, i32
  }
  func.func @transform_3(%arg0: i32, %arg1: i32) -> (i32, i32) {
    %c0_i32 = arith.constant 0 : i32
    %c0_i32_0 = arith.constant 0 : i32
    %c0_i32_1 = arith.constant 0 : i32
    return %c0_i32, %c0_i32_0 : i32, i32
  }
  func.func @transform_4(%arg0: i32, %arg1: i32) -> (i32, i32) {
    %c0_i32 = arith.constant 0 : i32
    %c0_i32_0 = arith.constant 0 : i32
    %c0_i32_1 = arith.constant 0 : i32
    return %c0_i32, %c0_i32_0 : i32, i32
  }
  func.func @transform_5(%arg0: i32, %arg1: i32) -> (i32, i32) {
    %c0_i32 = arith.constant 0 : i32
    %c0_i32_0 = arith.constant 0 : i32
    return %arg1, %c0_i32 : i32, i32
  }
  func.func @transform_6(%arg0: i32, %arg1: i32) -> (i32, i32) {
    %c0_i32 = arith.constant 0 : i32
    %c0_i32_0 = arith.constant 0 : i32
    %c0_i32_1 = arith.constant 0 : i32
    return %c0_i32, %c0_i32_0 : i32, i32
  }
  func.func @transform_7(%arg0: i32, %arg1: i32) -> (i32, i32) {
    %c0_i32 = arith.constant 0 : i32
    %c0_i32_0 = arith.constant 0 : i32
    %c0_i32_1 = arith.constant 0 : i32
    return %c0_i32, %c0_i32_0 : i32, i32
  }
  func.func @transform_8(%arg0: i32, %arg1: i32) -> (i32, i32) {
    %c0_i32 = arith.constant 0 : i32
    return %arg0, %arg1 : i32, i32
  }
  func.func @transform_9(%arg0: i32, %arg1: i32) -> (i32, i32) {
    %c0_i32 = arith.constant 0 : i32
    %c0_i32_0 = arith.constant 0 : i32
    return %arg0, %c0_i32 : i32, i32
  }
}

module attributes {stable_mosaic.version = 11 : i64} {
  func.func @tail_kernel(%arg0: i32, %arg1: memref<16x128xf32, #tpu.memory_space<vmem>>, %arg2: memref<16x128xf32, #tpu.memory_space<vmem>>, %arg3: memref<16x64xf32, #tpu.memory_space<vmem>>, %arg4: memref<128x128xbf16, #tpu.memory_space<vmem>>, %arg5: memref<1x128xf32, #tpu.memory_space<vmem>>, %arg6: memref<64x128xbf16, #tpu.memory_space<vmem>>, %arg7: memref<1x128xf32, #tpu.memory_space<vmem>>, %arg8: memref<16x128xf32, #tpu.memory_space<vmem>>) attributes {dimension_semantics = [#tpu.dimension_semantics<parallel>], iteration_bounds = array<i64: 2>, scalar_prefetch = 0 : i64, scratch_operands = 0 : i64, tpu.core_type = #tpu.core_type<tc>, window_params = [{transform_indices = @transform_0, window_bounds = array<i64: 16, 128>}, {pipeline_mode = #tpu.pipeline_mode<synchronous>, transform_indices = @transform_1, window_bounds = array<i64: 16, 128>}, {pipeline_mode = #tpu.pipeline_mode<synchronous>, transform_indices = @transform_2, window_bounds = array<i64: 16, 64>}, {transform_indices = @transform_3, window_bounds = array<i64: 128, 128>}, {transform_indices = @transform_4, window_bounds = array<i64: 1, 128>}, {transform_indices = @transform_5, window_bounds = array<i64: 64, 128>}, {transform_indices = @transform_6, window_bounds = array<i64: 1, 128>}, {transform_indices = @transform_7, window_bounds = array<i64: 16, 128>}]} {
    %c0 = arith.constant 0 : index
    %c0_0 = arith.constant 0 : index
    %0 = vector.load %arg2[%c0, %c0_0] : memref<16x128xf32, #tpu.memory_space<vmem>>, vector<16x128xf32>
    %1 = arith.truncf %0 : vector<16x128xf32> to vector<16x128xbf16>
    %c0_1 = arith.constant 0 : index
    %c0_2 = arith.constant 0 : index
    %2 = vector.load %arg4[%c0_1, %c0_2] : memref<128x128xbf16, #tpu.memory_space<vmem>>, vector<128x128xbf16>
    %cst = arith.constant dense<0.000000e+00> : vector<16x128xf32>
    %3 = tpu.matmul %1, %2, %cst {dimension_numbers = #tpu.dot_dimension_numbers<[1], [0], [0], [1], [0, 0, 1, 1], [], []>} : vector<16x128xbf16>, vector<128x128xbf16>, vector<16x128xf32> -> vector<16x128xf32>
    %c0_3 = arith.constant 0 : index
    %c0_4 = arith.constant 0 : index
    %4 = vector.load %arg5[%c0_3, %c0_4] : memref<1x128xf32, #tpu.memory_space<vmem>>, vector<1x128xf32>
    %5 = vector.broadcast %4 : vector<1x128xf32> to vector<16x128xf32>
    %6 = arith.addf %3, %5 : vector<16x128xf32>
    %c0_5 = arith.constant 0 : index
    %c0_6 = arith.constant 0 : index
    %7 = vector.load %arg3[%c0_5, %c0_6] : memref<16x64xf32, #tpu.memory_space<vmem>>, vector<16x64xf32>
    %8 = arith.truncf %7 : vector<16x64xf32> to vector<16x64xbf16>
    %c0_7 = arith.constant 0 : index
    %c0_8 = arith.constant 0 : index
    %9 = vector.load %arg6[%c0_7, %c0_8] : memref<64x128xbf16, #tpu.memory_space<vmem>>, vector<64x128xbf16>
    %cst_9 = arith.constant dense<0.000000e+00> : vector<16x128xf32>
    %10 = tpu.matmul %8, %9, %cst_9 {dimension_numbers = #tpu.dot_dimension_numbers<[1], [0], [0], [1], [0, 0, 1, 1], [], []>} : vector<16x64xbf16>, vector<64x128xbf16>, vector<16x128xf32> -> vector<16x128xf32>
    %c0_10 = arith.constant 0 : index
    %c0_11 = arith.constant 0 : index
    %11 = vector.load %arg7[%c0_10, %c0_11] : memref<1x128xf32, #tpu.memory_space<vmem>>, vector<1x128xf32>
    %12 = vector.broadcast %11 : vector<1x128xf32> to vector<16x128xf32>
    %13 = arith.addf %10, %12 : vector<16x128xf32>
    %c0_12 = arith.constant 0 : index
    %c0_13 = arith.constant 0 : index
    %14 = vector.load %arg1[%c0_12, %c0_13] : memref<16x128xf32, #tpu.memory_space<vmem>>, vector<16x128xf32>
    %15 = arith.addf %14, %6 : vector<16x128xf32>
    %cst_14 = arith.constant 0.000000e+00 : f32
    %16 = vector.broadcast %cst_14 : f32 to vector<16x128xf32>
    %17 = arith.maximumf %13, %16 : vector<16x128xf32>
    %18 = arith.addf %15, %17 : vector<16x128xf32>
    %c0_15 = arith.constant 0 : index
    %c0_16 = arith.constant 0 : index
    %19 = vector.load %arg8[%c0_15, %c0_16] : memref<16x128xf32, #tpu.memory_space<vmem>>, vector<16x128xf32>
    tpu.vector_store %arg8[%c0_15, %c0_16], %18 {strides = array<i32>} : memref<16x128xf32, #tpu.memory_space<vmem>>, vector<16x128xf32>,
    return
  }
  func.func @transform_0(%arg0: i32) -> (i32, i32) {
    %c0_i32 = arith.constant 0 : i32
    %c0_i32_0 = arith.constant 0 : i32
    return %c0_i32, %arg0 : i32, i32
  }
  func.func @transform_1(%arg0: i32) -> (i32, i32) {
    %c0_i32 = arith.constant 0 : i32
    %c0_i32_0 = arith.constant 0 : i32
    %c0_i32_1 = arith.constant 0 : i32
    return %c0_i32, %c0_i32_0 : i32, i32
  }
  func.func @transform_2(%arg0: i32) -> (i32, i32) {
    %c0_i32 = arith.constant 0 : i32
    %c0_i32_0 = arith.constant 0 : i32
    %c0_i32_1 = arith.constant 0 : i32
    return %c0_i32, %c0_i32_0 : i32, i32
  }
  func.func @transform_3(%arg0: i32) -> (i32, i32) {
    %c0_i32 = arith.constant 0 : i32
    %c0_i32_0 = arith.constant 0 : i32
    return %c0_i32, %arg0 : i32, i32
  }
  func.func @transform_4(%arg0: i32) -> (i32, i32) {
    %c0_i32 = arith.constant 0 : i32
    %c0_i32_0 = arith.constant 0 : i32
    return %c0_i32, %arg0 : i32, i32
  }
  func.func @transform_5(%arg0: i32) -> (i32, i32) {
    %c0_i32 = arith.constant 0 : i32
    %c0_i32_0 = arith.constant 0 : i32
    return %c0_i32, %arg0 : i32, i32
  }
  func.func @transform_6(%arg0: i32) -> (i32, i32) {
    %c0_i32 = arith.constant 0 : i32
    %c0_i32_0 = arith.constant 0 : i32
    return %c0_i32, %arg0 : i32, i32
  }
  func.func @transform_7(%arg0: i32) -> (i32, i32) {
    %c0_i32 = arith.constant 0 : i32
    %c0_i32_0 = arith.constant 0 : i32
    return %c0_i32, %arg0 : i32, i32
  }
}

</mosaic_0001>

<llo_original>
// kernel: finetune_vci_counts_decoder_forward.3
$region0: #{finetune_vci_counts_decoder_forward.3}
  #allocation0 [shape = 'u32[]', space=smem, size = 0x4, offset = 0x4, fixed_abs, tag = 'smem constant byte address 0x4 - core index']
  #allocation1 [shape = 'u32[144,128]{1,0:T(1,128)}', space=vmem, size = 0x12000, scoped, tag = 'internal scratch']
  %s0 = inlined_call_operand.vmem [shape: bf16[32,16], index: 0, kind: input, shape index: {}]
  %s1 = inlined_call_operand.vmem [shape: bf16[16,32], index: 1, kind: input, shape index: {}]
  %s2 = inlined_call_operand.vmem [shape: bf16[64,32], index: 2, kind: input, shape index: {}]
  %s3 = inlined_call_operand.vmem [shape: bf16[32,64], index: 3, kind: input, shape index: {}]
  %s4 = inlined_call_operand.vmem [shape: f32[1,64], index: 4, kind: input, shape index: {}]
  %s5 = inlined_call_operand.vmem [shape: f32[1,64], index: 5, kind: input, shape index: {}]
  %s6 = inlined_call_operand.vmem [shape: f32[1,64], index: 6, kind: input, shape index: {}]
  %s7 = inlined_call_operand.vmem [shape: bf16[64,64], index: 7, kind: input, shape index: {}]
  %s8 = inlined_call_operand.vmem [shape: f32[1,64], index: 8, kind: input, shape index: {}]
  %s9 = inlined_call_operand.vmem [shape: f32[1,64], index: 9, kind: input, shape index: {}]
  %s10 = inlined_call_operand.vmem [shape: f32[1,64], index: 10, kind: input, shape index: {}]
  %s11 = inlined_call_operand.vmem [shape: f32[64,16], index: 11, kind: output, shape index: {0}]
  %s12 = inlined_call_operand.vmem [shape: f32[16,64], index: 12, kind: output, shape index: {1}]
  %13 = xla_tuple %s11, %s12
  %s14 = sld [smem:[#allocation0]]
  $region62: #{finetune_vci_counts_decoder_forward.3} parent=0
    _
  %s16 = ssub.s32 1, %s14
  %s17 = scalar_select 0, %s16, %s14
  // Predicated region
  $region2: #{finetune_vci_counts_decoder_forward.3} parent=0 // pred_check
    _
  $region3: #{finetune_vci_counts_decoder_forward.3} parent=0 // pred_check_branch
    %19 = sbr.rel (0) target = $region5
  $region4: #{finetune_vci_counts_decoder_forward.3} parent=0 // pred_region
    _
  $region5: #{finetune_vci_counts_decoder_forward.3} parent=0 // pred_fallthru
    _
  // Predicated region
  $region6: #{finetune_vci_counts_decoder_forward.3} parent=0 // pred_check
    _
  $region7: #{finetune_vci_counts_decoder_forward.3} parent=0 // pred_check_branch
    %21 = sbr.rel (0) target = $region9
  $region8: #{finetune_vci_counts_decoder_forward.3} parent=0 // pred_region
    _
  $region9: #{finetune_vci_counts_decoder_forward.3} parent=0 // pred_fallthru
    _
  // Predicated region
  $region10: #{finetune_vci_counts_decoder_forward.3} parent=0 // pred_check
    _
  $region11: #{finetune_vci_counts_decoder_forward.3} parent=0 // pred_check_branch
    %23 = sbr.rel (0) target = $region13
  $region12: #{finetune_vci_counts_decoder_forward.3} parent=0 // pred_region
    _
  $region13: #{finetune_vci_counts_decoder_forward.3} parent=0 // pred_fallthru
    _
  // Predicated region
  $region14: #{finetune_vci_counts_decoder_forward.3} parent=0 // pred_check
    _
  $region15: #{finetune_vci_counts_decoder_forward.3} parent=0 // pred_check_branch
    %25 = sbr.rel (0) target = $region17
  $region16: #{finetune_vci_counts_decoder_forward.3} parent=0 // pred_region
    _
  $region17: #{finetune_vci_counts_decoder_forward.3} parent=0 // pred_fallthru
    _
  // Predicated region
  $region18: #{finetune_vci_counts_decoder_forward.3} parent=0 // pred_check
    _
  $region19: #{finetune_vci_counts_decoder_forward.3} parent=0 // pred_check_branch
    %27 = sbr.rel (0) target = $region21
  $region20: #{finetune_vci_counts_decoder_forward.3} parent=0 // pred_region
    _
  $region21: #{finetune_vci_counts_decoder_forward.3} parent=0 // pred_fallthru
    _
  // Predicated region
  $region22: #{finetune_vci_counts_decoder_forward.3} parent=0 // pred_check
    _
  $region23: #{finetune_vci_counts_decoder_forward.3} parent=0 // pred_check_branch
    %29 = sbr.rel (0) target = $region25
  $region24: #{finetune_vci_counts_decoder_forward.3} parent=0 // pred_region
    _
  $region25: #{finetune_vci_counts_decoder_forward.3} parent=0 // pred_fallthru
    _
  // Predicated region
  $region26: #{finetune_vci_counts_decoder_forward.3} parent=0 // pred_check
    _
  $region27: #{finetune_vci_counts_decoder_forward.3} parent=0 // pred_check_branch
    %31 = sbr.rel (0) target = $region29
  $region28: #{finetune_vci_counts_decoder_forward.3} parent=0 // pred_region
    _
  $region29: #{finetune_vci_counts_decoder_forward.3} parent=0 // pred_fallthru
    _
  // Predicated region
  $region30: #{finetune_vci_counts_decoder_forward.3} parent=0 // pred_check
    _
  $region31: #{finetune_vci_counts_decoder_forward.3} parent=0 // pred_check_branch
    %33 = sbr.rel (0) target = $region33
  $region32: #{finetune_vci_counts_decoder_forward.3} parent=0 // pred_region
    _
  $region33: #{finetune_vci_counts_decoder_forward.3} parent=0 // pred_fallthru
    _
  // Predicated region
  $region34: #{finetune_vci_counts_decoder_forward.3} parent=0 // pred_check
    _
  $region35: #{finetune_vci_counts_decoder_forward.3} parent=0 // pred_check_branch
    %35 = sbr.rel (0) target = $region37
  $region36: #{finetune_vci_counts_decoder_forward.3} parent=0 // pred_region
    _
  $region37: #{finetune_vci_counts_decoder_forward.3} parent=0 // pred_fallthru
    _
  // Predicated region
  $region38: #{finetune_vci_counts_decoder_forward.3} parent=0 // pred_check
    _
  $region39: #{finetune_vci_counts_decoder_forward.3} parent=0 // pred_check_branch
    %37 = sbr.rel (0) target = $region41
  $region40: #{finetune_vci_counts_decoder_forward.3} parent=0 // pred_region
    _
  $region41: #{finetune_vci_counts_decoder_forward.3} parent=0 // pred_fallthru
    _
  // Predicated region
  $region42: #{finetune_vci_counts_decoder_forward.3} parent=0 // pred_check
    _
  $region43: #{finetune_vci_counts_decoder_forward.3} parent=0 // pred_check_branch
    %39 = sbr.rel (0) target = $region45
  $region44: #{finetune_vci_counts_decoder_forward.3} parent=0 // pred_region
    _
  $region45: #{finetune_vci_counts_decoder_forward.3} parent=0 // pred_fallthru
    _
  %v41 = vld [vmem:[%s2] sm:$0xf]
  %v42 = vld [vmem:[%s2 + $0x4] sm:$0xf]
  %v43 = vld [vmem:[%s2 + $0x8] sm:$0xf]
  %v44 = vld [vmem:[%s2 + $0xc] sm:$0xf]
  %v45 = vld [vmem:[%s2 + $0x10] sm:$0xf]
  %v46 = vld [vmem:[%s2 + $0x14] sm:$0xf]
  %v47 = vld [vmem:[%s2 + $0x18] sm:$0xf]
  %v48 = vld [vmem:[%s2 + $0x1c] sm:$0xf]
  %v49 = vld [vmem:[%s0] sm:$0xf]
  %v50 = vld [vmem:[%s0 + $0x4] sm:$0xf]
  %v51 = vld [vmem:[%s0 + $0x8] sm:$0xf]
  %v52 = vld [vmem:[%s0 + $0xc] sm:$0xf]
  %v61 = vunpack.c.l.b16 %v41
  %v62 = vunpack.c.l.b16 %v42
  %v63 = vunpack.c.l.b16 %v43
  %v64 = vunpack.c.l.b16 %v44
  %v65 = vunpack.c.l.b16 %v45
  %v66 = vunpack.c.l.b16 %v46
  %v67 = vunpack.c.l.b16 %v47
  %v68 = vunpack.c.l.b16 %v48
  %v69 = vpack.c.b16 %v62, %v61
  %v70 = vpack.c.b16 %v64, %v63
  %v71 = vpack.c.b16 %v66, %v65
  %v72 = vpack.c.b16 %v68, %v67
  %v77 = vunpack.c.l.b16 %v49
  %v78 = vunpack.c.l.b16 %v50
  %v79 = vunpack.c.l.b16 %v51
  %v80 = vunpack.c.l.b16 %v52
  %v81 = vpack.c.b16 %v78, %v77
  %v82 = vpack.c.b16 %v80, %v79
  %vm85 = vcmask 261120
  %v87 = vsel %vm85, %v69, 0
  %v90 = vsel %vm85, %v70, 0
  %v93 = vsel %vm85, %v71, 0
  %v96 = vsel %vm85, %v72, 0
  %98 = vmatprep.subr.bf16.mxu0 0
  %99 = vmatpush1.bf16.msra.mxu0 %v81
  %100 = vmatprep.subr.bf16.mxu0 0
  %101 = vmatpush1.bf16.msra.mxu0 %v82
  %102 = vmatprep.subr.bf16.mxu0 0
  %103 = vmatpush1.bf16.msra.mxu0 0
  %104 = vmatprep.subr.bf16.mxu0 0
  %105 = vmatpush1.bf16.msra.mxu0 0
  %106 = vmatprep.subr.bf16.mxu0 0
  %107 = vmatpush1.bf16.msra.mxu0 0
  %108 = vmatprep.subr.bf16.mxu0 0
  %109 = vmatpush1.bf16.msra.mxu0 0
  %110 = vmatprep.subr.bf16.mxu0 0
  %111 = vmatpush1.bf16.msra.mxu0 0
  %112 = vmatprep.subr.bf16.mxu0 0
  %113 = vmatpush1.bf16.msra.mxu0 0
  %114 = vmatprep.subr.bf16.mxu0 0
  %115 = vmatpush1.bf16.msra.mxu0 0
  %116 = vmatprep.subr.bf16.mxu0 0
  %117 = vmatpush1.bf16.msra.mxu0 0
  %118 = vmatprep.subr.bf16.mxu0 0
  %119 = vmatpush1.bf16.msra.mxu0 0
  %120 = vmatprep.subr.bf16.mxu0 0
  %121 = vmatpush1.bf16.msra.mxu0 0
  %122 = vmatprep.subr.bf16.mxu0 0
  %123 = vmatpush1.bf16.msra.mxu0 0
  %124 = vmatprep.subr.bf16.mxu0 0
  %125 = vmatpush1.bf16.msra.mxu0 0
  %126 = vmatprep.subr.bf16.mxu0 0
  %127 = vmatpush1.bf16.msra.mxu0 0
  %128 = vmatprep.subr.bf16.mxu0 0
  %129 = vmatpush1.bf16.msra.mxu0 0
  %130 = vmatprep.mubr.bf16.mxu0 0
  %131 = vmatmul.mubr.bf16.gmra.mrb[0].mxu0 %v87
  %v132 = vpop.f32.mrb[0].mxu0
  %v133 = vadd.f32 0.0, %v132
  %v134 = vpop.f32.mrb[0].mxu0
  %v135 = vpop.f32.mrb[0].mxu0
  %v136 = vadd.f32 0.0, %v135
  %v137 = vpop.f32.mrb[0].mxu0
  %138 = vmatprep.mubr.bf16.mxu0 0
  %139 = vmatmul.mubr.bf16.gmra.mrb[0].mxu0 %v90
  %v140 = vpop.f32.mrb[0].mxu0
  %v141 = vadd.f32 0.0, %v140
  %v142 = vpop.f32.mrb[0].mxu0
  %v143 = vpop.f32.mrb[0].mxu0
  %v144 = vadd.f32 0.0, %v143
  %v145 = vpop.f32.mrb[0].mxu0
  %146 = vmatprep.mubr.bf16.mxu0 0
  %147 = vmatmul.mubr.bf16.gmra.mrb[0].mxu0 %v93
  %v148 = vpop.f32.mrb[0].mxu0
  %v149 = vadd.f32 0.0, %v148
  %v150 = vpop.f32.mrb[0].mxu0
  %v151 = vpop.f32.mrb[0].mxu0
  %v152 = vadd.f32 0.0, %v151
  %v153 = vpop.f32.mrb[0].mxu0
  %154 = vmatprep.mubr.bf16.mxu0 0
  %155 = vmatmul.mubr.bf16.gmra.mrb[0].mxu0 %v96
  %v156 = vpop.f32.mrb[0].mxu0
  %v157 = vadd.f32 0.0, %v156
  %v158 = vpop.f32.mrb[0].mxu0
  %v159 = vpop.f32.mrb[0].mxu0
  %v160 = vadd.f32 0.0, %v159
  %v161 = vpop.f32.mrb[0].mxu0
  %162 = vdwg.mxu0
  %vm163 = vcmask 130048
  %164 = vst.msk [vmem:[%s11] sm:$0xff] %vm163, %v133
  %165 = vst.msk [vmem:[%s11 + $0x8] sm:$0xff] %vm163, %v136
  %166 = vst.msk [vmem:[%s11 + $0x10] sm:$0xff] %vm163, %v141
  %167 = vst.msk [vmem:[%s11 + $0x18] sm:$0xff] %vm163, %v144
  %168 = vst.msk [vmem:[%s11 + $0x20] sm:$0xff] %vm163, %v149
  %169 = vst.msk [vmem:[%s11 + $0x28] sm:$0xff] %vm163, %v152
  %170 = vst.msk [vmem:[%s11 + $0x30] sm:$0xff] %vm163, %v157
  %171 = vst.msk [vmem:[%s11 + $0x38] sm:$0xff] %vm163, %v160
  %v172 = vld [vmem:[%s1] sm:$0xf]
  %v173 = vld [vmem:[%s1 + $0x4] sm:$0xf]
  %v174 = vld [vmem:[%s3] sm:$0xf]
  %v175 = vld [vmem:[%s3 + $0x4] sm:$0xf]
  %v176 = vld [vmem:[%s3 + $0x8] sm:$0xf]
  %v177 = vld [vmem:[%s3 + $0xc] sm:$0xf]
  %v178 = vld [vmem:[%s4] sm:$0x1]
  %v180 = vlaneseq
  %v181 = vshrl.u32 %v180, 7
  %v182 = vsub.s32 0, %v181
  %v183 = vrot.slane %v178, %v182
  %v187 = vunpack.c.l.b16 %v172
  %v188 = vunpack.c.l.b16 %v173
  %v189 = vpack.c.b16 %v188, %v187
  %v194 = vunpack.c.l.b16 %v174
  %v195 = vunpack.c.l.b16 %v175
  %v196 = vunpack.c.l.b16 %v176
  %v197 = vunpack.c.l.b16 %v177
  %v198 = vpack.c.b16 %v195, %v194
  %v199 = vpack.c.b16 %v197, %v196
  %v203 = vsel %vm85, %v189, 0
  %205 = vmatprep.subr.bf16.mxu0 0
  %206 = vmatpush1.bf16.msra.mxu0 %v198
  %207 = vmatprep.subr.bf16.mxu0 0
  %208 = vmatpush1.bf16.msra.mxu0 %v199
  %209 = vmatprep.subr.bf16.mxu0 0
  %210 = vmatpush1.bf16.msra.mxu0 0
  %211 = vmatprep.subr.bf16.mxu0 0
  %212 = vmatpush1.bf16.msra.mxu0 0
  %213 = vmatprep.subr.bf16.mxu0 0
  %214 = vmatpush1.bf16.msra.mxu0 0
  %215 = vmatprep.subr.bf16.mxu0 0
  %216 = vmatpush1.bf16.msra.mxu0 0
  %217 = vmatprep.subr.bf16.mxu0 0
  %218 = vmatpush1.bf16.msra.mxu0 0
  %219 = vmatprep.subr.bf16.mxu0 0
  %220 = vmatpush1.bf16.msra.mxu0 0
  %221 = vmatprep.subr.bf16.mxu0 0
  %222 = vmatpush1.bf16.msra.mxu0 0
  %223 = vmatprep.subr.bf16.mxu0 0
  %224 = vmatpush1.bf16.msra.mxu0 0
  %225 = vmatprep.subr.bf16.mxu0 0
  %226 = vmatpush1.bf16.msra.mxu0 0
  %227 = vmatprep.subr.bf16.mxu0 0
  %228 = vmatpush1.bf16.msra.mxu0 0
  %229 = vmatprep.subr.bf16.mxu0 0
  %230 = vmatpush1.bf16.msra.mxu0 0
  %231 = vmatprep.subr.bf16.mxu0 0
  %232 = vmatpush1.bf16.msra.mxu0 0
  %233 = vmatprep.subr.bf16.mxu0 0
  %234 = vmatpush1.bf16.msra.mxu0 0
  %235 = vmatprep.subr.bf16.mxu0 0
  %236 = vmatpush1.bf16.msra.mxu0 0
  %237 = vmatprep.mubr.bf16.mxu0 0
  %238 = vmatmul.mubr.bf16.gmra.mrb[0].mxu0 %v203
  %v239 = vpop.f32.mrb[0].mxu0
  %v240 = vadd.f32 %v183, %v239
  %v241 = vpop.f32.mrb[0].mxu0
  %v242 = vpop.f32.mrb[0].mxu0
  %v243 = vadd.f32 %v183, %v242
  %v244 = vpop.f32.mrb[0].mxu0
  %245 = vdwg.mxu0
  %v246 = vld [vmem:[%s5] sm:$0x1]
  %v247 = vld [vmem:[%s6] sm:$0x1]
  %vm248 = vcmask 523264
  %v249 = vsel %vm248, %v240, 0.0
  %250 = vadd.xlane.f32.xlu0 %v249
  %v251 = vpop.xlane.xlu0 %250
  %v252 = vsel %vm248, %v243, 0.0
  %253 = vadd.xlane.f32.xlu0 %v252
  %v254 = vpop.xlane.xlu0 %253
  %v255 = vrcp.pop 64.0
  %v256 = vmul.f32 %v251, %v255
  %v257 = vmul.f32 %v254, %v255
  %v258 = vsub.f32 %v240, %v256
  %v259 = vsub.f32 %v243, %v257
  %v260 = vmul.f32 %v258, %v258
  %v261 = vmul.f32 %v259, %v259
  %v262 = vsel %vm248, %v260, 0.0
  %263 = vadd.xlane.f32.xlu0 %v262
  %v264 = vpop.xlane.xlu0 %263
  %v265 = vsel %vm248, %v261, 0.0
  %266 = vadd.xlane.f32.xlu0 %v265
  %v267 = vpop.xlane.xlu0 %266
  %v268 = vmul.f32 %v264, %v255
  %v269 = vmul.f32 %v267, %v255
  %v270 = vadd.f32 %v268, 1e-05
  %v271 = vadd.f32 %v269, 1e-05
  %v272 = vrsqrt.pop %v270
  %v273 = vrsqrt.pop %v271
  %v274 = vmul.f32 %v258, %v272
  %v275 = vmul.f32 %v259, %v273
  %v277 = vlaneseq
  %v278 = vshrl.u32 %v277, 7
  %v279 = vsub.s32 0, %v278
  %v280 = vrot.slane %v246, %v279
  %v282 = vmul.f32 %v274, %v280
  %v283 = vmul.f32 %v275, %v280
  %v285 = vlaneseq
  %v286 = vshrl.u32 %v285, 7
  %v287 = vsub.s32 0, %v286
  %v288 = vrot.slane %v247, %v287
  %v290 = vadd.f32 %v282, %v288
  %v291 = vadd.f32 %v283, %v288
  %v292 = vmul.f32 %v290, 0.5
  %v293 = vmul.f32 %v291, 0.5
  %v294 = vmul.f32 %v290, 0.044715
  %v295 = vmul.f32 %v291, 0.044715
  %v296 = vmul.f32 %v294, %v290
  %v297 = vmul.f32 %v295, %v291
  %v298 = vmul.f32 %v296, %v290
  %v299 = vmul.f32 %v297, %v291
  %v300 = vadd.f32 %v290, %v298
  %v301 = vadd.f32 %v291, %v299
  %v302 = vmul.f32 %v300, 0.7978846
  %v303 = vmul.f32 %v301, 0.7978846
  %v304 = vtanh.pop %v302
  %v305 = vtanh.pop %v303
  %v306 = vadd.f32 %v304, 1.0
  %v307 = vadd.f32 %v305, 1.0
  %v308 = vmul.f32 %v292, %v306
  %v309 = vmul.f32 %v293, %v307
  %v310 = vpack.c.bf16 %v309, %v308
  %v311 = vld [vmem:[%s7] sm:$0xf]
  %v312 = vld [vmem:[%s7 + $0x4] sm:$0xf]
  %v313 = vld [vmem:[%s7 + $0x8] sm:$0xf]
  %v314 = vld [vmem:[%s7 + $0xc] sm:$0xf]
  %v315 = vld [vmem:[%s7 + $0x10] sm:$0xf]
  %v316 = vld [vmem:[%s7 + $0x14] sm:$0xf]
  %v317 = vld [vmem:[%s7 + $0x18] sm:$0xf]
  %v318 = vld [vmem:[%s7 + $0x1c] sm:$0xf]
  %v319 = vld [vmem:[%s8] sm:$0x1]
  %v321 = vlaneseq
  %v322 = vshrl.u32 %v321, 7
  %v323 = vsub.s32 0, %v322
  %v324 = vrot.slane %v319, %v323
  %v334 = vunpack.c.l.b16 %v311
  %v335 = vunpack.c.l.b16 %v312
  %v336 = vunpack.c.l.b16 %v313
  %v337 = vunpack.c.l.b16 %v314
  %v338 = vunpack.c.l.b16 %v315
  %v339 = vunpack.c.l.b16 %v316
  %v340 = vunpack.c.l.b16 %v317
  %v341 = vunpack.c.l.b16 %v318
  %v342 = vpack.c.b16 %v335, %v334
  %v343 = vpack.c.b16 %v337, %v336
  %v344 = vpack.c.b16 %v339, %v338
  %v345 = vpack.c.b16 %v341, %v340
  %v351 = vsel %vm248, %v310, 0
  %353 = vmatprep.subr.bf16.mxu0 0
  %354 = vmatpush1.bf16.msra.mxu0 %v342
  %355 = vmatprep.subr.bf16.mxu0 0
  %356 = vmatpush1.bf16.msra.mxu0 %v343
  %357 = vmatprep.subr.bf16.mxu0 0
  %358 = vmatpush1.bf16.msra.mxu0 %v344
  %359 = vmatprep.subr.bf16.mxu0 0
  %360 = vmatpush1.bf16.msra.mxu0 %v345
  %361 = vmatprep.subr.bf16.mxu0 0
  %362 = vmatpush1.bf16.msra.mxu0 0
  %363 = vmatprep.subr.bf16.mxu0 0
  %364 = vmatpush1.bf16.msra.mxu0 0
  %365 = vmatprep.subr.bf16.mxu0 0
  %366 = vmatpush1.bf16.msra.mxu0 0
  %367 = vmatprep.subr.bf16.mxu0 0
  %368 = vmatpush1.bf16.msra.mxu0 0
  %369 = vmatprep.subr.bf16.mxu0 0
  %370 = vmatpush1.bf16.msra.mxu0 0
  %371 = vmatprep.subr.bf16.mxu0 0
  %372 = vmatpush1.bf16.msra.mxu0 0
  %373 = vmatprep.subr.bf16.mxu0 0
  %374 = vmatpush1.bf16.msra.mxu0 0
  %375 = vmatprep.subr.bf16.mxu0 0
  %376 = vmatpush1.bf16.msra.mxu0 0
  %377 = vmatprep.subr.bf16.mxu0 0
  %378 = vmatpush1.bf16.msra.mxu0 0
  %379 = vmatprep.subr.bf16.mxu0 0
  %380 = vmatpush1.bf16.msra.mxu0 0
  %381 = vmatprep.subr.bf16.mxu0 0
  %382 = vmatpush1.bf16.msra.mxu0 0
  %383 = vmatprep.subr.bf16.mxu0 0
  %384 = vmatpush1.bf16.msra.mxu0 0
  %385 = vmatprep.mubr.bf16.mxu0 0
  %386 = vmatmul.mubr.bf16.gmra.mrb[0].mxu0 %v351
  %v387 = vpop.f32.mrb[0].mxu0
  %v388 = vadd.f32 %v324, %v387
  %v389 = vpop.f32.mrb[0].mxu0
  %v390 = vpop.f32.mrb[0].mxu0
  %v391 = vadd.f32 %v324, %v390
  %v392 = vpop.f32.mrb[0].mxu0
  %393 = vdwg.mxu0
  %v394 = vld [vmem:[%s9] sm:$0x1]
  %v395 = vld [vmem:[%s10] sm:$0x1]
  %v396 = vsel %vm248, %v388, 0.0
  %397 = vadd.xlane.f32.xlu0 %v396
  %v398 = vpop.xlane.xlu0 %397
  %v399 = vsel %vm248, %v391, 0.0
  %400 = vadd.xlane.f32.xlu0 %v399
  %v401 = vpop.xlane.xlu0 %400
  %v402 = vmul.f32 %v398, %v255
  %v403 = vmul.f32 %v401, %v255
  %v404 = vsub.f32 %v388, %v402
  %v405 = vsub.f32 %v391, %v403
  %v406 = vmul.f32 %v404, %v404
  %v407 = vmul.f32 %v405, %v405
  %v408 = vsel %vm248, %v406, 0.0
  %409 = vadd.xlane.f32.xlu0 %v408
  %v410 = vpop.xlane.xlu0 %409
  %v411 = vsel %vm248, %v407, 0.0
  %412 = vadd.xlane.f32.xlu0 %v411
  %v413 = vpop.xlane.xlu0 %412
  %v414 = vmul.f32 %v410, %v255
  %v415 = vmul.f32 %v413, %v255
  %v416 = vadd.f32 %v414, 1e-05
  %v417 = vadd.f32 %v415, 1e-05
  %v418 = vrsqrt.pop %v416
  %v419 = vrsqrt.pop %v417
  %v420 = vmul.f32 %v404, %v418
  %v421 = vmul.f32 %v405, %v419
  %v423 = vlaneseq
  %v424 = vshrl.u32 %v423, 7
  %v425 = vsub.s32 0, %v424
  %v426 = vrot.slane %v394, %v425
  %v428 = vmul.f32 %v420, %v426
  %v429 = vmul.f32 %v421, %v426
  %v431 = vlaneseq
  %v432 = vshrl.u32 %v431, 7
  %v433 = vsub.s32 0, %v432
  %v434 = vrot.slane %v395, %v433
  %v436 = vadd.f32 %v428, %v434
  %v437 = vadd.f32 %v429, %v434
  %v438 = vmul.f32 %v436, 0.5
  %v439 = vmul.f32 %v437, 0.5
  %v440 = vmul.f32 %v436, 0.044715
  %v441 = vmul.f32 %v437, 0.044715
  %v442 = vmul.f32 %v440, %v436
  %v443 = vmul.f32 %v441, %v437
  %v444 = vmul.f32 %v442, %v436
  %v445 = vmul.f32 %v443, %v437
  %v446 = vadd.f32 %v436, %v444
  %v447 = vadd.f32 %v437, %v445
  %v448 = vmul.f32 %v446, 0.7978846
  %v449 = vmul.f32 %v447, 0.7978846
  %v450 = vtanh.pop %v448
  %v451 = vtanh.pop %v449
  %v452 = vadd.f32 %v450, 1.0
  %v453 = vadd.f32 %v451, 1.0
  %v454 = vmul.f32 %v438, %v452
  %v455 = vmul.f32 %v439, %v453
  %456 = vst.msk [vmem:[%s12] sm:$0xff] %vm248, %v454
  %457 = vst.msk [vmem:[%s12 + $0x8] sm:$0xff] %vm248, %v455
  // Predicated region
  $region46: #{finetune_vci_counts_decoder_forward.3} parent=0 // pred_check
    _
  $region47: #{finetune_vci_counts_decoder_forward.3} parent=0 // pred_check_branch
    %459 = sbr.rel (0) target = $region49
  $region48: #{finetune_vci_counts_decoder_forward.3} parent=0 // pred_region
    _
  $region49: #{finetune_vci_counts_decoder_forward.3} parent=0 // pred_fallthru
    _
  // Predicated region
  $region50: #{finetune_vci_counts_decoder_forward.3} parent=0 // pred_check
    _
  $region51: #{finetune_vci_counts_decoder_forward.3} parent=0 // pred_check_branch
    %461 = sbr.rel (0) target = $region53
  $region52: #{finetune_vci_counts_decoder_forward.3} parent=0 // pred_region
    _
  $region53: #{finetune_vci_counts_decoder_forward.3} parent=0 // pred_fallthru
    _
  // Predicated region
  $region54: #{finetune_vci_counts_decoder_forward.3} parent=0 // pred_check
    _
  $region55: #{finetune_vci_counts_decoder_forward.3} parent=0 // pred_check_branch
    %463 = sbr.rel (0) target = $region57
  $region56: #{finetune_vci_counts_decoder_forward.3} parent=0 // pred_region
    _
  $region57: #{finetune_vci_counts_decoder_forward.3} parent=0 // pred_fallthru
    _
  // Predicated region
  $region58: #{finetune_vci_counts_decoder_forward.3} parent=0 // pred_check
    _
  $region59: #{finetune_vci_counts_decoder_forward.3} parent=0 // pred_check_branch
    %465 = sbr.rel (0) target = $region61
  $region60: #{finetune_vci_counts_decoder_forward.3} parent=0 // pred_region
    _
  $region61: #{finetune_vci_counts_decoder_forward.3} parent=0 // pred_fallthru
    _

// kernel: finetune_vci_counts_decoder_forward.5
$region0: #{finetune_vci_counts_decoder_forward.5}
  #allocation0 [shape = 'u32[]', space=smem, size = 0x4, offset = 0x4, fixed_abs, tag = 'smem constant byte address 0x4 - core index']
  #allocation1 [shape = 'u32[144,128]{1,0:T(1,128)}', space=vmem, size = 0x12000, scoped, tag = 'internal scratch']
  %s0 = inlined_call_operand.vmem [shape: f32[16,256], index: 0, kind: input, shape index: {}]
  %s1 = inlined_call_operand.vmem [shape: f32[16,128], index: 1, kind: input, shape index: {}]
  %s2 = inlined_call_operand.vmem [shape: f32[16,64], index: 2, kind: input, shape index: {}]
  %s3 = inlined_call_operand.vmem [shape: bf16[128,256], index: 3, kind: input, shape index: {}]
  %s4 = inlined_call_operand.vmem [shape: f32[1,256], index: 4, kind: input, shape index: {}]
  %s5 = inlined_call_operand.vmem [shape: bf16[64,256], index: 5, kind: input, shape index: {}]
  %s6 = inlined_call_operand.vmem [shape: f32[1,256], index: 6, kind: input, shape index: {}]
  %s7 = inlined_call_operand.hbm [shape: f32[16,256], index: 7, kind: output, shape index: {}]
  %s8 = sld [smem:[#allocation0]]
  $region181: #{finetune_vci_counts_decoder_forward.5} parent=0
    _
  %s10 = ssub.s32 1, %s8
  %s11 = scalar_select 0, %s10, %s8
  $region1: #{finetune_vci_counts_decoder_forward.5} parent=0
    #allocation2 [shape = 'u8[16384]{0}', space=vmem, size = 0x4000, scoped, tag = 'input window, operand 0']
    #allocation3 [shape = 'u8[65536]{0}', space=vmem, size = 0x10000, scoped, tag = 'input window, operand 3']
    #allocation4 [shape = 'u8[32768]{0}', space=vmem, size = 0x8000, scoped, tag = 'input window, operand 5']
    #allocation5 [shape = 'u8[16384]{0}', space=vmem, size = 0x4000, scoped, tag = 'output window, operand 0']
    #allocation6 [shape = 's32[2]{0}', space=sflag, size = 0x8, scoped, tag = 'scoped memory for finetune_vci_counts_decoder_forward.5']
    %12 = vsyncpa [#allocation6], 0
    %s13 = scalar_lea.sflag [#allocation6], 1
    %14 = vsyncpa %s13, 0
    loop: start=0, step=1, limit=4
    $region2: #{finetune_vci_counts_decoder_forward.5} parent=1 // loop_pre_header
      _
    $region3: #{finetune_vci_counts_decoder_forward.5} parent=1 // loop_header
      %s16 = sphi 0, %s20
      %p17 = scmp.ge.s32.totalorder %s16, 4
      %s26 = sphi 0, %s28
      %s29 = sphi 0, %s26
      %s30 = sphi 0, %s29
      %s46 = sphi 0, %s30
      %s50 = sphi 0, %s50
      %s52 = sphi 0, %s50
      %s53 = sphi 0, %s52
      %s67 = sphi 0, %s53
      %s71 = sphi 0, %s71
      %s73 = sphi 0, %s71
      %s74 = sphi 0, %s73
      %s88 = sphi 0, %s74
      %s94 = sphi 0, %s96
      %s97 = sphi 0, %s94
      %s98 = sphi 0, %s97
      %s114 = sphi 0, %s98
      %s120 = sphi 0, %s122
      %s123 = sphi 0, %s120
      %s124 = sphi 0, %s123
      %s140 = sphi 0, %s124
      %s146 = sphi 0, %s148
      %s149 = sphi 0, %s146
      %s150 = sphi 0, %s149
      %s166 = sphi 0, %s150
      %s172 = sphi 0, %s174
      %s175 = sphi 0, %s172
      %s176 = sphi 0, %s175
      %s192 = sphi 0, %s176
      %s198 = sphi 0, %s200
      %s201 = sphi 0, %s198
      %s202 = sphi 0, %s201
      %s218 = sphi 0, %s202
    $region4: #{finetune_vci_counts_decoder_forward.5} parent=1 // loop_header_branch
      %19 = sbr.rel (%p17) target = $region8
    $region5: #{finetune_vci_counts_decoder_forward.5} parent=1 // loop_body
      %s21 = ssub.s32 %s16, 1
      %s22 = ssub.s32 %s16, 2
      %s23 = sadd.s32 %s16, 1
      %s24 = ssub.s32 %s16, %s23
      %p25 = scmp.eq.s32.totalorder %s24, 0
      %s27 = sadd.s32 %s26, 1
      %s28 = scalar_select %p25, %s26, %s27
      %p31 = pneg %p25
      %p32 = scmp.eq.s32.totalorder %s16, 1
      %p33 = por %p31, %p32
      %p34 = scmp.ne.s32.totalorder %s26, %s29
      %p35 = scmp.eq.s32.totalorder %s16, 0
      %p36 = por %p34, %p35
      %p37 = scmp.ne.s32.totalorder %s26, %s29
      %p38 = scmp.eq.s32.totalorder %s21, 1
      %p39 = por %p37, %p38
      %p40 = scmp.ne.s32.totalorder %s29, %s30
      %p41 = scmp.eq.s32.totalorder %s21, 0
      %p42 = por %p40, %p41
      %p43 = scmp.ne.s32.totalorder %s29, %s30
      %p44 = scmp.eq.s32.totalorder %s22, 1
      %p45 = por %p43, %p44
      %p47 = scmp.ne.s32.totalorder %s30, %s46
      %p48 = scmp.eq.s32.totalorder %s22, 0
      %p49 = por %p47, %p48
      %s51 = sadd.s32 %s50, 1
      %p54 = scmp.eq.s32.totalorder %s16, 1
      %p55 = scmp.ne.s32.totalorder %s50, %s52
      %p56 = scmp.eq.s32.totalorder %s16, 0
      %p57 = por %p55, %p56
      %p58 = scmp.ne.s32.totalorder %s50, %s52
      %p59 = scmp.eq.s32.totalorder %s21, 1
      %p60 = por %p58, %p59
      %p61 = scmp.ne.s32.totalorder %s52, %s53
      %p62 = scmp.eq.s32.totalorder %s21, 0
      %p63 = por %p61, %p62
      %p64 = scmp.ne.s32.totalorder %s52, %s53
      %p65 = scmp.eq.s32.totalorder %s22, 1
      %p66 = por %p64, %p65
      %p68 = scmp.ne.s32.totalorder %s53, %s67
      %p69 = scmp.eq.s32.totalorder %s22, 0
      %p70 = por %p68, %p69
      %s72 = sadd.s32 %s71, 1
      %p75 = scmp.eq.s32.totalorder %s16, 1
      %p76 = scmp.ne.s32.totalorder %s71, %s73
      %p77 = scmp.eq.s32.totalorder %s16, 0
      %p78 = por %p76, %p77
      %p79 = scmp.ne.s32.totalorder %s71, %s73
      %p80 = scmp.eq.s32.totalorder %s21, 1
      %p81 = por %p79, %p80
      %p82 = scmp.ne.s32.totalorder %s73, %s74
      %p83 = scmp.eq.s32.totalorder %s21, 0
      %p84 = por %p82, %p83
      %p85 = scmp.ne.s32.totalorder %s73, %s74
      %p86 = scmp.eq.s32.totalorder %s22, 1
      %p87 = por %p85, %p86
      %p89 = scmp.ne.s32.totalorder %s74, %s88
      %p90 = scmp.eq.s32.totalorder %s22, 0
      %p91 = por %p89, %p90
      %s92 = ssub.s32 %s16, %s23
      %p93 = scmp.eq.s32.totalorder %s92, 0
      %s95 = sadd.s32 %s94, 1
      %s96 = scalar_select %p93, %s94, %s95
      %p99 = pneg %p93
      %p100 = scmp.eq.s32.totalorder %s16, 1
      %p101 = por %p99, %p100
      %p102 = scmp.ne.s32.totalorder %s94, %s97
      %p103 = scmp.eq.s32.totalorder %s16, 0
      %p104 = por %p102, %p103
      %p105 = scmp.ne.s32.totalorder %s94, %s97
      %p106 = scmp.eq.s32.totalorder %s21, 1
      %p107 = por %p105, %p106
      %p108 = scmp.ne.s32.totalorder %s97, %s98
      %p109 = scmp.eq.s32.totalorder %s21, 0
      %p110 = por %p108, %p109
      %p111 = scmp.ne.s32.totalorder %s97, %s98
      %p112 = scmp.eq.s32.totalorder %s22, 1
      %p113 = por %p111, %p112
      %p115 = scmp.ne.s32.totalorder %s98, %s114
      %p116 = scmp.eq.s32.totalorder %s22, 0
      %p117 = por %p115, %p116
      %s118 = ssub.s32 %s16, %s23
      %p119 = scmp.eq.s32.totalorder %s118, 0
      %s121 = sadd.s32 %s120, 1
      %s122 = scalar_select %p119, %s120, %s121
      %p125 = pneg %p119
      %p126 = scmp.eq.s32.totalorder %s16, 1
      %p127 = por %p125, %p126
      %p128 = scmp.ne.s32.totalorder %s120, %s123
      %p129 = scmp.eq.s32.totalorder %s16, 0
      %p130 = por %p128, %p129
      %p131 = scmp.ne.s32.totalorder %s120, %s123
      %p132 = scmp.eq.s32.totalorder %s21, 1
      %p133 = por %p131, %p132
      %p134 = scmp.ne.s32.totalorder %s123, %s124
      %p135 = scmp.eq.s32.totalorder %s21, 0
      %p136 = por %p134, %p135
      %p137 = scmp.ne.s32.totalorder %s123, %s124
      %p138 = scmp.eq.s32.totalorder %s22, 1
      %p139 = por %p137, %p138
      %p141 = scmp.ne.s32.totalorder %s124, %s140
      %p142 = scmp.eq.s32.totalorder %s22, 0
      %p143 = por %p141, %p142
      %s144 = ssub.s32 %s16, %s23
      %p145 = scmp.eq.s32.totalorder %s144, 0
      %s147 = sadd.s32 %s146, 1
      %s148 = scalar_select %p145, %s146, %s147
      %p151 = pneg %p145
      %p152 = scmp.eq.s32.totalorder %s16, 1
      %p153 = por %p151, %p152
      %p154 = scmp.ne.s32.totalorder %s146, %s149
      %p155 = scmp.eq.s32.totalorder %s16, 0
      %p156 = por %p154, %p155
      %p157 = scmp.ne.s32.totalorder %s146, %s149
      %p158 = scmp.eq.s32.totalorder %s21, 1
      %p159 = por %p157, %p158
      %p160 = scmp.ne.s32.totalorder %s149, %s150
      %p161 = scmp.eq.s32.totalorder %s21, 0
      %p162 = por %p160, %p161
      %p163 = scmp.ne.s32.totalorder %s149, %s150
      %p164 = scmp.eq.s32.totalorder %s22, 1
      %p165 = por %p163, %p164
      %p167 = scmp.ne.s32.totalorder %s150, %s166
      %p168 = scmp.eq.s32.totalorder %s22, 0
      %p169 = por %p167, %p168
      %s170 = ssub.s32 %s16, %s23
      %p171 = scmp.eq.s32.totalorder %s170, 0
      %s173 = sadd.s32 %s172, 1
      %s174 = scalar_select %p171, %s172, %s173
      %p177 = pneg %p171
      %p178 = scmp.eq.s32.totalorder %s16, 1
      %p179 = por %p177, %p178
      %p180 = scmp.ne.s32.totalorder %s172, %s175
      %p181 = scmp.eq.s32.totalorder %s16, 0
      %p182 = por %p180, %p181
      %p183 = scmp.ne.s32.totalorder %s172, %s175
      %p184 = scmp.eq.s32.totalorder %s21, 1
      %p185 = por %p183, %p184
      %p186 = scmp.ne.s32.totalorder %s175, %s176
      %p187 = scmp.eq.s32.totalorder %s21, 0
      %p188 = por %p186, %p187
      %p189 = scmp.ne.s32.totalorder %s175, %s176
      %p190 = scmp.eq.s32.totalorder %s22, 1
      %p191 = por %p189, %p190
      %p193 = scmp.ne.s32.totalorder %s176, %s192
      %p194 = scmp.eq.s32.totalorder %s22, 0
      %p195 = por %p193, %p194
      %s196 = ssub.s32 %s16, %s23
      %p197 = scmp.eq.s32.totalorder %s196, 0
      %s199 = sadd.s32 %s198, 1
      %s200 = scalar_select %p197, %s198, %s199
      %p203 = pneg %p197
      %p204 = scmp.eq.s32.totalorder %s16, 1
      %p205 = por %p203, %p204
      %p206 = scmp.ne.s32.totalorder %s198, %s201
      %p207 = scmp.eq.s32.totalorder %s16, 0
      %p208 = por %p206, %p207
      %p209 = scmp.ne.s32.totalorder %s198, %s201
      %p210 = scmp.eq.s32.totalorder %s21, 1
      %p211 = por %p209, %p210
      %p212 = scmp.ne.s32.totalorder %s201, %s202
      %p213 = scmp.eq.s32.totalorder %s21, 0
      %p214 = por %p212, %p213
      %p215 = scmp.ne.s32.totalorder %s201, %s202
      %p216 = scmp.eq.s32.totalorder %s22, 1
      %p217 = por %p215, %p216
      %p219 = scmp.ne.s32.totalorder %s202, %s218
      %p220 = scmp.eq.s32.totalorder %s22, 0
      %p221 = por %p219, %p220
      %p222 = scmp.le.s32.totalorder 1, %s16
      %p223 = scmp.lt.s32.totalorder %s16, 3
      %p224 = pnand %p222, %p223
      %p225 = pneg %p224
      // Predicated region
      $region9: #{finetune_vci_counts_decoder_forward.5} parent=5 // pred_check
        _
      $region10: #{finetune_vci_counts_decoder_forward.5} parent=5 // pred_check_branch
        %227 = sbr.rel (%p224) target = $region12
      $region11: #{finetune_vci_counts_decoder_forward.5} parent=5 // pred_region
        %s228 = ssub.s32 %s16, 1
        // Predicated region
        $region13: #{finetune_vci_counts_decoder_forward.5} parent=11 // pred_check
          %p229 = pneg %p63
        $region14: #{finetune_vci_counts_decoder_forward.5} parent=11 // pred_check_branch
          %231 = sbr.rel (%p229) target = $region16
        $region15: #{finetune_vci_counts_decoder_forward.5} parent=11 // pred_region
          _
        $region16: #{finetune_vci_counts_decoder_forward.5} parent=11 // pred_fallthru
          _
        // Predicated region
        $region17: #{finetune_vci_counts_decoder_forward.5} parent=11 // pred_check
          %p232 = pneg %p84
        $region18: #{finetune_vci_counts_decoder_forward.5} parent=11 // pred_check_branch
          %234 = sbr.rel (%p232) target = $region20
        $region19: #{finetune_vci_counts_decoder_forward.5} parent=11 // pred_region
          _
        $region20: #{finetune_vci_counts_decoder_forward.5} parent=11 // pred_fallthru
          _
      $region12: #{finetune_vci_counts_decoder_forward.5} parent=5 // pred_fallthru
        _
      %p235 = scmp.lt.s32.totalorder %s16, 2
      // Predicated region
      $region21: #{finetune_vci_counts_decoder_forward.5} parent=5 // pred_check
        %p236 = pneg %p235
      $region22: #{finetune_vci_counts_decoder_forward.5} parent=5 // pred_check_branch
        %238 = sbr.rel (%p236) target = $region24
      $region23: #{finetune_vci_counts_decoder_forward.5} parent=5 // pred_region
        // Predicated region
        $region25: #{finetune_vci_counts_decoder_forward.5} parent=23 // pred_check
          %p239 = pneg %p36
        $region26: #{finetune_vci_counts_decoder_forward.5} parent=23 // pred_check_branch
          %241 = sbr.rel (%p239) target = $region28
        $region27: #{finetune_vci_counts_decoder_forward.5} parent=23 // pred_region
          %s242 = sand.u32 %s26, 1
          %s243 = sand.u32 %s26, 1
          %s244 = smul.addr %s243, 16
          %s245 = scalar_lea.vmem [#allocation2], %s244
          %s246 = smul.addr %s16, 8
          %s247 = scalar_lea.vmem %s0, %s246
          // Predicated region
          $region29: #{finetune_vci_counts_decoder_forward.5} parent=27 // pred_check
            _
          $region30: #{finetune_vci_counts_decoder_forward.5} parent=27 // pred_check_branch
            %249 = sbr.rel (0) target = $region32
          $region31: #{finetune_vci_counts_decoder_forward.5} parent=27 // pred_region
            // Predicated region
            $region33: #{finetune_vci_counts_decoder_forward.5} parent=31 // pred_check
              _
            $region34: #{finetune_vci_counts_decoder_forward.5} parent=31 // pred_check_branch
              %251 = sbr.rel (0) target = $region36
            $region35: #{finetune_vci_counts_decoder_forward.5} parent=31 // pred_region
              // Predicated region
              $region48: #{finetune_vci_counts_decoder_forward.5} parent=35 // pred_check
                _
              $region49: #{finetune_vci_counts_decoder_forward.5} parent=35 // pred_check_branch
                %268 = sbr.rel (0) target = $region51
              $region50: #{finetune_vci_counts_decoder_forward.5} parent=35 // pred_region
                loop: start=0, step=1, limit=1
                $region52: #{finetune_vci_counts_decoder_forward.5} parent=50 // loop_pre_header
                  _
                $region53: #{finetune_vci_counts_decoder_forward.5} parent=50 // loop_header
                  %s270 = sphi 0, %s274
                  %p271 = scmp.ge.s32.totalorder %s270, 1
                  %s275 = sphi %s247, %s247
                  %s276 = sphi %s245, %s245
                $region54: #{finetune_vci_counts_decoder_forward.5} parent=50 // loop_header_branch
                  %273 = sbr.rel (%p271) target = $region58
                $region55: #{finetune_vci_counts_decoder_forward.5} parent=50 // loop_body
                  %v277 = vld [vmem:[%s275] sm:$0xff]
                  %278 = vst [vmem:[%s276] sm:$0xff] %v277
                  %v279 = vld [vmem:[%s275 + $0x10] sm:$0xff]
                  %280 = vst [vmem:[%s276 + $0x8] sm:$0xff] %v279
                $region56: #{finetune_vci_counts_decoder_forward.5} parent=50 // loop_footer
                  %s274 = sadd.s32 1, %s270
                $region57: #{finetune_vci_counts_decoder_forward.5} parent=50 // loop_footer_branch
                  %269 = sbr.rel target = $region53
                $region58: #{finetune_vci_counts_decoder_forward.5} parent=50 // loop_exit
                  _
              $region51: #{finetune_vci_counts_decoder_forward.5} parent=35 // pred_fallthru
                _
              // Predicated region
              $region59: #{finetune_vci_counts_decoder_forward.5} parent=35 // pred_check
                _
              $region60: #{finetune_vci_counts_decoder_forward.5} parent=35 // pred_check_branch
                %282 = sbr.rel target = $region62
              $region61: #{finetune_vci_counts_decoder_forward.5} parent=35 // pred_region
                _
              $region62: #{finetune_vci_counts_decoder_forward.5} parent=35 // pred_fallthru
                _
            $region36: #{finetune_vci_counts_decoder_forward.5} parent=31 // pred_fallthru
              _
            // Predicated region
            $region37: #{finetune_vci_counts_decoder_forward.5} parent=31 // pred_check
              _
            $region38: #{finetune_vci_counts_decoder_forward.5} parent=31 // pred_check_branch
              %253 = sbr.rel target = $region40
            $region39: #{finetune_vci_counts_decoder_forward.5} parent=31 // pred_region
              loop: start=0, step=1, limit=1
              $region41: #{finetune_vci_counts_decoder_forward.5} parent=39 // loop_pre_header
                _
              $region42: #{finetune_vci_counts_decoder_forward.5} parent=39 // loop_header
                %s256 = sphi 0, %s260
                %p257 = scmp.ge.s32.totalorder %s256, 1
                %s261 = sphi %s247, %s247
                %s262 = sphi %s245, %s245
              $region43: #{finetune_vci_counts_decoder_forward.5} parent=39 // loop_header_branch
                %259 = sbr.rel (%p257) target = $region47
              $region44: #{finetune_vci_counts_decoder_forward.5} parent=39 // loop_body
                %v263 = vld [vmem:[%s261] sm:$0xff]
                %264 = vst [vmem:[%s262] sm:$0xff] %v263
                %v265 = vld [vmem:[%s261 + $0x10] sm:$0xff]
                %266 = vst [vmem:[%s262 + $0x8] sm:$0xff] %v265
              $region45: #{finetune_vci_counts_decoder_forward.5} parent=39 // loop_footer
                %s260 = sadd.s32 1, %s256
              $region46: #{finetune_vci_counts_decoder_forward.5} parent=39 // loop_footer_branch
                %255 = sbr.rel target = $region42
              $region47: #{finetune_vci_counts_decoder_forward.5} parent=39 // loop_exit
                _
            $region40: #{finetune_vci_counts_decoder_forward.5} parent=31 // pred_fallthru
              _
          $region32: #{finetune_vci_counts_decoder_forward.5} parent=27 // pred_fallthru
            _
          %283 = vnop
        $region28: #{finetune_vci_counts_decoder_forward.5} parent=23 // pred_fallthru
          _
        // Predicated region
        $region63: #{finetune_vci_counts_decoder_forward.5} parent=23 // pred_check
          %p284 = pneg %p104
        $region64: #{finetune_vci_counts_decoder_forward.5} parent=23 // pred_check_branch
          %286 = sbr.rel (%p284) target = $region66
        $region65: #{finetune_vci_counts_decoder_forward.5} parent=23 // pred_region
          %s287 = sand.u32 %s94, 1
          %s288 = sand.u32 %s94, 1
          %s289 = smul.addr %s288, 64
          %s290 = scalar_lea.vmem [#allocation3], %s289
          %s291 = smul.addr %s16, 4
          %s292 = scalar_lea.vmem %s3, %s291
          // Predicated region
          $region67: #{finetune_vci_counts_decoder_forward.5} parent=65 // pred_check
            _
          $region68: #{finetune_vci_counts_decoder_forward.5} parent=65 // pred_check_branch
            %294 = sbr.rel (0) target = $region70
          $region69: #{finetune_vci_counts_decoder_forward.5} parent=65 // pred_region
            // Predicated region
            $region71: #{finetune_vci_counts_decoder_forward.5} parent=69 // pred_check
              _
            $region72: #{finetune_vci_counts_decoder_forward.5} parent=69 // pred_check_branch
              %296 = sbr.rel target = $region74
            $region73: #{finetune_vci_counts_decoder_forward.5} parent=69 // pred_region
              // Predicated region
              $region86: #{finetune_vci_counts_decoder_forward.5} parent=73 // pred_check
                _
              $region87: #{finetune_vci_counts_decoder_forward.5} parent=73 // pred_check_branch
                %341 = sbr.rel (0) target = $region89
              $region88: #{finetune_vci_counts_decoder_forward.5} parent=73 // pred_region
                loop: start=0, step=1, limit=1
                $region90: #{finetune_vci_counts_decoder_forward.5} parent=88 // loop_pre_header
                  _
                $region91: #{finetune_vci_counts_decoder_forward.5} parent=88 // loop_header
                  %s343 = sphi 0, %s347
                  %p344 = scmp.ge.s32.totalorder %s343, 1
                  %s348 = sphi %s292, %s292
                  %s349 = sphi %s290, %s290
                $region92: #{finetune_vci_counts_decoder_forward.5} parent=88 // loop_header_branch
                  %346 = sbr.rel (%p344) target = $region96
                $region93: #{finetune_vci_counts_decoder_forward.5} parent=88 // loop_body
                  _
                $region94: #{finetune_vci_counts_decoder_forward.5} parent=88 // loop_footer
                  %s347 = sadd.s32 1, %s343
                $region95: #{finetune_vci_counts_decoder_forward.5} parent=88 // loop_footer_branch
                  %342 = sbr.rel target = $region91
                $region96: #{finetune_vci_counts_decoder_forward.5} parent=88 // loop_exit
                  _
                loop: start=0, step=1, limit=1
                $region97: #{finetune_vci_counts_decoder_forward.5} parent=88 // loop_pre_header
                  _
                $region98: #{finetune_vci_counts_decoder_forward.5} parent=88 // loop_header
                  %s352 = sphi 0, %s356
                  %p353 = scmp.ge.s32.totalorder %s352, 1
                  %s357 = sphi %s292, %s292
                  %s358 = sphi %s290, %s290
                $region99: #{finetune_vci_counts_decoder_forward.5} parent=88 // loop_header_branch
                  %355 = sbr.rel (%p353) target = $region103
                $region100: #{finetune_vci_counts_decoder_forward.5} parent=88 // loop_body
                  %v359 = vld [vmem:[%s357] sm:$0xf]
                  %360 = vst [vmem:[%s358] sm:$0xf] %v359
                  %v361 = vld [vmem:[%s357 + $0x8] sm:$0xf]
                  %362 = vst [vmem:[%s358 + $0x4] sm:$0xf] %v361
                  %v363 = vld [vmem:[%s357 + $0x10] sm:$0xf]
                  %364 = vst [vmem:[%s358 + $0x8] sm:$0xf] %v363
                  %v365 = vld [vmem:[%s357 + $0x18] sm:$0xf]
                  %366 = vst [vmem:[%s358 + $0xc] sm:$0xf] %v365
                  %v367 = vld [vmem:[%s357 + $0x20] sm:$0xf]
                  %368 = vst [vmem:[%s358 + $0x10] sm:$0xf] %v367
                  %v369 = vld [vmem:[%s357 + $0x28] sm:$0xf]
                  %370 = vst [vmem:[%s358 + $0x14] sm:$0xf] %v369
                  %v371 = vld [vmem:[%s357 + $0x30] sm:$0xf]
                  %372 = vst [vmem:[%s358 + $0x18] sm:$0xf] %v371
                  %v373 = vld [vmem:[%s357 + $0x38] sm:$0xf]
                  %374 = vst [vmem:[%s358 + $0x1c] sm:$0xf] %v373
                  %v375 = vld [vmem:[%s357 + $0x40] sm:$0xf]
                  %376 = vst [vmem:[%s358 + $0x20] sm:$0xf] %v375
                  %v377 = vld [vmem:[%s357 + $0x48] sm:$0xf]
                  %378 = vst [vmem:[%s358 + $0x24] sm:$0xf] %v377
                  %v379 = vld [vmem:[%s357 + $0x50] sm:$0xf]
                  %380 = vst [vmem:[%s358 + $0x28] sm:$0xf] %v379
                  %v381 = vld [vmem:[%s357 + $0x58] sm:$0xf]
                  %382 = vst [vmem:[%s358 + $0x2c] sm:$0xf] %v381
                  %v383 = vld [vmem:[%s357 + $0x60] sm:$0xf]
                  %384 = vst [vmem:[%s358 + $0x30] sm:$0xf] %v383
                  %v385 = vld [vmem:[%s357 + $0x68] sm:$0xf]
                  %386 = vst [vmem:[%s358 + $0x34] sm:$0xf] %v385
                  %v387 = vld [vmem:[%s357 + $0x70] sm:$0xf]
                  %388 = vst [vmem:[%s358 + $0x38] sm:$0xf] %v387
                  %v389 = vld [vmem:[%s357 + $0x78] sm:$0xf]
                  %390 = vst [vmem:[%s358 + $0x3c] sm:$0xf] %v389
                $region101: #{finetune_vci_counts_decoder_forward.5} parent=88 // loop_footer
                  %s356 = sadd.s32 1, %s352
                $region102: #{finetune_vci_counts_decoder_forward.5} parent=88 // loop_footer_branch
                  %351 = sbr.rel target = $region98
                $region103: #{finetune_vci_counts_decoder_forward.5} parent=88 // loop_exit
                  _
              $region89: #{finetune_vci_counts_decoder_forward.5} parent=73 // pred_fallthru
                _
            $region74: #{finetune_vci_counts_decoder_forward.5} parent=69 // pred_fallthru
              _
            // Predicated region
            $region75: #{finetune_vci_counts_decoder_forward.5} parent=69 // pred_check
              _
            $region76: #{finetune_vci_counts_decoder_forward.5} parent=69 // pred_check_branch
              %298 = sbr.rel (0) target = $region78
            $region77: #{finetune_vci_counts_decoder_forward.5} parent=69 // pred_region
              loop: start=0, step=1, limit=1
              $region79: #{finetune_vci_counts_decoder_forward.5} parent=77 // loop_pre_header
                _
              $region80: #{finetune_vci_counts_decoder_forward.5} parent=77 // loop_header
                %s301 = sphi 0, %s305
                %p302 = scmp.ge.s32.totalorder %s301, 1
                %s306 = sphi %s292, %s292
                %s307 = sphi %s290, %s290
              $region81: #{finetune_vci_counts_decoder_forward.5} parent=77 // loop_header_branch
                %304 = sbr.rel (%p302) target = $region85
              $region82: #{finetune_vci_counts_decoder_forward.5} parent=77 // loop_body
                %v308 = vld [vmem:[%s306] sm:$0xf]
                %309 = vst [vmem:[%s307] sm:$0xf] %v308
                %v310 = vld [vmem:[%s306 + $0x8] sm:$0xf]
                %311 = vst [vmem:[%s307 + $0x4] sm:$0xf] %v310
                %v312 = vld [vmem:[%s306 + $0x10] sm:$0xf]
                %313 = vst [vmem:[%s307 + $0x8] sm:$0xf] %v312
                %v314 = vld [vmem:[%s306 + $0x18] sm:$0xf]
                %315 = vst [vmem:[%s307 + $0xc] sm:$0xf] %v314
                %v316 = vld [vmem:[%s306 + $0x20] sm:$0xf]
                %317 = vst [vmem:[%s307 + $0x10] sm:$0xf] %v316
                %v318 = vld [vmem:[%s306 + $0x28] sm:$0xf]
                %319 = vst [vmem:[%s307 + $0x14] sm:$0xf] %v318
                %v320 = vld [vmem:[%s306 + $0x30] sm:$0xf]
                %321 = vst [vmem:[%s307 + $0x18] sm:$0xf] %v320
                %v322 = vld [vmem:[%s306 + $0x38] sm:$0xf]
                %323 = vst [vmem:[%s307 + $0x1c] sm:$0xf] %v322
                %v324 = vld [vmem:[%s306 + $0x40] sm:$0xf]
                %325 = vst [vmem:[%s307 + $0x20] sm:$0xf] %v324
                %v326 = vld [vmem:[%s306 + $0x48] sm:$0xf]
                %327 = vst [vmem:[%s307 + $0x24] sm:$0xf] %v326
                %v328 = vld [vmem:[%s306 + $0x50] sm:$0xf]
                %329 = vst [vmem:[%s307 + $0x28] sm:$0xf] %v328
                %v330 = vld [vmem:[%s306 + $0x58] sm:$0xf]
                %331 = vst [vmem:[%s307 + $0x2c] sm:$0xf] %v330
                %v332 = vld [vmem:[%s306 + $0x60] sm:$0xf]
                %333 = vst [vmem:[%s307 + $0x30] sm:$0xf] %v332
                %v334 = vld [vmem:[%s306 + $0x68] sm:$0xf]
                %335 = vst [vmem:[%s307 + $0x34] sm:$0xf] %v334
                %v336 = vld [vmem:[%s306 + $0x70] sm:$0xf]
                %337 = vst [vmem:[%s307 + $0x38] sm:$0xf] %v336
                %v338 = vld [vmem:[%s306 + $0x78] sm:$0xf]
                %339 = vst [vmem:[%s307 + $0x3c] sm:$0xf] %v338
              $region83: #{finetune_vci_counts_decoder_forward.5} parent=77 // loop_footer
                %s305 = sadd.s32 1, %s301
              $region84: #{finetune_vci_counts_decoder_forward.5} parent=77 // loop_footer_branch
                %300 = sbr.rel target = $region80
              $region85: #{finetune_vci_counts_decoder_forward.5} parent=77 // loop_exit
                _
            $region78: #{finetune_vci_counts_decoder_forward.5} parent=69 // pred_fallthru
              _
          $region70: #{finetune_vci_counts_decoder_forward.5} parent=65 // pred_fallthru
            _
          %391 = vnop
        $region66: #{finetune_vci_counts_decoder_forward.5} parent=23 // pred_fallthru
          _
        // Predicated region
        $region104: #{finetune_vci_counts_decoder_forward.5} parent=23 // pred_check
          %p392 = pneg %p130
        $region105: #{finetune_vci_counts_decoder_forward.5} parent=23 // pred_check_branch
          %394 = sbr.rel (%p392) target = $region107
        $region106: #{finetune_vci_counts_decoder_forward.5} parent=23 // pred_region
          %p395 = scmp.lt.s32.totalorder %s16, 1
          %s396 = scalar_select %p395, %s16, 1
          %s397 = scalar_lea.vmem %s4, %s396
        $region107: #{finetune_vci_counts_decoder_forward.5} parent=23 // pred_fallthru
          _
        // Predicated region
        $region108: #{finetune_vci_counts_decoder_forward.5} parent=23 // pred_check
          %p398 = pneg %p156
        $region109: #{finetune_vci_counts_decoder_forward.5} parent=23 // pred_check_branch
          %400 = sbr.rel (%p398) target = $region111
        $region110: #{finetune_vci_counts_decoder_forward.5} parent=23 // pred_region
          %s401 = sand.u32 %s146, 1
          %s402 = sand.u32 %s146, 1
          %s403 = smul.addr %s402, 32
          %s404 = scalar_lea.vmem [#allocation4], %s403
          %s405 = smul.addr %s16, 4
          %s406 = scalar_lea.vmem %s5, %s405
          // Predicated region
          $region112: #{finetune_vci_counts_decoder_forward.5} parent=110 // pred_check
            _
          $region113: #{finetune_vci_counts_decoder_forward.5} parent=110 // pred_check_branch
            %408 = sbr.rel (0) target = $region115
          $region114: #{finetune_vci_counts_decoder_forward.5} parent=110 // pred_region
            // Predicated region
            $region116: #{finetune_vci_counts_decoder_forward.5} parent=114 // pred_check
              _
            $region117: #{finetune_vci_counts_decoder_forward.5} parent=114 // pred_check_branch
              %410 = sbr.rel target = $region119
            $region118: #{finetune_vci_counts_decoder_forward.5} parent=114 // pred_region
              // Predicated region
              $region131: #{finetune_vci_counts_decoder_forward.5} parent=118 // pred_check
                _
              $region132: #{finetune_vci_counts_decoder_forward.5} parent=118 // pred_check_branch
                %439 = sbr.rel (0) target = $region134
              $region133: #{finetune_vci_counts_decoder_forward.5} parent=118 // pred_region
                loop: start=0, step=1, limit=1
                $region135: #{finetune_vci_counts_decoder_forward.5} parent=133 // loop_pre_header
                  _
                $region136: #{finetune_vci_counts_decoder_forward.5} parent=133 // loop_header
                  %s441 = sphi 0, %s445
                  %p442 = scmp.ge.s32.totalorder %s441, 1
                  %s446 = sphi %s406, %s406
                  %s447 = sphi %s404, %s404
                $region137: #{finetune_vci_counts_decoder_forward.5} parent=133 // loop_header_branch
                  %444 = sbr.rel (%p442) target = $region141
                $region138: #{finetune_vci_counts_decoder_forward.5} parent=133 // loop_body
                  _
                $region139: #{finetune_vci_counts_decoder_forward.5} parent=133 // loop_footer
                  %s445 = sadd.s32 1, %s441
                $region140: #{finetune_vci_counts_decoder_forward.5} parent=133 // loop_footer_branch
                  %440 = sbr.rel target = $region136
                $region141: #{finetune_vci_counts_decoder_forward.5} parent=133 // loop_exit
                  _
                loop: start=0, step=1, limit=1
                $region142: #{finetune_vci_counts_decoder_forward.5} parent=133 // loop_pre_header
                  _
                $region143: #{finetune_vci_counts_decoder_forward.5} parent=133 // loop_header
                  %s450 = sphi 0, %s454
                  %p451 = scmp.ge.s32.totalorder %s450, 1
                  %s455 = sphi %s406, %s406
                  %s456 = sphi %s404, %s404
                $region144: #{finetune_vci_counts_decoder_forward.5} parent=133 // loop_header_branch
                  %453 = sbr.rel (%p451) target = $region148
                $region145: #{finetune_vci_counts_decoder_forward.5} parent=133 // loop_body
                  %v457 = vld [vmem:[%s455] sm:$0xf]
                  %458 = vst [vmem:[%s456] sm:$0xf] %v457
                  %v459 = vld [vmem:[%s455 + $0x8] sm:$0xf]
                  %460 = vst [vmem:[%s456 + $0x4] sm:$0xf] %v459
                  %v461 = vld [vmem:[%s455 + $0x10] sm:$0xf]
                  %462 = vst [vmem:[%s456 + $0x8] sm:$0xf] %v461
                  %v463 = vld [vmem:[%s455 + $0x18] sm:$0xf]
                  %464 = vst [vmem:[%s456 + $0xc] sm:$0xf] %v463
                  %v465 = vld [vmem:[%s455 + $0x20] sm:$0xf]
                  %466 = vst [vmem:[%s456 + $0x10] sm:$0xf] %v465
                  %v467 = vld [vmem:[%s455 + $0x28] sm:$0xf]
                  %468 = vst [vmem:[%s456 + $0x14] sm:$0xf] %v467
                  %v469 = vld [vmem:[%s455 + $0x30] sm:$0xf]
                  %470 = vst [vmem:[%s456 + $0x18] sm:$0xf] %v469
                  %v471 = vld [vmem:[%s455 + $0x38] sm:$0xf]
                  %472 = vst [vmem:[%s456 + $0x1c] sm:$0xf] %v471
                $region146: #{finetune_vci_counts_decoder_forward.5} parent=133 // loop_footer
                  %s454 = sadd.s32 1, %s450
                $region147: #{finetune_vci_counts_decoder_forward.5} parent=133 // loop_footer_branch
                  %449 = sbr.rel target = $region143
                $region148: #{finetune_vci_counts_decoder_forward.5} parent=133 // loop_exit
                  _
              $region134: #{finetune_vci_counts_decoder_forward.5} parent=118 // pred_fallthru
                _
            $region119: #{finetune_vci_counts_decoder_forward.5} parent=114 // pred_fallthru
              _
            // Predicated region
            $region120: #{finetune_vci_counts_decoder_forward.5} parent=114 // pred_check
              _
            $region121: #{finetune_vci_counts_decoder_forward.5} parent=114 // pred_check_branch
              %412 = sbr.rel (0) target = $region123
            $region122: #{finetune_vci_counts_decoder_forward.5} parent=114 // pred_region
              loop: start=0, step=1, limit=1
              $region124: #{finetune_vci_counts_decoder_forward.5} parent=122 // loop_pre_header
                _
              $region125: #{finetune_vci_counts_decoder_forward.5} parent=122 // loop_header
                %s415 = sphi 0, %s419
                %p416 = scmp.ge.s32.totalorder %s415, 1
                %s420 = sphi %s406, %s406
                %s421 = sphi %s404, %s404
              $region126: #{finetune_vci_counts_decoder_forward.5} parent=122 // loop_header_branch
                %418 = sbr.rel (%p416) target = $region130
              $region127: #{finetune_vci_counts_decoder_forward.5} parent=122 // loop_body
                %v422 = vld [vmem:[%s420] sm:$0xf]
                %423 = vst [vmem:[%s421] sm:$0xf] %v422
                %v424 = vld [vmem:[%s420 + $0x8] sm:$0xf]
                %425 = vst [vmem:[%s421 + $0x4] sm:$0xf] %v424
                %v426 = vld [vmem:[%s420 + $0x10] sm:$0xf]
                %427 = vst [vmem:[%s421 + $0x8] sm:$0xf] %v426
                %v428 = vld [vmem:[%s420 + $0x18] sm:$0xf]
                %429 = vst [vmem:[%s421 + $0xc] sm:$0xf] %v428
                %v430 = vld [vmem:[%s420 + $0x20] sm:$0xf]
                %431 = vst [vmem:[%s421 + $0x10] sm:$0xf] %v430
                %v432 = vld [vmem:[%s420 + $0x28] sm:$0xf]
                %433 = vst [vmem:[%s421 + $0x14] sm:$0xf] %v432
                %v434 = vld [vmem:[%s420 + $0x30] sm:$0xf]
                %435 = vst [vmem:[%s421 + $0x18] sm:$0xf] %v434
                %v436 = vld [vmem:[%s420 + $0x38] sm:$0xf]
                %437 = vst [vmem:[%s421 + $0x1c] sm:$0xf] %v436
              $region128: #{finetune_vci_counts_decoder_forward.5} parent=122 // loop_footer
                %s419 = sadd.s32 1, %s415
              $region129: #{finetune_vci_counts_decoder_forward.5} parent=122 // loop_footer_branch
                %414 = sbr.rel target = $region125
              $region130: #{finetune_vci_counts_decoder_forward.5} parent=122 // loop_exit
                _
            $region123: #{finetune_vci_counts_decoder_forward.5} parent=114 // pred_fallthru
              _
          $region115: #{finetune_vci_counts_decoder_forward.5} parent=110 // pred_fallthru
            _
          %473 = vnop
        $region111: #{finetune_vci_counts_decoder_forward.5} parent=23 // pred_fallthru
          _
        // Predicated region
        $region149: #{finetune_vci_counts_decoder_forward.5} parent=23 // pred_check
          %p474 = pneg %p182
        $region150: #{finetune_vci_counts_decoder_forward.5} parent=23 // pred_check_branch
          %476 = sbr.rel (%p474) target = $region152
        $region151: #{finetune_vci_counts_decoder_forward.5} parent=23 // pred_region
          %p477 = scmp.lt.s32.totalorder %s16, 1
          %s478 = scalar_select %p477, %s16, 1
          %s479 = scalar_lea.vmem %s6, %s478
        $region152: #{finetune_vci_counts_decoder_forward.5} parent=23 // pred_fallthru
          _
      $region24: #{finetune_vci_counts_decoder_forward.5} parent=5 // pred_fallthru
        _
      %p480 = scmp.le.s32.totalorder 1, %s16
      %p481 = scmp.lt.s32.totalorder %s16, 3
      %p482 = pnand %p480, %p481
      %p483 = pneg %p482
      // Predicated region
      $region153: #{finetune_vci_counts_decoder_forward.5} parent=5 // pred_check
        _
      $region154: #{finetune_vci_counts_decoder_forward.5} parent=5 // pred_check_branch
        %485 = sbr.rel (%p482) target = $region156
      $region155: #{finetune_vci_counts_decoder_forward.5} parent=5 // pred_region
        %s486 = ssub.s32 %s16, 1
        %s487 = sand.u32 %s29, 1
        %s488 = sand.u32 %s29, 1
        %s489 = smul.addr %s488, 16
        %s490 = scalar_lea.vmem [#allocation2], %s489
        // Predicated region
        $region157: #{finetune_vci_counts_decoder_forward.5} parent=155 // pred_check
          %p491 = pneg %p42
        $region158: #{finetune_vci_counts_decoder_forward.5} parent=155 // pred_check_branch
          %493 = sbr.rel (%p491) target = $region160
        $region159: #{finetune_vci_counts_decoder_forward.5} parent=155 // pred_region
          _
        $region160: #{finetune_vci_counts_decoder_forward.5} parent=155 // pred_fallthru
          _
        %s494 = sand.u32 %s97, 1
        %s495 = sand.u32 %s97, 1
        %s496 = smul.addr %s495, 64
        %s497 = scalar_lea.vmem [#allocation3], %s496
        // Predicated region
        $region161: #{finetune_vci_counts_decoder_forward.5} parent=155 // pred_check
          %p498 = pneg %p110
        $region162: #{finetune_vci_counts_decoder_forward.5} parent=155 // pred_check_branch
          %500 = sbr.rel (%p498) target = $region164
        $region163: #{finetune_vci_counts_decoder_forward.5} parent=155 // pred_region
          _
        $region164: #{finetune_vci_counts_decoder_forward.5} parent=155 // pred_fallthru
          _
        %s501 = sand.u32 %s149, 1
        %s502 = sand.u32 %s149, 1
        %s503 = smul.addr %s502, 32
        %s504 = scalar_lea.vmem [#allocation4], %s503
        // Predicated region
        $region165: #{finetune_vci_counts_decoder_forward.5} parent=155 // pred_check
          %p505 = pneg %p162
        $region166: #{finetune_vci_counts_decoder_forward.5} parent=155 // pred_check_branch
          %507 = sbr.rel (%p505) target = $region168
        $region167: #{finetune_vci_counts_decoder_forward.5} parent=155 // pred_region
          _
        $region168: #{finetune_vci_counts_decoder_forward.5} parent=155 // pred_fallthru
          _
        %s508 = sand.u32 %s29, 1
        %s509 = sand.u32 %s29, 1
        %s510 = smul.addr %s509, 16
        %s511 = scalar_lea.vmem [#allocation2], %s510
        %p512 = pneg %p42
        %p513 = pneg %p39
        %p514 = pneg %p63
        %p515 = pneg %p60
        %p516 = pneg %p84
        %p517 = pneg %p81
        %s518 = sand.u32 %s97, 1
        %s519 = sand.u32 %s97, 1
        %s520 = smul.addr %s519, 64
        %s521 = scalar_lea.vmem [#allocation3], %s520
        %p522 = pneg %p110
        %p523 = pneg %p107
        %p524 = scmp.lt.s32.totalorder %s21, 1
        %s525 = scalar_select %p524, %s21, 1
        %s526 = scalar_lea.vmem %s4, %s525
        %p527 = pneg %p136
        %p528 = pneg %p133
        %s529 = sand.u32 %s149, 1
        %s530 = sand.u32 %s149, 1
        %s531 = smul.addr %s530, 32
        %s532 = scalar_lea.vmem [#allocation4], %s531
        %p533 = pneg %p162
        %p534 = pneg %p159
        %p535 = scmp.lt.s32.totalorder %s21, 1
        %s536 = scalar_select %p535, %s21, 1
        %s537 = scalar_lea.vmem %s6, %s536
        %p538 = pneg %p188
        %p539 = pneg %p185
        %p540 = pneg %p214
        %p541 = pneg %p211
        %s542 = sand.u32 %s201, 1
        %s543 = scalar_lea.sflag [#allocation6], %s542
        %s544 = sand.u32 %s201, 1
        %s545 = smul.addr %s544, 16
        %s546 = scalar_lea.vmem [#allocation5], %s545
        %p547 = scmp.lt.s32.totalorder %s21, 1
        %s548 = scalar_select %p547, %s21, 1
        %s549 = scalar_lea.vmem %s4, %s548
        %p550 = scmp.lt.s32.totalorder %s21, 1
        %s551 = scalar_select %p550, %s21, 1
        %s552 = scalar_lea.vmem %s6, %s551
        %v554 = vld [vmem:[%s1] sm:$0xff]
        %v555 = vld [vmem:[%s1 + $0x8] sm:$0xff]
        %v556 = vpack.c.bf16 %v555, %v554
        %v557 = vld [vmem:[%s497] sm:$0xf]
        %v558 = vld [vmem:[%s497 + $0x4] sm:$0xf]
        %v559 = vld [vmem:[%s497 + $0x8] sm:$0xf]
        %v560 = vld [vmem:[%s497 + $0xc] sm:$0xf]
        %v561 = vld [vmem:[%s497 + $0x10] sm:$0xf]
        %v562 = vld [vmem:[%s497 + $0x14] sm:$0xf]
        %v563 = vld [vmem:[%s497 + $0x18] sm:$0xf]
        %v564 = vld [vmem:[%s497 + $0x1c] sm:$0xf]
        %v565 = vld [vmem:[%s497 + $0x20] sm:$0xf]
        %v566 = vld [vmem:[%s497 + $0x24] sm:$0xf]
        %v567 = vld [vmem:[%s497 + $0x28] sm:$0xf]
        %v568 = vld [vmem:[%s497 + $0x2c] sm:$0xf]
        %v569 = vld [vmem:[%s497 + $0x30] sm:$0xf]
        %v570 = vld [vmem:[%s497 + $0x34] sm:$0xf]
        %v571 = vld [vmem:[%s497 + $0x38] sm:$0xf]
        %v572 = vld [vmem:[%s497 + $0x3c] sm:$0xf]
        %v573 = vld [vmem:[%s549] sm:$0x1]
        %v575 = vlaneseq
        %v576 = vshrl.u32 %v575, 7
        %v577 = vsub.s32 0, %v576
        %v578 = vrot.slane %v573, %v577
        %v596 = vunpack.c.l.b16 %v557
        %v597 = vunpack.c.l.b16 %v558
        %v598 = vunpack.c.l.b16 %v559
        %v599 = vunpack.c.l.b16 %v560
        %v600 = vunpack.c.l.b16 %v561
        %v601 = vunpack.c.l.b16 %v562
        %v602 = vunpack.c.l.b16 %v563
        %v603 = vunpack.c.l.b16 %v564
        %v604 = vunpack.c.l.b16 %v565
        %v605 = vunpack.c.l.b16 %v566
        %v606 = vunpack.c.l.b16 %v567
        %v607 = vunpack.c.l.b16 %v568
        %v608 = vunpack.c.l.b16 %v569
        %v609 = vunpack.c.l.b16 %v570
        %v610 = vunpack.c.l.b16 %v571
        %v611 = vunpack.c.l.b16 %v572
        %v612 = vpack.c.b16 %v597, %v596
        %v613 = vpack.c.b16 %v599, %v598
        %v614 = vpack.c.b16 %v601, %v600
        %v615 = vpack.c.b16 %v603, %v602
        %v616 = vpack.c.b16 %v605, %v604
        %v617 = vpack.c.b16 %v607, %v606
        %v618 = vpack.c.b16 %v609, %v608
        %v619 = vpack.c.b16 %v611, %v610
        %628 = vmatprep.subr.bf16.mxu0 0
        %629 = vmatpush1.bf16.msra.mxu0 %v612
        %630 = vmatprep.subr.bf16.mxu0 0
        %631 = vmatpush1.bf16.msra.mxu0 %v613
        %632 = vmatprep.subr.bf16.mxu0 0
        %633 = vmatpush1.bf16.msra.mxu0 %v614
        %634 = vmatprep.subr.bf16.mxu0 0
        %635 = vmatpush1.bf16.msra.mxu0 %v615
        %636 = vmatprep.subr.bf16.mxu0 0
        %637 = vmatpush1.bf16.msra.mxu0 %v616
        %638 = vmatprep.subr.bf16.mxu0 0
        %639 = vmatpush1.bf16.msra.mxu0 %v617
        %640 = vmatprep.subr.bf16.mxu0 0
        %641 = vmatpush1.bf16.msra.mxu0 %v618
        %642 = vmatprep.subr.bf16.mxu0 0
        %643 = vmatpush1.bf16.msra.mxu0 %v619
        %644 = vmatprep.subr.bf16.mxu0 0
        %645 = vmatpush1.bf16.msra.mxu0 0
        %646 = vmatprep.subr.bf16.mxu0 0
        %647 = vmatpush1.bf16.msra.mxu0 0
        %648 = vmatprep.subr.bf16.mxu0 0
        %649 = vmatpush1.bf16.msra.mxu0 0
        %650 = vmatprep.subr.bf16.mxu0 0
        %651 = vmatpush1.bf16.msra.mxu0 0
        %652 = vmatprep.subr.bf16.mxu0 0
        %653 = vmatpush1.bf16.msra.mxu0 0
        %654 = vmatprep.subr.bf16.mxu0 0
        %655 = vmatpush1.bf16.msra.mxu0 0
        %656 = vmatprep.subr.bf16.mxu0 0
        %657 = vmatpush1.bf16.msra.mxu0 0
        %658 = vmatprep.subr.bf16.mxu0 0
        %659 = vmatpush1.bf16.msra.mxu0 0
        %660 = vmatprep.mubr.bf16.mxu0 0
        %661 = vmatmul.mubr.bf16.gmra.mrb[0].mxu0 %v556
        %v662 = vpop.f32.mrb[0].mxu0
        %v663 = vadd.f32 %v578, %v662
        %v664 = vpop.f32.mrb[0].mxu0
        %v665 = vpop.f32.mrb[0].mxu0
        %v666 = vadd.f32 %v578, %v665
        %v667 = vpop.f32.mrb[0].mxu0
        %668 = vdwg.mxu0
        %v669 = vld [vmem:[%s2] sm:$0xff]
        %v670 = vld [vmem:[%s2 + $0x8] sm:$0xff]
        %v671 = vpack.c.bf16 %v670, %v669
        %v672 = vld [vmem:[%s504] sm:$0xf]
        %v673 = vld [vmem:[%s504 + $0x4] sm:$0xf]
        %v674 = vld [vmem:[%s504 + $0x8] sm:$0xf]
        %v675 = vld [vmem:[%s504 + $0xc] sm:$0xf]
        %v676 = vld [vmem:[%s504 + $0x10] sm:$0xf]
        %v677 = vld [vmem:[%s504 + $0x14] sm:$0xf]
        %v678 = vld [vmem:[%s504 + $0x18] sm:$0xf]
        %v679 = vld [vmem:[%s504 + $0x1c] sm:$0xf]
        %v680 = vld [vmem:[%s552] sm:$0x1]
        %v682 = vlaneseq
        %v683 = vshrl.u32 %v682, 7
        %v684 = vsub.s32 0, %v683
        %v685 = vrot.slane %v680, %v684
        %v695 = vunpack.c.l.b16 %v672
        %v696 = vunpack.c.l.b16 %v673
        %v697 = vunpack.c.l.b16 %v674
        %v698 = vunpack.c.l.b16 %v675
        %v699 = vunpack.c.l.b16 %v676
        %v700 = vunpack.c.l.b16 %v677
        %v701 = vunpack.c.l.b16 %v678
        %v702 = vunpack.c.l.b16 %v679
        %v703 = vpack.c.b16 %v696, %v695
        %v704 = vpack.c.b16 %v698, %v697
        %v705 = vpack.c.b16 %v700, %v699
        %v706 = vpack.c.b16 %v702, %v701
        %vm711 = vcmask 523264
        %v713 = vsel %vm711, %v671, 0
        %715 = vmatprep.subr.bf16.mxu0 0
        %716 = vmatpush1.bf16.msra.mxu0 %v703
        %717 = vmatprep.subr.bf16.mxu0 0
        %718 = vmatpush1.bf16.msra.mxu0 %v704
        %719 = vmatprep.subr.bf16.mxu0 0
        %720 = vmatpush1.bf16.msra.mxu0 %v705
        %721 = vmatprep.subr.bf16.mxu0 0
        %722 = vmatpush1.bf16.msra.mxu0 %v706
        %723 = vmatprep.subr.bf16.mxu0 0
        %724 = vmatpush1.bf16.msra.mxu0 0
        %725 = vmatprep.subr.bf16.mxu0 0
        %726 = vmatpush1.bf16.msra.mxu0 0
        %727 = vmatprep.subr.bf16.mxu0 0
        %728 = vmatpush1.bf16.msra.mxu0 0
        %729 = vmatprep.subr.bf16.mxu0 0
        %730 = vmatpush1.bf16.msra.mxu0 0
        %731 = vmatprep.subr.bf16.mxu0 0
        %732 = vmatpush1.bf16.msra.mxu0 0
        %733 = vmatprep.subr.bf16.mxu0 0
        %734 = vmatpush1.bf16.msra.mxu0 0
        %735 = vmatprep.subr.bf16.mxu0 0
        %736 = vmatpush1.bf16.msra.mxu0 0
        %737 = vmatprep.subr.bf16.mxu0 0
        %738 = vmatpush1.bf16.msra.mxu0 0
        %739 = vmatprep.subr.bf16.mxu0 0
        %740 = vmatpush1.bf16.msra.mxu0 0
        %741 = vmatprep.subr.bf16.mxu0 0
        %742 = vmatpush1.bf16.msra.mxu0 0
        %743 = vmatprep.subr.bf16.mxu0 0
        %744 = vmatpush1.bf16.msra.mxu0 0
        %745 = vmatprep.subr.bf16.mxu0 0
        %746 = vmatpush1.bf16.msra.mxu0 0
        %747 = vmatprep.mubr.bf16.mxu0 0
        %748 = vmatmul.mubr.bf16.gmra.mrb[0].mxu0 %v713
        %v749 = vpop.f32.mrb[0].mxu0
        %v750 = vadd.f32 %v685, %v749
        %v751 = vpop.f32.mrb[0].mxu0
        %v752 = vpop.f32.mrb[0].mxu0
        %v753 = vadd.f32 %v685, %v752
        %v754 = vpop.f32.mrb[0].mxu0
        %755 = vdwg.mxu0
        %v756 = vld [vmem:[%s490] sm:$0xff]
        %v757 = vld [vmem:[%s490 + $0x8] sm:$0xff]
        %v758 = vadd.f32 %v756, %v663
        %v759 = vadd.f32 %v757, %v666
        %v760 = vmax.f32 %v750, 0.0
        %v761 = vmax.f32 %v753, 0.0
        %v762 = vadd.f32 %v758, %v760
        %v763 = vadd.f32 %v759, %v761
        %764 = vst [vmem:[%s546] sm:$0xff] %v762
        %765 = vst [vmem:[%s546 + $0x8] sm:$0xff] %v763
        %s766 = sand.u32 %s201, 1
        %s767 = scalar_lea.sflag [#allocation6], %s766
        %s768 = sand.u32 %s201, 1
        %s769 = smul.addr %s768, 16
        %s770 = scalar_lea.vmem [#allocation5], %s769
        // Predicated region
        $region169: #{finetune_vci_counts_decoder_forward.5} parent=155 // pred_check
          %p771 = pneg %p211
        $region170: #{finetune_vci_counts_decoder_forward.5} parent=155 // pred_check_branch
          %773 = sbr.rel (%p771) target = $region172
        $region171: #{finetune_vci_counts_decoder_forward.5} parent=155 // pred_region
          %s775 = ssub.s32 256, 256
          %776 = vsyncadd %s767, %s775
          %s777 = smul.addr %s21, 128
          %s778 = scalar_lea.hbm %s7, %s777
          %s779 = sshll.u32 %s770, 4
          %s780 = int_to_ptr.vmem [resolvable:$true] %s779
          %785 = dma.vmem_to_hbm [thread:$0]  %s780, 256, %s778, %s767, 128, 256, 8
        $region172: #{finetune_vci_counts_decoder_forward.5} parent=155 // pred_fallthru
          _
      $region156: #{finetune_vci_counts_decoder_forward.5} parent=5 // pred_fallthru
        _
      %p786 = scmp.le.s32.totalorder 2, %s16
      // Predicated region
      $region173: #{finetune_vci_counts_decoder_forward.5} parent=5 // pred_check
        %p787 = pneg %p786
      $region174: #{finetune_vci_counts_decoder_forward.5} parent=5 // pred_check_branch
        %789 = sbr.rel (%p787) target = $region176
      $region175: #{finetune_vci_counts_decoder_forward.5} parent=5 // pred_region
        %s790 = ssub.s32 %s16, 2
        // Predicated region
        $region177: #{finetune_vci_counts_decoder_forward.5} parent=175 // pred_check
          %p791 = pneg %p217
        $region178: #{finetune_vci_counts_decoder_forward.5} parent=175 // pred_check_branch
          %793 = sbr.rel (%p791) target = $region180
        $region179: #{finetune_vci_counts_decoder_forward.5} parent=175 // pred_region
          %s794 = sand.u32 %s202, 1
          %s795 = scalar_lea.sflag [#allocation6], %s794
          %s796 = sand.u32 %s202, 1
          %s797 = smul.addr %s796, 16
          %s798 = scalar_lea.vmem [#allocation5], %s797
          %799 = dma.done %s795, 256
        $region180: #{finetune_vci_counts_decoder_forward.5} parent=175 // pred_fallthru
          _
      $region176: #{finetune_vci_counts_decoder_forward.5} parent=5 // pred_fallthru
        _
    $region6: #{finetune_vci_counts_decoder_forward.5} parent=1 // loop_footer
      %s20 = sadd.s32 1, %s16
    $region7: #{finetune_vci_counts_decoder_forward.5} parent=1 // loop_footer_branch
      %15 = sbr.rel target = $region3
    $region8: #{finetune_vci_counts_decoder_forward.5} parent=1 // loop_exit
      _
    %800 = vsyncpa [#allocation6], 1
    %s801 = scalar_lea.sflag [#allocation6], 1
    %802 = vsyncpa %s801, 1

// kernel: finetune_vci_counts_decoder_forward.4
$region0: #{finetune_vci_counts_decoder_forward.4}
  #allocation0 [shape = 'u32[]', space=smem, size = 0x4, offset = 0x4, fixed_abs, tag = 'smem constant byte address 0x4 - core index']
  #allocation1 [shape = 'u32[144,128]{1,0:T(1,128)}', space=vmem, size = 0x12000, scoped, tag = 'internal scratch']
  #allocation2 [shape = 'bf16[512,128]{1,0:T(16,128)(2,1)}', space=vmem, size = 0x20000, scoped, tag = 'scratch operand']
  #allocation3 [shape = 'f32[1,1]{1,0:T(1,128)S(6)}', space=smem, size = 0x200, scoped, tag = 'scoped memory for finetune_vci_counts_decoder_forward.4']
  %s0 = inlined_call_operand.vmem [shape: f32[2,64,8], index: 0, kind: input, shape index: {}]
  %s1 = inlined_call_operand.vmem [shape: bf16[32,256], index: 1, kind: input, shape index: {}]
  %s2 = inlined_call_operand.vmem [shape: bf16[64,32], index: 2, kind: input, shape index: {}]
  %s3 = inlined_call_operand.vmem [shape: f32[64,1], index: 3, kind: input, shape index: {}]
  %s4 = inlined_call_operand.vmem [shape: bf16[8,512], index: 4, kind: input, shape index: {}]
  %s5 = inlined_call_operand.vmem [shape: bf16[256,128], index: 5, kind: input, shape index: {}]
  %s6 = inlined_call_operand.vmem [shape: f32[1,128], index: 6, kind: input, shape index: {}]
  %s7 = inlined_call_operand.<no memory space> [shape: f32[1,1], index: 7, kind: input, shape index: {}]
  %s8 = inlined_call_operand.vmem [shape: f32[16,256], index: 8, kind: output, shape index: {0}]
  %s9 = inlined_call_operand.vmem [shape: f32[16,128], index: 9, kind: output, shape index: {1}]
  %10 = xla_tuple %s8, %s9
  %s11 = sld [smem:[#allocation0]]
  $region122: #{finetune_vci_counts_decoder_forward.4} parent=0
    _
  %s13 = ssub.s32 1, %s11
  %s14 = scalar_select 0, %s13, %s11
  %15 = sst [smem:[#allocation3]] %s7
  $region1: #{finetune_vci_counts_decoder_forward.4} parent=0
    #allocation4 [shape = 'u8[16384]{0}', space=vmem, size = 0x4000, scoped, tag = 'input window, operand 1']
    loop: start=0, step=1, limit=6
    $region2: #{finetune_vci_counts_decoder_forward.4} parent=1 // loop_pre_header
      _
    $region3: #{finetune_vci_counts_decoder_forward.4} parent=1 // loop_header
      %s17 = sphi 0, %s21
      %p18 = scmp.ge.s32.totalorder %s17, 6
      %s24 = sphi 0, %s36
      %s25 = sphi 0, %s32
      %s26 = sphi 0, %s24
      %s27 = sphi 0, %s25
      %s28 = sphi 0, %s26
      %s29 = sphi 0, %s27
      %s39 = sphi 0, %s41
      %s42 = sphi 0, %s39
      %s43 = sphi 0, %s42
      %s59 = sphi 0, %s43
      %s65 = sphi 0, %s67
      %s68 = sphi 0, %s65
      %s69 = sphi 0, %s68
      %s85 = sphi 0, %s69
      %s89 = sphi 0, %s89
      %s91 = sphi 0, %s89
      %s92 = sphi 0, %s91
      %s106 = sphi 0, %s92
      %s110 = sphi 0, %s110
      %s112 = sphi 0, %s110
      %s113 = sphi 0, %s112
      %s127 = sphi 0, %s113
      %s131 = sphi 0, %s131
      %s133 = sphi 0, %s131
      %s134 = sphi 0, %s133
      %s148 = sphi 0, %s134
      %s154 = sphi 0, %s156
      %s157 = sphi 0, %s154
      %s158 = sphi 0, %s157
      %s174 = sphi 0, %s158
      %s178 = sphi 0, %s178
      %s180 = sphi 0, %s178
      %s181 = sphi 0, %s180
      %s195 = sphi 0, %s181
      %s199 = sphi 0, %s199
      %s201 = sphi 0, %s199
      %s202 = sphi 0, %s201
      %s216 = sphi 0, %s202
      %s224 = sphi 0, %s226
      %s227 = sphi 0, %s224
      %s228 = sphi 0, %s227
      %s244 = sphi 0, %s228
      %s250 = sphi 0, %s252
      %s253 = sphi 0, %s250
      %s254 = sphi 0, %s253
      %s270 = sphi 0, %s254
    $region4: #{finetune_vci_counts_decoder_forward.4} parent=1 // loop_header_branch
      %20 = sbr.rel (%p18) target = $region8
    $region5: #{finetune_vci_counts_decoder_forward.4} parent=1 // loop_body
      %s22 = ssub.s32 %s17, 1
      %s23 = ssub.s32 %s17, 2
      %s30 = sadd.s32 1, %s25
      %p31 = scmp.ge.s32.totalorder %s30, 2
      %s32 = scalar_select %p31, 0, %s30
      %s33 = sadd.s32 1, %s24
      %s34 = scalar_select %p31, %s33, %s24
      %p35 = scmp.ge.s32.totalorder %s34, 2
      %s36 = scalar_select %p35, 0, %s34
      %s37 = ssub.s32 %s24, %s36
      %p38 = scmp.eq.s32.totalorder %s37, 0
      %s40 = sadd.s32 %s39, 1
      %s41 = scalar_select %p38, %s39, %s40
      %p44 = pneg %p38
      %p45 = scmp.eq.s32.totalorder %s17, 3
      %p46 = por %p44, %p45
      %p47 = scmp.ne.s32.totalorder %s39, %s42
      %p48 = scmp.eq.s32.totalorder %s17, 0
      %p49 = por %p47, %p48
      %p50 = scmp.ne.s32.totalorder %s39, %s42
      %p51 = scmp.eq.s32.totalorder %s22, 3
      %p52 = por %p50, %p51
      %p53 = scmp.ne.s32.totalorder %s42, %s43
      %p54 = scmp.eq.s32.totalorder %s22, 0
      %p55 = por %p53, %p54
      %p56 = scmp.ne.s32.totalorder %s42, %s43
      %p57 = scmp.eq.s32.totalorder %s23, 3
      %p58 = por %p56, %p57
      %p60 = scmp.ne.s32.totalorder %s43, %s59
      %p61 = scmp.eq.s32.totalorder %s23, 0
      %p62 = por %p60, %p61
      %s63 = ssub.s32 %s25, %s32
      %p64 = scmp.eq.s32.totalorder %s63, 0
      %s66 = sadd.s32 %s65, 1
      %s67 = scalar_select %p64, %s65, %s66
      %p70 = pneg %p64
      %p71 = scmp.eq.s32.totalorder %s17, 3
      %p72 = por %p70, %p71
      %p73 = scmp.ne.s32.totalorder %s65, %s68
      %p74 = scmp.eq.s32.totalorder %s17, 0
      %p75 = por %p73, %p74
      %p76 = scmp.ne.s32.totalorder %s65, %s68
      %p77 = scmp.eq.s32.totalorder %s22, 3
      %p78 = por %p76, %p77
      %p79 = scmp.ne.s32.totalorder %s68, %s69
      %p80 = scmp.eq.s32.totalorder %s22, 0
      %p81 = por %p79, %p80
      %p82 = scmp.ne.s32.totalorder %s68, %s69
      %p83 = scmp.eq.s32.totalorder %s23, 3
      %p84 = por %p82, %p83
      %p86 = scmp.ne.s32.totalorder %s69, %s85
      %p87 = scmp.eq.s32.totalorder %s23, 0
      %p88 = por %p86, %p87
      %s90 = sadd.s32 %s89, 1
      %p93 = scmp.eq.s32.totalorder %s17, 3
      %p94 = scmp.ne.s32.totalorder %s89, %s91
      %p95 = scmp.eq.s32.totalorder %s17, 0
      %p96 = por %p94, %p95
      %p97 = scmp.ne.s32.totalorder %s89, %s91
      %p98 = scmp.eq.s32.totalorder %s22, 3
      %p99 = por %p97, %p98
      %p100 = scmp.ne.s32.totalorder %s91, %s92
      %p101 = scmp.eq.s32.totalorder %s22, 0
      %p102 = por %p100, %p101
      %p103 = scmp.ne.s32.totalorder %s91, %s92
      %p104 = scmp.eq.s32.totalorder %s23, 3
      %p105 = por %p103, %p104
      %p107 = scmp.ne.s32.totalorder %s92, %s106
      %p108 = scmp.eq.s32.totalorder %s23, 0
      %p109 = por %p107, %p108
      %s111 = sadd.s32 %s110, 1
      %p114 = scmp.eq.s32.totalorder %s17, 3
      %p115 = scmp.ne.s32.totalorder %s110, %s112
      %p116 = scmp.eq.s32.totalorder %s17, 0
      %p117 = por %p115, %p116
      %p118 = scmp.ne.s32.totalorder %s110, %s112
      %p119 = scmp.eq.s32.totalorder %s22, 3
      %p120 = por %p118, %p119
      %p121 = scmp.ne.s32.totalorder %s112, %s113
      %p122 = scmp.eq.s32.totalorder %s22, 0
      %p123 = por %p121, %p122
      %p124 = scmp.ne.s32.totalorder %s112, %s113
      %p125 = scmp.eq.s32.totalorder %s23, 3
      %p126 = por %p124, %p125
      %p128 = scmp.ne.s32.totalorder %s113, %s127
      %p129 = scmp.eq.s32.totalorder %s23, 0
      %p130 = por %p128, %p129
      %s132 = sadd.s32 %s131, 1
      %p135 = scmp.eq.s32.totalorder %s17, 3
      %p136 = scmp.ne.s32.totalorder %s131, %s133
      %p137 = scmp.eq.s32.totalorder %s17, 0
      %p138 = por %p136, %p137
      %p139 = scmp.ne.s32.totalorder %s131, %s133
      %p140 = scmp.eq.s32.totalorder %s22, 3
      %p141 = por %p139, %p140
      %p142 = scmp.ne.s32.totalorder %s133, %s134
      %p143 = scmp.eq.s32.totalorder %s22, 0
      %p144 = por %p142, %p143
      %p145 = scmp.ne.s32.totalorder %s133, %s134
      %p146 = scmp.eq.s32.totalorder %s23, 3
      %p147 = por %p145, %p146
      %p149 = scmp.ne.s32.totalorder %s134, %s148
      %p150 = scmp.eq.s32.totalorder %s23, 0
      %p151 = por %p149, %p150
      %s152 = ssub.s32 %s25, %s32
      %p153 = scmp.eq.s32.totalorder %s152, 0
      %s155 = sadd.s32 %s154, 1
      %s156 = scalar_select %p153, %s154, %s155
      %p159 = pneg %p153
      %p160 = scmp.eq.s32.totalorder %s17, 3
      %p161 = por %p159, %p160
      %p162 = scmp.ne.s32.totalorder %s154, %s157
      %p163 = scmp.eq.s32.totalorder %s17, 0
      %p164 = por %p162, %p163
      %p165 = scmp.ne.s32.totalorder %s154, %s157
      %p166 = scmp.eq.s32.totalorder %s22, 3
      %p167 = por %p165, %p166
      %p168 = scmp.ne.s32.totalorder %s157, %s158
      %p169 = scmp.eq.s32.totalorder %s22, 0
      %p170 = por %p168, %p169
      %p171 = scmp.ne.s32.totalorder %s157, %s158
      %p172 = scmp.eq.s32.totalorder %s23, 3
      %p173 = por %p171, %p172
      %p175 = scmp.ne.s32.totalorder %s158, %s174
      %p176 = scmp.eq.s32.totalorder %s23, 0
      %p177 = por %p175, %p176
      %s179 = sadd.s32 %s178, 1
      %p182 = scmp.eq.s32.totalorder %s17, 3
      %p183 = scmp.ne.s32.totalorder %s178, %s180
      %p184 = scmp.eq.s32.totalorder %s17, 0
      %p185 = por %p183, %p184
      %p186 = scmp.ne.s32.totalorder %s178, %s180
      %p187 = scmp.eq.s32.totalorder %s22, 3
      %p188 = por %p186, %p187
      %p189 = scmp.ne.s32.totalorder %s180, %s181
      %p190 = scmp.eq.s32.totalorder %s22, 0
      %p191 = por %p189, %p190
      %p192 = scmp.ne.s32.totalorder %s180, %s181
      %p193 = scmp.eq.s32.totalorder %s23, 3
      %p194 = por %p192, %p193
      %p196 = scmp.ne.s32.totalorder %s181, %s195
      %p197 = scmp.eq.s32.totalorder %s23, 0
      %p198 = por %p196, %p197
      %s200 = sadd.s32 %s199, 1
      %p203 = scmp.eq.s32.totalorder %s17, 3
      %p204 = scmp.ne.s32.totalorder %s199, %s201
      %p205 = scmp.eq.s32.totalorder %s17, 0
      %p206 = por %p204, %p205
      %p207 = scmp.ne.s32.totalorder %s199, %s201
      %p208 = scmp.eq.s32.totalorder %s22, 3
      %p209 = por %p207, %p208
      %p210 = scmp.ne.s32.totalorder %s201, %s202
      %p211 = scmp.eq.s32.totalorder %s22, 0
      %p212 = por %p210, %p211
      %p213 = scmp.ne.s32.totalorder %s201, %s202
      %p214 = scmp.eq.s32.totalorder %s23, 3
      %p215 = por %p213, %p214
      %p217 = scmp.ne.s32.totalorder %s202, %s216
      %p218 = scmp.eq.s32.totalorder %s23, 0
      %p219 = por %p217, %p218
      %s220 = ssub.s32 %s24, %s36
      %s221 = ssub.s32 %s25, %s32
      %s222 = sor.u32 %s220, %s221
      %p223 = scmp.eq.s32.totalorder %s222, 0
      %s225 = sadd.s32 %s224, 1
      %s226 = scalar_select %p223, %s224, %s225
      %p229 = pneg %p223
      %p230 = scmp.eq.s32.totalorder %s17, 3
      %p231 = por %p229, %p230
      %p232 = scmp.ne.s32.totalorder %s224, %s227
      %p233 = scmp.eq.s32.totalorder %s17, 0
      %p234 = por %p232, %p233
      %p235 = scmp.ne.s32.totalorder %s224, %s227
      %p236 = scmp.eq.s32.totalorder %s22, 3
      %p237 = por %p235, %p236
      %p238 = scmp.ne.s32.totalorder %s227, %s228
      %p239 = scmp.eq.s32.totalorder %s22, 0
      %p240 = por %p238, %p239
      %p241 = scmp.ne.s32.totalorder %s227, %s228
      %p242 = scmp.eq.s32.totalorder %s23, 3
      %p243 = por %p241, %p242
      %p245 = scmp.ne.s32.totalorder %s228, %s244
      %p246 = scmp.eq.s32.totalorder %s23, 0
      %p247 = por %p245, %p246
      %s248 = ssub.s32 %s24, %s36
      %p249 = scmp.eq.s32.totalorder %s248, 0
      %s251 = sadd.s32 %s250, 1
      %s252 = scalar_select %p249, %s250, %s251
      %p255 = pneg %p249
      %p256 = scmp.eq.s32.totalorder %s17, 3
      %p257 = por %p255, %p256
      %p258 = scmp.ne.s32.totalorder %s250, %s253
      %p259 = scmp.eq.s32.totalorder %s17, 0
      %p260 = por %p258, %p259
      %p261 = scmp.ne.s32.totalorder %s250, %s253
      %p262 = scmp.eq.s32.totalorder %s22, 3
      %p263 = por %p261, %p262
      %p264 = scmp.ne.s32.totalorder %s253, %s254
      %p265 = scmp.eq.s32.totalorder %s22, 0
      %p266 = por %p264, %p265
      %p267 = scmp.ne.s32.totalorder %s253, %s254
      %p268 = scmp.eq.s32.totalorder %s23, 3
      %p269 = por %p267, %p268
      %p271 = scmp.ne.s32.totalorder %s254, %s270
      %p272 = scmp.eq.s32.totalorder %s23, 0
      %p273 = por %p271, %p272
      %p274 = scmp.le.s32.totalorder 1, %s17
      %p275 = scmp.lt.s32.totalorder %s17, 5
      %p276 = pnand %p274, %p275
      %p277 = pneg %p276
      // Predicated region
      $region9: #{finetune_vci_counts_decoder_forward.4} parent=5 // pred_check
        _
      $region10: #{finetune_vci_counts_decoder_forward.4} parent=5 // pred_check_branch
        %279 = sbr.rel (%p276) target = $region12
      $region11: #{finetune_vci_counts_decoder_forward.4} parent=5 // pred_region
        %s280 = ssub.s32 %s17, 1
        // Predicated region
        $region13: #{finetune_vci_counts_decoder_forward.4} parent=11 // pred_check
          %p281 = pneg %p102
        $region14: #{finetune_vci_counts_decoder_forward.4} parent=11 // pred_check_branch
          %283 = sbr.rel (%p281) target = $region16
        $region15: #{finetune_vci_counts_decoder_forward.4} parent=11 // pred_region
          _
        $region16: #{finetune_vci_counts_decoder_forward.4} parent=11 // pred_fallthru
          _
        // Predicated region
        $region17: #{finetune_vci_counts_decoder_forward.4} parent=11 // pred_check
          %p284 = pneg %p123
        $region18: #{finetune_vci_counts_decoder_forward.4} parent=11 // pred_check_branch
          %286 = sbr.rel (%p284) target = $region20
        $region19: #{finetune_vci_counts_decoder_forward.4} parent=11 // pred_region
          _
        $region20: #{finetune_vci_counts_decoder_forward.4} parent=11 // pred_fallthru
          _
        // Predicated region
        $region21: #{finetune_vci_counts_decoder_forward.4} parent=11 // pred_check
          %p287 = pneg %p144
        $region22: #{finetune_vci_counts_decoder_forward.4} parent=11 // pred_check_branch
          %289 = sbr.rel (%p287) target = $region24
        $region23: #{finetune_vci_counts_decoder_forward.4} parent=11 // pred_region
          _
        $region24: #{finetune_vci_counts_decoder_forward.4} parent=11 // pred_fallthru
          _
        // Predicated region
        $region25: #{finetune_vci_counts_decoder_forward.4} parent=11 // pred_check
          %p290 = pneg %p191
        $region26: #{finetune_vci_counts_decoder_forward.4} parent=11 // pred_check_branch
          %292 = sbr.rel (%p290) target = $region28
        $region27: #{finetune_vci_counts_decoder_forward.4} parent=11 // pred_region
          _
        $region28: #{finetune_vci_counts_decoder_forward.4} parent=11 // pred_fallthru
          _
        // Predicated region
        $region29: #{finetune_vci_counts_decoder_forward.4} parent=11 // pred_check
          %p293 = pneg %p212
        $region30: #{finetune_vci_counts_decoder_forward.4} parent=11 // pred_check_branch
          %295 = sbr.rel (%p293) target = $region32
        $region31: #{finetune_vci_counts_decoder_forward.4} parent=11 // pred_region
          _
        $region32: #{finetune_vci_counts_decoder_forward.4} parent=11 // pred_fallthru
          _
      $region12: #{finetune_vci_counts_decoder_forward.4} parent=5 // pred_fallthru
        _
      %p296 = scmp.lt.s32.totalorder %s17, 4
      // Predicated region
      $region33: #{finetune_vci_counts_decoder_forward.4} parent=5 // pred_check
        %p297 = pneg %p296
      $region34: #{finetune_vci_counts_decoder_forward.4} parent=5 // pred_check_branch
        %299 = sbr.rel (%p297) target = $region36
      $region35: #{finetune_vci_counts_decoder_forward.4} parent=5 // pred_region
        // Predicated region
        $region37: #{finetune_vci_counts_decoder_forward.4} parent=35 // pred_check
          %p300 = pneg %p49
        $region38: #{finetune_vci_counts_decoder_forward.4} parent=35 // pred_check_branch
          %302 = sbr.rel (%p300) target = $region40
        $region39: #{finetune_vci_counts_decoder_forward.4} parent=35 // pred_region
          %p303 = scmp.lt.s32.totalorder %s24, 1
          %s304 = scalar_select %p303, %s24, 1
          %s305 = smul.addr %s304, 8
          %s306 = smul.addr %s305, 8
          %s307 = scalar_lea.vmem %s0, %s306
        $region40: #{finetune_vci_counts_decoder_forward.4} parent=35 // pred_fallthru
          _
        // Predicated region
        $region41: #{finetune_vci_counts_decoder_forward.4} parent=35 // pred_check
          %p308 = pneg %p75
        $region42: #{finetune_vci_counts_decoder_forward.4} parent=35 // pred_check_branch
          %310 = sbr.rel (%p308) target = $region44
        $region43: #{finetune_vci_counts_decoder_forward.4} parent=35 // pred_region
          %s311 = sand.u32 %s65, 1
          %s312 = sand.u32 %s65, 1
          %s313 = smul.addr %s312, 16
          %s314 = scalar_lea.vmem [#allocation4], %s313
          %s315 = smul.addr %s25, 4
          %s316 = scalar_lea.vmem %s1, %s315
          // Predicated region
          $region45: #{finetune_vci_counts_decoder_forward.4} parent=43 // pred_check
            _
          $region46: #{finetune_vci_counts_decoder_forward.4} parent=43 // pred_check_branch
            %318 = sbr.rel (0) target = $region48
          $region47: #{finetune_vci_counts_decoder_forward.4} parent=43 // pred_region
            // Predicated region
            $region49: #{finetune_vci_counts_decoder_forward.4} parent=47 // pred_check
              _
            $region50: #{finetune_vci_counts_decoder_forward.4} parent=47 // pred_check_branch
              %320 = sbr.rel target = $region52
            $region51: #{finetune_vci_counts_decoder_forward.4} parent=47 // pred_region
              // Predicated region
              $region64: #{finetune_vci_counts_decoder_forward.4} parent=51 // pred_check
                _
              $region65: #{finetune_vci_counts_decoder_forward.4} parent=51 // pred_check_branch
                %341 = sbr.rel (0) target = $region67
              $region66: #{finetune_vci_counts_decoder_forward.4} parent=51 // pred_region
                loop: start=0, step=1, limit=1
                $region68: #{finetune_vci_counts_decoder_forward.4} parent=66 // loop_pre_header
                  _
                $region69: #{finetune_vci_counts_decoder_forward.4} parent=66 // loop_header
                  %s343 = sphi 0, %s347
                  %p344 = scmp.ge.s32.totalorder %s343, 1
                  %s348 = sphi %s316, %s316
                  %s349 = sphi %s314, %s314
                $region70: #{finetune_vci_counts_decoder_forward.4} parent=66 // loop_header_branch
                  %346 = sbr.rel (%p344) target = $region74
                $region71: #{finetune_vci_counts_decoder_forward.4} parent=66 // loop_body
                  _
                $region72: #{finetune_vci_counts_decoder_forward.4} parent=66 // loop_footer
                  %s347 = sadd.s32 1, %s343
                $region73: #{finetune_vci_counts_decoder_forward.4} parent=66 // loop_footer_branch
                  %342 = sbr.rel target = $region69
                $region74: #{finetune_vci_counts_decoder_forward.4} parent=66 // loop_exit
                  _
                loop: start=0, step=1, limit=1
                $region75: #{finetune_vci_counts_decoder_forward.4} parent=66 // loop_pre_header
                  _
                $region76: #{finetune_vci_counts_decoder_forward.4} parent=66 // loop_header
                  %s352 = sphi 0, %s356
                  %p353 = scmp.ge.s32.totalorder %s352, 1
                  %s357 = sphi %s316, %s316
                  %s358 = sphi %s314, %s314
                $region77: #{finetune_vci_counts_decoder_forward.4} parent=66 // loop_header_branch
                  %355 = sbr.rel (%p353) target = $region81
                $region78: #{finetune_vci_counts_decoder_forward.4} parent=66 // loop_body
                  %v359 = vld [vmem:[%s357] sm:$0xf]
                  %360 = vst [vmem:[%s358] sm:$0xf] %v359
                  %v361 = vld [vmem:[%s357 + $0x8] sm:$0xf]
                  %362 = vst [vmem:[%s358 + $0x4] sm:$0xf] %v361
                  %v363 = vld [vmem:[%s357 + $0x10] sm:$0xf]
                  %364 = vst [vmem:[%s358 + $0x8] sm:$0xf] %v363
                  %v365 = vld [vmem:[%s357 + $0x18] sm:$0xf]
                  %366 = vst [vmem:[%s358 + $0xc] sm:$0xf] %v365
                $region79: #{finetune_vci_counts_decoder_forward.4} parent=66 // loop_footer
                  %s356 = sadd.s32 1, %s352
                $region80: #{finetune_vci_counts_decoder_forward.4} parent=66 // loop_footer_branch
                  %351 = sbr.rel target = $region76
                $region81: #{finetune_vci_counts_decoder_forward.4} parent=66 // loop_exit
                  _
              $region67: #{finetune_vci_counts_decoder_forward.4} parent=51 // pred_fallthru
                _
            $region52: #{finetune_vci_counts_decoder_forward.4} parent=47 // pred_fallthru
              _
            // Predicated region
            $region53: #{finetune_vci_counts_decoder_forward.4} parent=47 // pred_check
              _
            $region54: #{finetune_vci_counts_decoder_forward.4} parent=47 // pred_check_branch
              %322 = sbr.rel (0) target = $region56
            $region55: #{finetune_vci_counts_decoder_forward.4} parent=47 // pred_region
              loop: start=0, step=1, limit=1
              $region57: #{finetune_vci_counts_decoder_forward.4} parent=55 // loop_pre_header
                _
              $region58: #{finetune_vci_counts_decoder_forward.4} parent=55 // loop_header
                %s325 = sphi 0, %s329
                %p326 = scmp.ge.s32.totalorder %s325, 1
                %s330 = sphi %s316, %s316
                %s331 = sphi %s314, %s314
              $region59: #{finetune_vci_counts_decoder_forward.4} parent=55 // loop_header_branch
                %328 = sbr.rel (%p326) target = $region63
              $region60: #{finetune_vci_counts_decoder_forward.4} parent=55 // loop_body
                %v332 = vld [vmem:[%s330] sm:$0xf]
                %333 = vst [vmem:[%s331] sm:$0xf] %v332
                %v334 = vld [vmem:[%s330 + $0x8] sm:$0xf]
                %335 = vst [vmem:[%s331 + $0x4] sm:$0xf] %v334
                %v336 = vld [vmem:[%s330 + $0x10] sm:$0xf]
                %337 = vst [vmem:[%s331 + $0x8] sm:$0xf] %v336
                %v338 = vld [vmem:[%s330 + $0x18] sm:$0xf]
                %339 = vst [vmem:[%s331 + $0xc] sm:$0xf] %v338
              $region61: #{finetune_vci_counts_decoder_forward.4} parent=55 // loop_footer
                %s329 = sadd.s32 1, %s325
              $region62: #{finetune_vci_counts_decoder_forward.4} parent=55 // loop_footer_branch
                %324 = sbr.rel target = $region58
              $region63: #{finetune_vci_counts_decoder_forward.4} parent=55 // loop_exit
                _
            $region56: #{finetune_vci_counts_decoder_forward.4} parent=47 // pred_fallthru
              _
          $region48: #{finetune_vci_counts_decoder_forward.4} parent=43 // pred_fallthru
            _
          %367 = vnop
        $region44: #{finetune_vci_counts_decoder_forward.4} parent=35 // pred_fallthru
          _
        // Predicated region
        $region82: #{finetune_vci_counts_decoder_forward.4} parent=35 // pred_check
          %p368 = pneg %p164
        $region83: #{finetune_vci_counts_decoder_forward.4} parent=35 // pred_check_branch
          %370 = sbr.rel (%p368) target = $region85
        $region84: #{finetune_vci_counts_decoder_forward.4} parent=35 // pred_region
          %s371 = smul.u32 16, %s25
          %p372 = scmp.lt.s32.totalorder %s371, 31
          %s373 = scalar_select %p372, %s371, 31
          %s374 = smul.addr %s373, 4
          %s375 = scalar_lea.vmem %s5, %s374
          %s376 = smul.u32 16, %s25
        $region85: #{finetune_vci_counts_decoder_forward.4} parent=35 // pred_fallthru
          _
      $region36: #{finetune_vci_counts_decoder_forward.4} parent=5 // pred_fallthru
        _
      %p377 = scmp.le.s32.totalorder 1, %s17
      %p378 = scmp.lt.s32.totalorder %s17, 5
      %p379 = pnand %p377, %p378
      %p380 = pneg %p379
      // Predicated region
      $region86: #{finetune_vci_counts_decoder_forward.4} parent=5 // pred_check
        _
      $region87: #{finetune_vci_counts_decoder_forward.4} parent=5 // pred_check_branch
        %382 = sbr.rel (%p379) target = $region89
      $region88: #{finetune_vci_counts_decoder_forward.4} parent=5 // pred_region
        %s383 = ssub.s32 %s17, 1
        %s384 = sand.u32 %s68, 1
        %s385 = sand.u32 %s68, 1
        %s386 = smul.addr %s385, 16
        %s387 = scalar_lea.vmem [#allocation4], %s386
        // Predicated region
        $region90: #{finetune_vci_counts_decoder_forward.4} parent=88 // pred_check
          %p388 = pneg %p81
        $region91: #{finetune_vci_counts_decoder_forward.4} parent=88 // pred_check_branch
          %390 = sbr.rel (%p388) target = $region93
        $region92: #{finetune_vci_counts_decoder_forward.4} parent=88 // pred_region
          _
        $region93: #{finetune_vci_counts_decoder_forward.4} parent=88 // pred_fallthru
          _
        %p391 = scmp.lt.s32.totalorder %s26, 1
        %s392 = scalar_select %p391, %s26, 1
        %s393 = smul.addr %s392, 8
        %s394 = smul.addr %s393, 8
        %s395 = scalar_lea.vmem %s0, %s394
        %p396 = pneg %p55
        %p397 = pneg %p52
        %s398 = sand.u32 %s68, 1
        %s399 = sand.u32 %s68, 1
        %s400 = smul.addr %s399, 16
        %s401 = scalar_lea.vmem [#allocation4], %s400
        %p402 = pneg %p81
        %p403 = pneg %p78
        %p404 = pneg %p102
        %p405 = pneg %p99
        %p406 = pneg %p123
        %p407 = pneg %p120
        %p408 = pneg %p144
        %p409 = pneg %p141
        %s410 = smul.u32 16, %s27
        %p411 = scmp.lt.s32.totalorder %s410, 31
        %s412 = scalar_select %p411, %s410, 31
        %s413 = smul.addr %s412, 4
        %s414 = scalar_lea.vmem %s5, %s413
        %p415 = pneg %p170
        %p416 = pneg %p167
        %p417 = pneg %p191
        %p418 = pneg %p188
        %p419 = pneg %p212
        %p420 = pneg %p209
        %p421 = pneg %p240
        %p422 = pneg %p237
        %p423 = scmp.lt.s32.totalorder %s26, 1
        %s424 = scalar_select %p423, %s26, 1
        %p425 = scmp.lt.s32.totalorder %s27, 1
        %s426 = scalar_select %p425, %s27, 1
        %s427 = smul.addr %s424, 2
        %s428 = sadd.s32 %s426, %s427
        %s429 = smul.addr %s428, 8
        %s430 = scalar_lea.vmem %s8, %s429
        %p431 = pneg %p266
        %p432 = pneg %p263
        %p433 = scmp.lt.s32.totalorder %s26, 1
        %s434 = scalar_select %p433, %s26, 1
        %s435 = smul.addr %s434, 8
        %s436 = scalar_lea.vmem %s9, %s435
        %p437 = scmp.lt.s32.totalorder %s26, 1
        %s438 = scalar_select %p437, %s26, 1
        %s439 = smul.addr %s438, 8
        %s440 = smul.addr %s439, 8
        %s441 = scalar_lea.vmem %s0, %s440
        %s442 = smul.u32 16, %s27
        %p443 = scmp.lt.s32.totalorder %s442, 31
        %s444 = scalar_select %p443, %s442, 31
        %s445 = smul.addr %s444, 4
        %s446 = scalar_lea.vmem %s5, %s445
        %s447 = smul.u32 16, %s27
        %p448 = scmp.lt.s32.totalorder %s26, 1
        %s449 = scalar_select %p448, %s26, 1
        %p450 = scmp.lt.s32.totalorder %s27, 1
        %s451 = scalar_select %p450, %s27, 1
        %s452 = smul.addr %s449, 2
        %s453 = sadd.s32 %s451, %s452
        %s454 = smul.addr %s453, 8
        %s455 = scalar_lea.vmem %s8, %s454
        %p456 = scmp.lt.s32.totalorder %s26, 1
        %s457 = scalar_select %p456, %s26, 1
        %s458 = smul.addr %s457, 8
        %s459 = scalar_lea.vmem %s9, %s458
        %v461 = vld [vmem:[%s2] sm:$0xf]
        %v462 = vld [vmem:[%s2 + $0x4] sm:$0xf]
        %v463 = vld [vmem:[%s2 + $0x8] sm:$0xf]
        %v464 = vld [vmem:[%s2 + $0xc] sm:$0xf]
        %v465 = vld [vmem:[%s2 + $0x10] sm:$0xf]
        %v466 = vld [vmem:[%s2 + $0x14] sm:$0xf]
        %v467 = vld [vmem:[%s2 + $0x18] sm:$0xf]
        %v468 = vld [vmem:[%s2 + $0x1c] sm:$0xf]
        %v469 = vld [vmem:[%s387] sm:$0xf]
        %v470 = vld [vmem:[%s387 + $0x4] sm:$0xf]
        %v471 = vld [vmem:[%s387 + $0x8] sm:$0xf]
        %v472 = vld [vmem:[%s387 + $0xc] sm:$0xf]
        %v473 = vld [vmem:[%s3] sm:$0xff]
        %v474 = vld [vmem:[%s3 + $0x8] sm:$0xff]
        %v475 = vld [vmem:[%s3 + $0x10] sm:$0xff]
        %v476 = vld [vmem:[%s3 + $0x18] sm:$0xff]
        %v477 = vld [vmem:[%s3 + $0x20] sm:$0xff]
        %v478 = vld [vmem:[%s3 + $0x28] sm:$0xff]
        %v479 = vld [vmem:[%s3 + $0x30] sm:$0xff]
        %v480 = vld [vmem:[%s3 + $0x38] sm:$0xff]
        %482 = vset.pattern.permute.xlu0 0
        %483 = vperm.xlu0 %482, %v473
        %v484 = vpop.permute.xlu0 %483
        %487 = vset.pattern.permute.xlu0 0
        %488 = vperm.xlu0 %487, %v474
        %v489 = vpop.permute.xlu0 %488
        %492 = vset.pattern.permute.xlu0 0
        %493 = vperm.xlu0 %492, %v475
        %v494 = vpop.permute.xlu0 %493
        %497 = vset.pattern.permute.xlu0 0
        %498 = vperm.xlu0 %497, %v476
        %v499 = vpop.permute.xlu0 %498
        %502 = vset.pattern.permute.xlu0 0
        %503 = vperm.xlu0 %502, %v477
        %v504 = vpop.permute.xlu0 %503
        %507 = vset.pattern.permute.xlu0 0
        %508 = vperm.xlu0 %507, %v478
        %v509 = vpop.permute.xlu0 %508
        %512 = vset.pattern.permute.xlu0 0
        %513 = vperm.xlu0 %512, %v479
        %v514 = vpop.permute.xlu0 %513
        %517 = vset.pattern.permute.xlu0 0
        %518 = vperm.xlu0 %517, %v480
        %v519 = vpop.permute.xlu0 %518
        %v529 = vunpack.c.l.b16 %v461
        %v530 = vunpack.c.l.b16 %v462
        %v531 = vunpack.c.l.b16 %v463
        %v532 = vunpack.c.l.b16 %v464
        %v533 = vunpack.c.l.b16 %v465
        %v534 = vunpack.c.l.b16 %v466
        %v535 = vunpack.c.l.b16 %v467
        %v536 = vunpack.c.l.b16 %v468
        %v537 = vpack.c.b16 %v530, %v529
        %v538 = vpack.c.b16 %v532, %v531
        %v539 = vpack.c.b16 %v534, %v533
        %v540 = vpack.c.b16 %v536, %v535
        %v545 = vunpack.c.l.b16 %v469
        %v546 = vunpack.c.l.b16 %v470
        %v547 = vunpack.c.l.b16 %v471
        %v548 = vunpack.c.l.b16 %v472
        %v549 = vpack.c.b16 %v546, %v545
        %v550 = vpack.c.b16 %v548, %v547
        %vm553 = vcmask 261120
        %v555 = vsel %vm553, %v537, 0
        %v558 = vsel %vm553, %v538, 0
        %v561 = vsel %vm553, %v539, 0
        %v564 = vsel %vm553, %v540, 0
        %566 = vmatprep.subr.bf16.mxu0 0
        %567 = vmatpush1.bf16.msra.mxu0 %v549
        %568 = vmatprep.subr.bf16.mxu0 0
        %569 = vmatpush1.bf16.msra.mxu0 %v550
        %570 = vmatprep.subr.bf16.mxu0 0
        %571 = vmatpush1.bf16.msra.mxu0 0
        %572 = vmatprep.subr.bf16.mxu0 0
        %573 = vmatpush1.bf16.msra.mxu0 0
        %574 = vmatprep.subr.bf16.mxu0 0
        %575 = vmatpush1.bf16.msra.mxu0 0
        %576 = vmatprep.subr.bf16.mxu0 0
        %577 = vmatpush1.bf16.msra.mxu0 0
        %578 = vmatprep.subr.bf16.mxu0 0
        %579 = vmatpush1.bf16.msra.mxu0 0
        %580 = vmatprep.subr.bf16.mxu0 0
        %581 = vmatpush1.bf16.msra.mxu0 0
        %582 = vmatprep.subr.bf16.mxu0 0
        %583 = vmatpush1.bf16.msra.mxu0 0
        %584 = vmatprep.subr.bf16.mxu0 0
        %585 = vmatpush1.bf16.msra.mxu0 0
        %586 = vmatprep.subr.bf16.mxu0 0
        %587 = vmatpush1.bf16.msra.mxu0 0
        %588 = vmatprep.subr.bf16.mxu0 0
        %589 = vmatpush1.bf16.msra.mxu0 0
        %590 = vmatprep.subr.bf16.mxu0 0
        %591 = vmatpush1.bf16.msra.mxu0 0
        %592 = vmatprep.subr.bf16.mxu0 0
        %593 = vmatpush1.bf16.msra.mxu0 0
        %594 = vmatprep.subr.bf16.mxu0 0
        %595 = vmatpush1.bf16.msra.mxu0 0
        %596 = vmatprep.subr.bf16.mxu0 0
        %597 = vmatpush1.bf16.msra.mxu0 0
        %598 = vmatprep.mubr.bf16.mxu0 0
        %599 = vmatmul.mubr.bf16.gmra.mrb[0].mxu0 %v555
        %v600 = vpop.f32.mrb[0].mxu0
        %v601 = vadd.f32 %v484, %v600
        %v602 = vpop.f32.mrb[0].mxu0
        %v603 = vpop.f32.mrb[0].mxu0
        %v604 = vadd.f32 %v489, %v603
        %v605 = vpop.f32.mrb[0].mxu0
        %606 = vmatprep.mubr.bf16.mxu0 0
        %607 = vmatmul.mubr.bf16.gmra.mrb[0].mxu0 %v558
        %v608 = vpop.f32.mrb[0].mxu0
        %v609 = vadd.f32 %v494, %v608
        %v610 = vpop.f32.mrb[0].mxu0
        %v611 = vpop.f32.mrb[0].mxu0
        %v612 = vadd.f32 %v499, %v611
        %v613 = vpop.f32.mrb[0].mxu0
        %614 = vmatprep.mubr.bf16.mxu0 0
        %615 = vmatmul.mubr.bf16.gmra.mrb[0].mxu0 %v561
        %v616 = vpop.f32.mrb[0].mxu0
        %v617 = vadd.f32 %v504, %v616
        %v618 = vpop.f32.mrb[0].mxu0
        %v619 = vpop.f32.mrb[0].mxu0
        %v620 = vadd.f32 %v509, %v619
        %v621 = vpop.f32.mrb[0].mxu0
        %622 = vmatprep.mubr.bf16.mxu0 0
        %623 = vmatmul.mubr.bf16.gmra.mrb[0].mxu0 %v564
        %v624 = vpop.f32.mrb[0].mxu0
        %v625 = vadd.f32 %v514, %v624
        %v626 = vpop.f32.mrb[0].mxu0
        %v627 = vpop.f32.mrb[0].mxu0
        %v628 = vadd.f32 %v519, %v627
        %v629 = vpop.f32.mrb[0].mxu0
        %630 = vdwg.mxu0
        %v631 = vld [vmem:[%s441] sm:$0xff]
        %v632 = vld [vmem:[%s441 + $0x8] sm:$0xff]
        %v633 = vld [vmem:[%s441 + $0x10] sm:$0xff]
        %v634 = vld [vmem:[%s441 + $0x18] sm:$0xff]
        %v635 = vld [vmem:[%s441 + $0x20] sm:$0xff]
        %v636 = vld [vmem:[%s441 + $0x28] sm:$0xff]
        %v637 = vld [vmem:[%s441 + $0x30] sm:$0xff]
        %v638 = vld [vmem:[%s441 + $0x38] sm:$0xff]
        %640 = vset.pattern.permute.xlu0 0
        %641 = vperm.xlu0 %640, %v631
        %v642 = vpop.permute.xlu0 %641
        %645 = vset.pattern.permute.xlu0 0
        %646 = vperm.xlu0 %645, %v632
        %v647 = vpop.permute.xlu0 %646
        %650 = vset.pattern.permute.xlu0 0
        %651 = vperm.xlu0 %650, %v633
        %v652 = vpop.permute.xlu0 %651
        %655 = vset.pattern.permute.xlu0 0
        %656 = vperm.xlu0 %655, %v634
        %v657 = vpop.permute.xlu0 %656
        %660 = vset.pattern.permute.xlu0 0
        %661 = vperm.xlu0 %660, %v635
        %v662 = vpop.permute.xlu0 %661
        %665 = vset.pattern.permute.xlu0 0
        %666 = vperm.xlu0 %665, %v636
        %v667 = vpop.permute.xlu0 %666
        %670 = vset.pattern.permute.xlu0 0
        %671 = vperm.xlu0 %670, %v637
        %v672 = vpop.permute.xlu0 %671
        %675 = vset.pattern.permute.xlu0 0
        %676 = vperm.xlu0 %675, %v638
        %v677 = vpop.permute.xlu0 %676
        %v679 = vadd.f32 %v642, %v601
        %v680 = vadd.f32 %v647, %v604
        %v681 = vadd.f32 %v652, %v609
        %v682 = vadd.f32 %v657, %v612
        %v683 = vadd.f32 %v662, %v617
        %v684 = vadd.f32 %v667, %v620
        %v685 = vadd.f32 %v672, %v625
        %v686 = vadd.f32 %v677, %v628
        %v687 = vmax.f32 %v679, 0.0
        %v688 = vmax.f32 %v680, 0.0
        %v689 = vmax.f32 %v681, 0.0
        %v690 = vmax.f32 %v682, 0.0
        %v691 = vmax.f32 %v683, 0.0
        %v692 = vmax.f32 %v684, 0.0
        %v693 = vmax.f32 %v685, 0.0
        %v694 = vmax.f32 %v686, 0.0
        %v695 = vpack.c.bf16 %v688, %v687
        %v696 = vpack.c.bf16 %v690, %v689
        %v697 = vpack.c.bf16 %v692, %v691
        %v698 = vpack.c.bf16 %v694, %v693
        %699 = vst [vmem:[#allocation2] sm:$0xff] %v695
        %700 = vst [vmem:[#allocation2 + $0x8] sm:$0xff] %v696
        %701 = vst [vmem:[#allocation2 + $0x10] sm:$0xff] %v697
        %702 = vst [vmem:[#allocation2 + $0x18] sm:$0xff] %v698
        %703 = vset.pattern.permute.xlu0 1
        %704 = vperm.xlu0 %703, %v631
        %v705 = vpop.permute.xlu0 %704
        %707 = vset.pattern.permute.xlu0 1
        %708 = vperm.xlu0 %707, %v632
        %v709 = vpop.permute.xlu0 %708
        %711 = vset.pattern.permute.xlu0 1
        %712 = vperm.xlu0 %711, %v633
        %v713 = vpop.permute.xlu0 %712
        %715 = vset.pattern.permute.xlu0 1
        %716 = vperm.xlu0 %715, %v634
        %v717 = vpop.permute.xlu0 %716
        %719 = vset.pattern.permute.xlu0 1
        %720 = vperm.xlu0 %719, %v635
        %v721 = vpop.permute.xlu0 %720
        %723 = vset.pattern.permute.xlu0 1
        %724 = vperm.xlu0 %723, %v636
        %v725 = vpop.permute.xlu0 %724
        %727 = vset.pattern.permute.xlu0 1
        %728 = vperm.xlu0 %727, %v637
        %v729 = vpop.permute.xlu0 %728
        %731 = vset.pattern.permute.xlu0 1
        %732 = vperm.xlu0 %731, %v638
        %v733 = vpop.permute.xlu0 %732
        %v735 = vadd.f32 %v705, %v601
        %v736 = vadd.f32 %v709, %v604
        %v737 = vadd.f32 %v713, %v609
        %v738 = vadd.f32 %v717, %v612
        %v739 = vadd.f32 %v721, %v617
        %v740 = vadd.f32 %v725, %v620
        %v741 = vadd.f32 %v729, %v625
        %v742 = vadd.f32 %v733, %v628
        %v743 = vmax.f32 %v735, 0.0
        %v744 = vmax.f32 %v736, 0.0
        %v745 = vmax.f32 %v737, 0.0
        %v746 = vmax.f32 %v738, 0.0
        %v747 = vmax.f32 %v739, 0.0
        %v748 = vmax.f32 %v740, 0.0
        %v749 = vmax.f32 %v741, 0.0
        %v750 = vmax.f32 %v742, 0.0
        %v751 = vpack.c.bf16 %v744, %v743
        %v752 = vpack.c.bf16 %v746, %v745
        %v753 = vpack.c.bf16 %v748, %v747
        %v754 = vpack.c.bf16 %v750, %v749
        %755 = vst [vmem:[#allocation2 + $0x20] sm:$0xff] %v751
        %756 = vst [vmem:[#allocation2 + $0x28] sm:$0xff] %v752
        %757 = vst [vmem:[#allocation2 + $0x30] sm:$0xff] %v753
        %758 = vst [vmem:[#allocation2 + $0x38] sm:$0xff] %v754
        %759 = vset.pattern.permute.xlu0 2
        %760 = vperm.xlu0 %759, %v631
        %v761 = vpop.permute.xlu0 %760
        %763 = vset.pattern.permute.xlu0 2
        %764 = vperm.xlu0 %763, %v632
        %v765 = vpop.permute.xlu0 %764
        %767 = vset.pattern.permute.xlu0 2
        %768 = vperm.xlu0 %767, %v633
        %v769 = vpop.permute.xlu0 %768
        %771 = vset.pattern.permute.xlu0 2
        %772 = vperm.xlu0 %771, %v634
        %v773 = vpop.permute.xlu0 %772
        %775 = vset.pattern.permute.xlu0 2
        %776 = vperm.xlu0 %775, %v635
        %v777 = vpop.permute.xlu0 %776
        %779 = vset.pattern.permute.xlu0 2
        %780 = vperm.xlu0 %779, %v636
        %v781 = vpop.permute.xlu0 %780
        %783 = vset.pattern.permute.xlu0 2
        %784 = vperm.xlu0 %783, %v637
        %v785 = vpop.permute.xlu0 %784
        %787 = vset.pattern.permute.xlu0 2
        %788 = vperm.xlu0 %787, %v638
        %v789 = vpop.permute.xlu0 %788
        %v791 = vadd.f32 %v761, %v601
        %v792 = vadd.f32 %v765, %v604
        %v793 = vadd.f32 %v769, %v609
        %v794 = vadd.f32 %v773, %v612
        %v795 = vadd.f32 %v777, %v617
        %v796 = vadd.f32 %v781, %v620
        %v797 = vadd.f32 %v785, %v625
        %v798 = vadd.f32 %v789, %v628
        %v799 = vmax.f32 %v791, 0.0
        %v800 = vmax.f32 %v792, 0.0
        %v801 = vmax.f32 %v793, 0.0
        %v802 = vmax.f32 %v794, 0.0
        %v803 = vmax.f32 %v795, 0.0
        %v804 = vmax.f32 %v796, 0.0
        %v805 = vmax.f32 %v797, 0.0
        %v806 = vmax.f32 %v798, 0.0
        %v807 = vpack.c.bf16 %v800, %v799
        %v808 = vpack.c.bf16 %v802, %v801
        %v809 = vpack.c.bf16 %v804, %v803
        %v810 = vpack.c.bf16 %v806, %v805
        %811 = vst [vmem:[#allocation2 + $0x40] sm:$0xff] %v807
        %812 = vst [vmem:[#allocation2 + $0x48] sm:$0xff] %v808
        %813 = vst [vmem:[#allocation2 + $0x50] sm:$0xff] %v809
        %814 = vst [vmem:[#allocation2 + $0x58] sm:$0xff] %v810
        %815 = vset.pattern.permute.xlu0 3
        %816 = vperm.xlu0 %815, %v631
        %v817 = vpop.permute.xlu0 %816
        %819 = vset.pattern.permute.xlu0 3
        %820 = vperm.xlu0 %819, %v632
        %v821 = vpop.permute.xlu0 %820
        %823 = vset.pattern.permute.xlu0 3
        %824 = vperm.xlu0 %823, %v633
        %v825 = vpop.permute.xlu0 %824
        %827 = vset.pattern.permute.xlu0 3
        %828 = vperm.xlu0 %827, %v634
        %v829 = vpop.permute.xlu0 %828
        %831 = vset.pattern.permute.xlu0 3
        %832 = vperm.xlu0 %831, %v635
        %v833 = vpop.permute.xlu0 %832
        %835 = vset.pattern.permute.xlu0 3
        %836 = vperm.xlu0 %835, %v636
        %v837 = vpop.permute.xlu0 %836
        %839 = vset.pattern.permute.xlu0 3
        %840 = vperm.xlu0 %839, %v637
        %v841 = vpop.permute.xlu0 %840
        %843 = vset.pattern.permute.xlu0 3
        %844 = vperm.xlu0 %843, %v638
        %v845 = vpop.permute.xlu0 %844
        %v847 = vadd.f32 %v817, %v601
        %v848 = vadd.f32 %v821, %v604
        %v849 = vadd.f32 %v825, %v609
        %v850 = vadd.f32 %v829, %v612
        %v851 = vadd.f32 %v833, %v617
        %v852 = vadd.f32 %v837, %v620
        %v853 = vadd.f32 %v841, %v625
        %v854 = vadd.f32 %v845, %v628
        %v855 = vmax.f32 %v847, 0.0
        %v856 = vmax.f32 %v848, 0.0
        %v857 = vmax.f32 %v849, 0.0
        %v858 = vmax.f32 %v850, 0.0
        %v859 = vmax.f32 %v851, 0.0
        %v860 = vmax.f32 %v852, 0.0
        %v861 = vmax.f32 %v853, 0.0
        %v862 = vmax.f32 %v854, 0.0
        %v863 = vpack.c.bf16 %v856, %v855
        %v864 = vpack.c.bf16 %v858, %v857
        %v865 = vpack.c.bf16 %v860, %v859
        %v866 = vpack.c.bf16 %v862, %v861
        %867 = vst [vmem:[#allocation2 + $0x60] sm:$0xff] %v863
        %868 = vst [vmem:[#allocation2 + $0x68] sm:$0xff] %v864
        %869 = vst [vmem:[#allocation2 + $0x70] sm:$0xff] %v865
        %870 = vst [vmem:[#allocation2 + $0x78] sm:$0xff] %v866
        %871 = vset.pattern.permute.xlu0 4
        %872 = vperm.xlu0 %871, %v631
        %v873 = vpop.permute.xlu0 %872
        %875 = vset.pattern.permute.xlu0 4
        %876 = vperm.xlu0 %875, %v632
        %v877 = vpop.permute.xlu0 %876
        %879 = vset.pattern.permute.xlu0 4
        %880 = vperm.xlu0 %879, %v633
        %v881 = vpop.permute.xlu0 %880
        %883 = vset.pattern.permute.xlu0 4
        %884 = vperm.xlu0 %883, %v634
        %v885 = vpop.permute.xlu0 %884
        %887 = vset.pattern.permute.xlu0 4
        %888 = vperm.xlu0 %887, %v635
        %v889 = vpop.permute.xlu0 %888
        %891 = vset.pattern.permute.xlu0 4
        %892 = vperm.xlu0 %891, %v636
        %v893 = vpop.permute.xlu0 %892
        %895 = vset.pattern.permute.xlu0 4
        %896 = vperm.xlu0 %895, %v637
        %v897 = vpop.permute.xlu0 %896
        %899 = vset.pattern.permute.xlu0 4
        %900 = vperm.xlu0 %899, %v638
        %v901 = vpop.permute.xlu0 %900
        %v903 = vadd.f32 %v873, %v601
        %v904 = vadd.f32 %v877, %v604
        %v905 = vadd.f32 %v881, %v609
        %v906 = vadd.f32 %v885, %v612
        %v907 = vadd.f32 %v889, %v617
        %v908 = vadd.f32 %v893, %v620
        %v909 = vadd.f32 %v897, %v625
        %v910 = vadd.f32 %v901, %v628
        %v911 = vmax.f32 %v903, 0.0
        %v912 = vmax.f32 %v904, 0.0
        %v913 = vmax.f32 %v905, 0.0
        %v914 = vmax.f32 %v906, 0.0
        %v915 = vmax.f32 %v907, 0.0
        %v916 = vmax.f32 %v908, 0.0
        %v917 = vmax.f32 %v909, 0.0
        %v918 = vmax.f32 %v910, 0.0
        %v919 = vpack.c.bf16 %v912, %v911
        %v920 = vpack.c.bf16 %v914, %v913
        %v921 = vpack.c.bf16 %v916, %v915
        %v922 = vpack.c.bf16 %v918, %v917
        %923 = vst [vmem:[#allocation2 + $0x80] sm:$0xff] %v919
        %924 = vst [vmem:[#allocation2 + $0x88] sm:$0xff] %v920
        %925 = vst [vmem:[#allocation2 + $0x90] sm:$0xff] %v921
        %926 = vst [vmem:[#allocation2 + $0x98] sm:$0xff] %v922
        %927 = vset.pattern.permute.xlu0 5
        %928 = vperm.xlu0 %927, %v631
        %v929 = vpop.permute.xlu0 %928
        %931 = vset.pattern.permute.xlu0 5
        %932 = vperm.xlu0 %931, %v632
        %v933 = vpop.permute.xlu0 %932
        %935 = vset.pattern.permute.xlu0 5
        %936 = vperm.xlu0 %935, %v633
        %v937 = vpop.permute.xlu0 %936
        %939 = vset.pattern.permute.xlu0 5
        %940 = vperm.xlu0 %939, %v634
        %v941 = vpop.permute.xlu0 %940
        %943 = vset.pattern.permute.xlu0 5
        %944 = vperm.xlu0 %943, %v635
        %v945 = vpop.permute.xlu0 %944
        %947 = vset.pattern.permute.xlu0 5
        %948 = vperm.xlu0 %947, %v636
        %v949 = vpop.permute.xlu0 %948
        %951 = vset.pattern.permute.xlu0 5
        %952 = vperm.xlu0 %951, %v637
        %v953 = vpop.permute.xlu0 %952
        %955 = vset.pattern.permute.xlu0 5
        %956 = vperm.xlu0 %955, %v638
        %v957 = vpop.permute.xlu0 %956
        %v959 = vadd.f32 %v929, %v601
        %v960 = vadd.f32 %v933, %v604
        %v961 = vadd.f32 %v937, %v609
        %v962 = vadd.f32 %v941, %v612
        %v963 = vadd.f32 %v945, %v617
        %v964 = vadd.f32 %v949, %v620
        %v965 = vadd.f32 %v953, %v625
        %v966 = vadd.f32 %v957, %v628
        %v967 = vmax.f32 %v959, 0.0
        %v968 = vmax.f32 %v960, 0.0
        %v969 = vmax.f32 %v961, 0.0
        %v970 = vmax.f32 %v962, 0.0
        %v971 = vmax.f32 %v963, 0.0
        %v972 = vmax.f32 %v964, 0.0
        %v973 = vmax.f32 %v965, 0.0
        %v974 = vmax.f32 %v966, 0.0
        %v975 = vpack.c.bf16 %v968, %v967
        %v976 = vpack.c.bf16 %v970, %v969
        %v977 = vpack.c.bf16 %v972, %v971
        %v978 = vpack.c.bf16 %v974, %v973
        %979 = vst [vmem:[#allocation2 + $0xa0] sm:$0xff] %v975
        %980 = vst [vmem:[#allocation2 + $0xa8] sm:$0xff] %v976
        %981 = vst [vmem:[#allocation2 + $0xb0] sm:$0xff] %v977
        %982 = vst [vmem:[#allocation2 + $0xb8] sm:$0xff] %v978
        %983 = vset.pattern.permute.xlu0 6
        %984 = vperm.xlu0 %983, %v631
        %v985 = vpop.permute.xlu0 %984
        %987 = vset.pattern.permute.xlu0 6
        %988 = vperm.xlu0 %987, %v632
        %v989 = vpop.permute.xlu0 %988
        %991 = vset.pattern.permute.xlu0 6
        %992 = vperm.xlu0 %991, %v633
        %v993 = vpop.permute.xlu0 %992
        %995 = vset.pattern.permute.xlu0 6
        %996 = vperm.xlu0 %995, %v634
        %v997 = vpop.permute.xlu0 %996
        %999 = vset.pattern.permute.xlu0 6
        %1000 = vperm.xlu0 %999, %v635
        %v1001 = vpop.permute.xlu0 %1000
        %1003 = vset.pattern.permute.xlu0 6
        %1004 = vperm.xlu0 %1003, %v636
        %v1005 = vpop.permute.xlu0 %1004
        %1007 = vset.pattern.permute.xlu0 6
        %1008 = vperm.xlu0 %1007, %v637
        %v1009 = vpop.permute.xlu0 %1008
        %1011 = vset.pattern.permute.xlu0 6
        %1012 = vperm.xlu0 %1011, %v638
        %v1013 = vpop.permute.xlu0 %1012
        %v1015 = vadd.f32 %v985, %v601
        %v1016 = vadd.f32 %v989, %v604
        %v1017 = vadd.f32 %v993, %v609
        %v1018 = vadd.f32 %v997, %v612
        %v1019 = vadd.f32 %v1001, %v617
        %v1020 = vadd.f32 %v1005, %v620
        %v1021 = vadd.f32 %v1009, %v625
        %v1022 = vadd.f32 %v1013, %v628
        %v1023 = vmax.f32 %v1015, 0.0
        %v1024 = vmax.f32 %v1016, 0.0
        %v1025 = vmax.f32 %v1017, 0.0
        %v1026 = vmax.f32 %v1018, 0.0
        %v1027 = vmax.f32 %v1019, 0.0
        %v1028 = vmax.f32 %v1020, 0.0
        %v1029 = vmax.f32 %v1021, 0.0
        %v1030 = vmax.f32 %v1022, 0.0
        %v1031 = vpack.c.bf16 %v1024, %v1023
        %v1032 = vpack.c.bf16 %v1026, %v1025
        %v1033 = vpack.c.bf16 %v1028, %v1027
        %v1034 = vpack.c.bf16 %v1030, %v1029
        %1035 = vst [vmem:[#allocation2 + $0xc0] sm:$0xff] %v1031
        %1036 = vst [vmem:[#allocation2 + $0xc8] sm:$0xff] %v1032
        %1037 = vst [vmem:[#allocation2 + $0xd0] sm:$0xff] %v1033
        %1038 = vst [vmem:[#allocation2 + $0xd8] sm:$0xff] %v1034
        %1039 = vset.pattern.permute.xlu0 7
        %1040 = vperm.xlu0 %1039, %v631
        %v1041 = vpop.permute.xlu0 %1040
        %1043 = vset.pattern.permute.xlu0 7
        %1044 = vperm.xlu0 %1043, %v632
        %v1045 = vpop.permute.xlu0 %1044
        %1047 = vset.pattern.permute.xlu0 7
        %1048 = vperm.xlu0 %1047, %v633
        %v1049 = vpop.permute.xlu0 %1048
        %1051 = vset.pattern.permute.xlu0 7
        %1052 = vperm.xlu0 %1051, %v634
        %v1053 = vpop.permute.xlu0 %1052
        %1055 = vset.pattern.permute.xlu0 7
        %1056 = vperm.xlu0 %1055, %v635
        %v1057 = vpop.permute.xlu0 %1056
        %1059 = vset.pattern.permute.xlu0 7
        %1060 = vperm.xlu0 %1059, %v636
        %v1061 = vpop.permute.xlu0 %1060
        %1063 = vset.pattern.permute.xlu0 7
        %1064 = vperm.xlu0 %1063, %v637
        %v1065 = vpop.permute.xlu0 %1064
        %1067 = vset.pattern.permute.xlu0 7
        %1068 = vperm.xlu0 %1067, %v638
        %v1069 = vpop.permute.xlu0 %1068
        %v1071 = vadd.f32 %v1041, %v601
        %v1072 = vadd.f32 %v1045, %v604
        %v1073 = vadd.f32 %v1049, %v609
        %v1074 = vadd.f32 %v1053, %v612
        %v1075 = vadd.f32 %v1057, %v617
        %v1076 = vadd.f32 %v1061, %v620
        %v1077 = vadd.f32 %v1065, %v625
        %v1078 = vadd.f32 %v1069, %v628
        %v1079 = vmax.f32 %v1071, 0.0
        %v1080 = vmax.f32 %v1072, 0.0
        %v1081 = vmax.f32 %v1073, 0.0
        %v1082 = vmax.f32 %v1074, 0.0
        %v1083 = vmax.f32 %v1075, 0.0
        %v1084 = vmax.f32 %v1076, 0.0
        %v1085 = vmax.f32 %v1077, 0.0
        %v1086 = vmax.f32 %v1078, 0.0
        %v1087 = vpack.c.bf16 %v1080, %v1079
        %v1088 = vpack.c.bf16 %v1082, %v1081
        %v1089 = vpack.c.bf16 %v1084, %v1083
        %v1090 = vpack.c.bf16 %v1086, %v1085
        %1091 = vst [vmem:[#allocation2 + $0xe0] sm:$0xff] %v1087
        %1092 = vst [vmem:[#allocation2 + $0xe8] sm:$0xff] %v1088
        %1093 = vst [vmem:[#allocation2 + $0xf0] sm:$0xff] %v1089
        %1094 = vst [vmem:[#allocation2 + $0xf8] sm:$0xff] %v1090
        %v1095 = vld [vmem:[%s4] sm:$0xff]
        %v1096 = vld [vmem:[%s4 + $0x8] sm:$0xff]
        %v1097 = vld [vmem:[#allocation2] sm:$0xff]
        %v1098 = vld [vmem:[#allocation2 + $0x8] sm:$0xff]
        %v1099 = vld [vmem:[#allocation2 + $0x10] sm:$0xff]
        %v1100 = vld [vmem:[#allocation2 + $0x18] sm:$0xff]
        %v1101 = vld [vmem:[#allocation2 + $0x20] sm:$0xff]
        %v1102 = vld [vmem:[#allocation2 + $0x28] sm:$0xff]
        %v1103 = vld [vmem:[#allocation2 + $0x30] sm:$0xff]
        %v1104 = vld [vmem:[#allocation2 + $0x38] sm:$0xff]
        %v1105 = vld [vmem:[#allocation2 + $0x40] sm:$0xff]
        %v1106 = vld [vmem:[#allocation2 + $0x48] sm:$0xff]
        %v1107 = vld [vmem:[#allocation2 + $0x50] sm:$0xff]
        %v1108 = vld [vmem:[#allocation2 + $0x58] sm:$0xff]
        %v1109 = vld [vmem:[#allocation2 + $0x60] sm:$0xff]
        %v1110 = vld [vmem:[#allocation2 + $0x68] sm:$0xff]
        %v1111 = vld [vmem:[#allocation2 + $0x70] sm:$0xff]
        %v1112 = vld [vmem:[#allocation2 + $0x78] sm:$0xff]
        %v1113 = vld [vmem:[#allocation2 + $0x80] sm:$0xff]
        %v1114 = vld [vmem:[#allocation2 + $0x88] sm:$0xff]
        %v1115 = vld [vmem:[#allocation2 + $0x90] sm:$0xff]
        %v1116 = vld [vmem:[#allocation2 + $0x98] sm:$0xff]
        %v1117 = vld [vmem:[#allocation2 + $0xa0] sm:$0xff]
        %v1118 = vld [vmem:[#allocation2 + $0xa8] sm:$0xff]
        %v1119 = vld [vmem:[#allocation2 + $0xb0] sm:$0xff]
        %v1120 = vld [vmem:[#allocation2 + $0xb8] sm:$0xff]
        %v1121 = vld [vmem:[#allocation2 + $0xc0] sm:$0xff]
        %v1122 = vld [vmem:[#allocation2 + $0xc8] sm:$0xff]
        %v1123 = vld [vmem:[#allocation2 + $0xd0] sm:$0xff]
        %v1124 = vld [vmem:[#allocation2 + $0xd8] sm:$0xff]
        %v1125 = vld [vmem:[#allocation2 + $0xe0] sm:$0xff]
        %v1126 = vld [vmem:[#allocation2 + $0xe8] sm:$0xff]
        %v1127 = vld [vmem:[#allocation2 + $0xf0] sm:$0xff]
        %v1128 = vld [vmem:[#allocation2 + $0xf8] sm:$0xff]
        %s1129 = sld [smem:[#allocation3]]
        %v1130 = vstv %s1129
        %v1133 = vunpack.c.l.b16 %v1095
        %v1134 = vunpack.c.h.b16 %v1095
        %v1135 = vunpack.c.l.b16 %v1096
        %v1136 = vunpack.c.h.b16 %v1096
        %v1137 = vpack.c.b16 %v1133, %v1133
        %v1138 = vpack.c.b16 %v1134, %v1134
        %v1139 = vpack.c.b16 %v1135, %v1135
        %v1140 = vpack.c.b16 %v1136, %v1136
        %1145 = vmatprep.subr.bf16.mxu0 0
        %1146 = vmatpush1.bf16.msra.mxu0 %v1097
        %1147 = vmatprep.subr.bf16.mxu0 0
        %1148 = vmatpush1.bf16.msra.mxu0 %v1098
        %1149 = vmatprep.subr.bf16.mxu0 0
        %1150 = vmatpush1.bf16.msra.mxu0 %v1099
        %1151 = vmatprep.subr.bf16.mxu0 0
        %1152 = vmatpush1.bf16.msra.mxu0 %v1100
        %1153 = vmatprep.subr.bf16.mxu0 0
        %1154 = vmatpush1.bf16.msra.mxu0 %v1101
        %1155 = vmatprep.subr.bf16.mxu0 0
        %1156 = vmatpush1.bf16.msra.mxu0 %v1102
        %1157 = vmatprep.subr.bf16.mxu0 0
        %1158 = vmatpush1.bf16.msra.mxu0 %v1103
        %1159 = vmatprep.subr.bf16.mxu0 0
        %1160 = vmatpush1.bf16.msra.mxu0 %v1104
        %1161 = vmatprep.subr.bf16.mxu0 0
        %1162 = vmatpush1.bf16.msra.mxu0 %v1105
        %1163 = vmatprep.subr.bf16.mxu0 0
        %1164 = vmatpush1.bf16.msra.mxu0 %v1106
        %1165 = vmatprep.subr.bf16.mxu0 0
        %1166 = vmatpush1.bf16.msra.mxu0 %v1107
        %1167 = vmatprep.subr.bf16.mxu0 0
        %1168 = vmatpush1.bf16.msra.mxu0 %v1108
        %1169 = vmatprep.subr.bf16.mxu0 0
        %1170 = vmatpush1.bf16.msra.mxu0 %v1109
        %1171 = vmatprep.subr.bf16.mxu0 0
        %1172 = vmatpush1.bf16.msra.mxu0 %v1110
        %1173 = vmatprep.subr.bf16.mxu0 0
        %1174 = vmatpush1.bf16.msra.mxu0 %v1111
        %1175 = vmatprep.subr.bf16.mxu0 0
        %1176 = vmatpush1.bf16.msra.mxu0 %v1112
        %1177 = vmatprep.mubr.bf16.mxu0 %v1138
        %1178 = vmatmul.mubr.bf16.gmra.mrb[0].mxu0 %v1137
        %v1179 = vpop.f32.mrb[0].mxu0
        %v1180 = vadd.f32 %v1130, %v1179
        %v1181 = vpop.f32.mrb[0].mxu0
        %v1182 = vpop.f32.mrb[0].mxu0
        %v1183 = vpop.f32.mrb[0].mxu0
        %1184 = vdwg.mxu0
        %1185 = vmatprep.subr.bf16.mxu0 0
        %1186 = vmatpush1.bf16.msra.mxu0 %v1113
        %1187 = vmatprep.subr.bf16.mxu0 0
        %1188 = vmatpush1.bf16.msra.mxu0 %v1114
        %1189 = vmatprep.subr.bf16.mxu0 0
        %1190 = vmatpush1.bf16.msra.mxu0 %v1115
        %1191 = vmatprep.subr.bf16.mxu0 0
        %1192 = vmatpush1.bf16.msra.mxu0 %v1116
        %1193 = vmatprep.subr.bf16.mxu0 0
        %1194 = vmatpush1.bf16.msra.mxu0 %v1117
        %1195 = vmatprep.subr.bf16.mxu0 0
        %1196 = vmatpush1.bf16.msra.mxu0 %v1118
        %1197 = vmatprep.subr.bf16.mxu0 0
        %1198 = vmatpush1.bf16.msra.mxu0 %v1119
        %1199 = vmatprep.subr.bf16.mxu0 0
        %1200 = vmatpush1.bf16.msra.mxu0 %v1120
        %1201 = vmatprep.subr.bf16.mxu0 0
        %1202 = vmatpush1.bf16.msra.mxu0 %v1121
        %1203 = vmatprep.subr.bf16.mxu0 0
        %1204 = vmatpush1.bf16.msra.mxu0 %v1122
        %1205 = vmatprep.subr.bf16.mxu0 0
        %1206 = vmatpush1.bf16.msra.mxu0 %v1123
        %1207 = vmatprep.subr.bf16.mxu0 0
        %1208 = vmatpush1.bf16.msra.mxu0 %v1124
        %1209 = vmatprep.subr.bf16.mxu0 0
        %1210 = vmatpush1.bf16.msra.mxu0 %v1125
        %1211 = vmatprep.subr.bf16.mxu0 0
        %1212 = vmatpush1.bf16.msra.mxu0 %v1126
        %1213 = vmatprep.subr.bf16.mxu0 0
        %1214 = vmatpush1.bf16.msra.mxu0 %v1127
        %1215 = vmatprep.subr.bf16.mxu0 0
        %1216 = vmatpush1.bf16.msra.mxu0 %v1128
        %1217 = vmatprep.mubr.bf16.mxu0 %v1140
        %1218 = vmatmul.mubr.bf16.gmra.mrb[0].mxu0 %v1139
        %v1219 = vpop.f32.mrb[0].mxu0
        %v1220 = vadd.f32 %v1180, %v1219
        %v1221 = vpop.f32.mrb[0].mxu0
        %v1222 = vpop.f32.mrb[0].mxu0
        %v1223 = vpop.f32.mrb[0].mxu0
        %1224 = vdwg.mxu0
        %1225 = vst [vmem:[%s455] sm:$0xff] %v1220
        %v1226 = vpack.c.bf16 %v1220, %v1220
        %v1227 = vld [vmem:[%s446] sm:$0xf]
        %v1228 = vld [vmem:[%s446 + $0x4] sm:$0xf]
        %v1229 = vld [vmem:[%s446 + $0x8] sm:$0xf]
        %v1230 = vld [vmem:[%s446 + $0xc] sm:$0xf]
        %v1231 = vld [vmem:[%s446 + $0x10] sm:$0xf]
        %v1232 = vld [vmem:[%s446 + $0x14] sm:$0xf]
        %v1233 = vld [vmem:[%s446 + $0x18] sm:$0xf]
        %v1234 = vld [vmem:[%s446 + $0x1c] sm:$0xf]
        %v1235 = vld [vmem:[%s446 + $0x20] sm:$0xf]
        %v1236 = vld [vmem:[%s446 + $0x24] sm:$0xf]
        %v1237 = vld [vmem:[%s446 + $0x28] sm:$0xf]
        %v1238 = vld [vmem:[%s446 + $0x2c] sm:$0xf]
        %v1239 = vld [vmem:[%s446 + $0x30] sm:$0xf]
        %v1240 = vld [vmem:[%s446 + $0x34] sm:$0xf]
        %v1241 = vld [vmem:[%s446 + $0x38] sm:$0xf]
        %v1242 = vld [vmem:[%s446 + $0x3c] sm:$0xf]
        %v1259 = vunpack.c.l.b16 %v1227
        %v1260 = vunpack.c.l.b16 %v1228
        %v1261 = vunpack.c.l.b16 %v1229
        %v1262 = vunpack.c.l.b16 %v1230
        %v1263 = vunpack.c.l.b16 %v1231
        %v1264 = vunpack.c.l.b16 %v1232
        %v1265 = vunpack.c.l.b16 %v1233
        %v1266 = vunpack.c.l.b16 %v1234
        %v1267 = vunpack.c.l.b16 %v1235
        %v1268 = vunpack.c.l.b16 %v1236
        %v1269 = vunpack.c.l.b16 %v1237
        %v1270 = vunpack.c.l.b16 %v1238
        %v1271 = vunpack.c.l.b16 %v1239
        %v1272 = vunpack.c.l.b16 %v1240
        %v1273 = vunpack.c.l.b16 %v1241
        %v1274 = vunpack.c.l.b16 %v1242
        %v1275 = vpack.c.b16 %v1260, %v1259
        %v1276 = vpack.c.b16 %v1262, %v1261
        %v1277 = vpack.c.b16 %v1264, %v1263
        %v1278 = vpack.c.b16 %v1266, %v1265
        %v1279 = vpack.c.b16 %v1268, %v1267
        %v1280 = vpack.c.b16 %v1270, %v1269
        %v1281 = vpack.c.b16 %v1272, %v1271
        %v1282 = vpack.c.b16 %v1274, %v1273
        %1291 = vmatprep.subr.bf16.mxu0 0
        %1292 = vmatpush1.bf16.msra.mxu0 %v1275
        %1293 = vmatprep.subr.bf16.mxu0 0
        %1294 = vmatpush1.bf16.msra.mxu0 %v1276
        %1295 = vmatprep.subr.bf16.mxu0 0
        %1296 = vmatpush1.bf16.msra.mxu0 %v1277
        %1297 = vmatprep.subr.bf16.mxu0 0
        %1298 = vmatpush1.bf16.msra.mxu0 %v1278
        %1299 = vmatprep.subr.bf16.mxu0 0
        %1300 = vmatpush1.bf16.msra.mxu0 %v1279
        %1301 = vmatprep.subr.bf16.mxu0 0
        %1302 = vmatpush1.bf16.msra.mxu0 %v1280
        %1303 = vmatprep.subr.bf16.mxu0 0
        %1304 = vmatpush1.bf16.msra.mxu0 %v1281
        %1305 = vmatprep.subr.bf16.mxu0 0
        %1306 = vmatpush1.bf16.msra.mxu0 %v1282
        %1307 = vmatprep.subr.bf16.mxu0 0
        %1308 = vmatpush1.bf16.msra.mxu0 0
        %1309 = vmatprep.subr.bf16.mxu0 0
        %1310 = vmatpush1.bf16.msra.mxu0 0
        %1311 = vmatprep.subr.bf16.mxu0 0
        %1312 = vmatpush1.bf16.msra.mxu0 0
        %1313 = vmatprep.subr.bf16.mxu0 0
        %1314 = vmatpush1.bf16.msra.mxu0 0
        %1315 = vmatprep.subr.bf16.mxu0 0
        %1316 = vmatpush1.bf16.msra.mxu0 0
        %1317 = vmatprep.subr.bf16.mxu0 0
        %1318 = vmatpush1.bf16.msra.mxu0 0
        %1319 = vmatprep.subr.bf16.mxu0 0
        %1320 = vmatpush1.bf16.msra.mxu0 0
        %1321 = vmatprep.subr.bf16.mxu0 0
        %1322 = vmatpush1.bf16.msra.mxu0 0
        %1323 = vmatprep.mubr.bf16.mxu0 0
        %1324 = vmatmul.mubr.bf16.gmra.mrb[0].mxu0 %v1226
        %v1325 = vpop.f32.mrb[0].mxu0
        %v1326 = vadd.f32 0.0, %v1325
        %v1327 = vpop.f32.mrb[0].mxu0
        %v1328 = vpop.f32.mrb[0].mxu0
        %v1329 = vpop.f32.mrb[0].mxu0
        %1330 = vdwg.mxu0
        %p1331 = scmp.eq.s32.totalorder %s27, 0
        // Predicated region
        $region94: #{finetune_vci_counts_decoder_forward.4} parent=88 // pred_check
          %p1332 = pneg %p1331
        $region95: #{finetune_vci_counts_decoder_forward.4} parent=88 // pred_check_branch
          %1334 = sbr.rel (%p1332) target = $region97
        $region96: #{finetune_vci_counts_decoder_forward.4} parent=88 // pred_region
          %v1335 = vld [vmem:[%s6] sm:$0x1]
          %v1337 = vlaneseq
          %v1338 = vshrl.u32 %v1337, 7
          %v1339 = vsub.s32 0, %v1338
          %v1340 = vrot.slane %v1335, %v1339
          %v1342 = vadd.f32 %v1326, %v1340
          %1343 = vst [vmem:[%s459] sm:$0xff] %v1342
        $region97: #{finetune_vci_counts_decoder_forward.4} parent=88 // pred_fallthru
          _
        %p1344 = scmp.ne.s32.totalorder %s27, 0
        // Predicated region
        $region98: #{finetune_vci_counts_decoder_forward.4} parent=88 // pred_check
          %p1345 = pneg %p1344
        $region99: #{finetune_vci_counts_decoder_forward.4} parent=88 // pred_check_branch
          %1347 = sbr.rel (%p1345) target = $region101
        $region100: #{finetune_vci_counts_decoder_forward.4} parent=88 // pred_region
          %v1348 = vld [vmem:[%s459] sm:$0xff]
          %v1349 = vadd.f32 %v1348, %v1326
          %1350 = vst [vmem:[%s459] sm:$0xff] %v1349
        $region101: #{finetune_vci_counts_decoder_forward.4} parent=88 // pred_fallthru
          _
        %p1351 = scmp.lt.s32.totalorder %s26, 1
        %s1352 = scalar_select %p1351, %s26, 1
        %p1353 = scmp.lt.s32.totalorder %s27, 1
        %s1354 = scalar_select %p1353, %s27, 1
        %s1355 = smul.addr %s1352, 2
        %s1356 = sadd.s32 %s1354, %s1355
        %s1357 = smul.addr %s1356, 8
        %s1358 = scalar_lea.vmem %s8, %s1357
        %p1359 = scmp.lt.s32.totalorder %s26, 1
        %s1360 = scalar_select %p1359, %s26, 1
        %s1361 = smul.addr %s1360, 8
        %s1362 = scalar_lea.vmem %s9, %s1361
        // Predicated region
        $region102: #{finetune_vci_counts_decoder_forward.4} parent=88 // pred_check
          %p1363 = pneg %p237
        $region103: #{finetune_vci_counts_decoder_forward.4} parent=88 // pred_check_branch
          %1365 = sbr.rel (%p1363) target = $region105
        $region104: #{finetune_vci_counts_decoder_forward.4} parent=88 // pred_region
          _
        $region105: #{finetune_vci_counts_decoder_forward.4} parent=88 // pred_fallthru
          _
        // Predicated region
        $region106: #{finetune_vci_counts_decoder_forward.4} parent=88 // pred_check
          %p1366 = pneg %p263
        $region107: #{finetune_vci_counts_decoder_forward.4} parent=88 // pred_check_branch
          %1368 = sbr.rel (%p1366) target = $region109
        $region108: #{finetune_vci_counts_decoder_forward.4} parent=88 // pred_region
          _
        $region109: #{finetune_vci_counts_decoder_forward.4} parent=88 // pred_fallthru
          _
      $region89: #{finetune_vci_counts_decoder_forward.4} parent=5 // pred_fallthru
        _
      %p1369 = scmp.le.s32.totalorder 2, %s17
      // Predicated region
      $region110: #{finetune_vci_counts_decoder_forward.4} parent=5 // pred_check
        %p1370 = pneg %p1369
      $region111: #{finetune_vci_counts_decoder_forward.4} parent=5 // pred_check_branch
        %1372 = sbr.rel (%p1370) target = $region113
      $region112: #{finetune_vci_counts_decoder_forward.4} parent=5 // pred_region
        %s1373 = ssub.s32 %s17, 2
        // Predicated region
        $region114: #{finetune_vci_counts_decoder_forward.4} parent=112 // pred_check
          %p1374 = pneg %p243
        $region115: #{finetune_vci_counts_decoder_forward.4} parent=112 // pred_check_branch
          %1376 = sbr.rel (%p1374) target = $region117
        $region116: #{finetune_vci_counts_decoder_forward.4} parent=112 // pred_region
          %p1377 = scmp.lt.s32.totalorder %s28, 1
          %s1378 = scalar_select %p1377, %s28, 1
          %p1379 = scmp.lt.s32.totalorder %s29, 1
          %s1380 = scalar_select %p1379, %s29, 1
          %s1381 = smul.addr %s1378, 2
          %s1382 = sadd.s32 %s1380, %s1381
          %s1383 = smul.addr %s1382, 8
          %s1384 = scalar_lea.vmem %s8, %s1383
        $region117: #{finetune_vci_counts_decoder_forward.4} parent=112 // pred_fallthru
          _
        // Predicated region
        $region118: #{finetune_vci_counts_decoder_forward.4} parent=112 // pred_check
          %p1385 = pneg %p269
        $region119: #{finetune_vci_counts_decoder_forward.4} parent=112 // pred_check_branch
          %1387 = sbr.rel (%p1385) target = $region121
        $region120: #{finetune_vci_counts_decoder_forward.4} parent=112 // pred_region
          %p1388 = scmp.lt.s32.totalorder %s28, 1
          %s1389 = scalar_select %p1388, %s28, 1
          %s1390 = smul.addr %s1389, 8
          %s1391 = scalar_lea.vmem %s9, %s1390
        $region121: #{finetune_vci_counts_decoder_forward.4} parent=112 // pred_fallthru
          _
      $region113: #{finetune_vci_counts_decoder_forward.4} parent=5 // pred_fallthru
        _
    $region6: #{finetune_vci_counts_decoder_forward.4} parent=1 // loop_footer
      %s21 = sadd.s32 1, %s17
    $region7: #{finetune_vci_counts_decoder_forward.4} parent=1 // loop_footer_branch
      %16 = sbr.rel target = $region3
    $region8: #{finetune_vci_counts_decoder_forward.4} parent=1 // loop_exit
      _

</llo_original>
